<compile_context>
chip_gen: v5e
topology: v5e:2x2
jax: 0.10.0
libtpu: 0.0.40
codegen_flags: <defaults>
</compile_context>

<pallas_src>
import jax
import jax.numpy as jnp
from jax.experimental import pallas as pl
from jax.experimental.pallas import tpu as pltpu

# ---------------- hyperparameters (small, consistent with the module) --------
B = 2             # batch
L = 8             # maxlen (sequence length)
H = 32            # hidden_units
HEADS = 2         # num_heads
D = H // HEADS    # head_size
NUM_BLOCKS = 2
ITEM_NUM = 20
TIME_SPAN = 16
TIME_SLICE = 4
N_SLC = TIME_SPAN // TIME_SLICE + 1
EPS = 1e-8
NEG_INF = -(2.0 ** 32) + 1.0
F32 = jnp.float32
BF16 = jnp.bfloat16

# ---------------- packed-slab layout constants --------------------------------
ITEM_PAD = 32                    # item table rows padded to bf16 sublane-tile multiple
TIME_OFF, TIME_PAD = 32, 32      # [time_matrix_K | time_matrix_V]
SLC_OFF, SLC_PAD = 64, 16        # [time_slice_K  | time_slice_V ]
EMB_ROWS = SLC_OFF + SLC_PAD     # 80

L_SHIFT = L.bit_length() - 1
SLICE_SHIFT = TIME_SLICE.bit_length() - 1

assert L & (L - 1) == 0 and TIME_SLICE & (TIME_SLICE - 1) == 0, "in-kernel //,% use shifts"
assert (B * L) & (B * L - 1) == 0
assert ITEM_NUM + 1 <= ITEM_PAD and TIME_SPAN + 1 <= TIME_PAD and N_SLC <= SLC_PAD
assert L <= 8, "abs-pos K/V rows live in one 8-row f32 slab slice"


# ---------------- in-kernel helpers -------------------------------------------
def _ln(x, g, b):
    mu = jnp.mean(x, axis=-1, keepdims=True)
    xc = x - mu
    var = jnp.mean(xc * xc, axis=-1, keepdims=True)
    return xc * jax.lax.rsqrt(var + EPS) * g + b


def _mm(a, w):
    # a @ w, bf16 operands, f32 accumulation (MXU).
    return jnp.dot(a.astype(BF16), w.astype(BF16), preferred_element_type=jnp.float32)


def _mm_nt(a, b):
    # a @ b.T without an explicit in-kernel transpose.
    return jax.lax.dot_general(
        a.astype(BF16), b.astype(BF16),
        dimension_numbers=(((1,), (1,)), ((), ())),
        preferred_element_type=jnp.float32)


# ---------------- the fused kernel ---------------------------------------------
def _fused_kernel(idx_ref, emb_ref, w_ref, p_ref, out_ref):
    G = B * L                    # tokens per sequence-batch slab (16)
    H2 = 2 * H
    inv_sqrt_d = 1.0 / (float(D) ** 0.5)

    # ---- in-kernel embedding gathers via one-hot bf16 MXU matmuls -------------
    def onehot(col_idx, width):
        iota = jax.lax.broadcasted_iota(jnp.int32, (col_idx.shape[0], width), 1)
        return (col_idx == iota).astype(BF16)

    item_idx = idx_ref[0:3 * G, :]                        # (3G, 1): [log | pos | neg]
    t_idx = idx_ref[3 * G:3 * G + B * L * L, :]           # (B*L*L, 1)

    item_tab = emb_ref[0:ITEM_PAD, 0:H]                   # (32, H) bf16
    item_g = jnp.dot(onehot(item_idx, ITEM_PAD), item_tab,
                     preferred_element_type=F32)          # (3G, H): exact bf16 table rows
    keep = (item_idx[0:G] != 0).astype(F32)               # (G, 1)  1 = real, 0 = pad
    x = item_g[0:G] * (float(H) ** 0.5) * keep            # (G, H) scaled + pad-zeroed seqs
    pos_e = item_g[G:2 * G]                               # (G, H)
    neg_e = item_g[2 * G:3 * G]                           # (G, H)

    # time(K|V) = time_matrix_emb[t % time_slice] + time_slice_matrix_emb[t // time_slice]
    t_rel = jnp.bitwise_and(t_idx, TIME_SLICE - 1)
    t_slc = jnp.right_shift(t_idx, SLICE_SHIFT)
    tkv = (jnp.dot(onehot(t_rel, TIME_PAD), emb_ref[TIME_OFF:TIME_OFF + TIME_PAD, :],
                   preferred_element_type=F32)
           + jnp.dot(onehot(t_slc, SLC_PAD), emb_ref[SLC_OFF:SLC_OFF + SLC_PAD, :],
                     preferred_element_type=F32))         # (B*L*L, 2H): [tK | tV]
    tk3 = tkv[:, 0:H].reshape(G, L, H)                    # (G, L, H)
    tv3 = tkv[:, H:H2].reshape(G, L, H)
    tk_rep = jnp.concatenate([tk3] * HEADS, axis=0)       # (HEADS*G, L, H) shared by heads
    tvt = jnp.concatenate([tv3] * B, axis=1)              # (G, G, H): key col c -> j = c % L

    # ---- loop-invariant abs-pos terms, head lane masks and attention mask -----
    pos_kv = p_ref[NUM_BLOCKS + 1]                        # (8, 2H) = [abs_pos_K | abs_pos_V]
    poskv_rep = jnp.concatenate([pos_kv[0:L, :]] * B, axis=0)        # (G, 2H)

    kcol = jax.lax.broadcasted_iota(jnp.int32, (1, H), 1)
    head_m = [jnp.logical_and(kcol >= h * D, kcol < (h + 1) * D).astype(F32)
              for h in range(HEADS)]                      # (1, H) per-head lane masks
    head_m3 = [m.reshape(1, 1, H) for m in head_m]

    r_iota = jax.lax.broadcasted_iota(jnp.int32, (HEADS * G, G), 0)
    c_iota = jax.lax.broadcasted_iota(jnp.int32, (HEADS * G, G), 1)
    r_b = jnp.right_shift(jnp.bitwise_and(r_iota, G - 1), L_SHIFT)   # batch of query row
    r_i = jnp.bitwise_and(r_iota, L - 1)                             # query position
    c_b = jnp.right_shift(c_iota, L_SHIFT)                           # batch of key column
    c_j = jnp.bitwise_and(c_iota, L - 1)                             # key position
    keep_stack = jnp.concatenate([keep] * HEADS, axis=0)             # (HEADS*G, 1)
    # off-batch-block OR causal OR padded-query (padded KEYS are NOT masked, per reference).
    masked = (c_b != r_b) | (c_j > r_i) | (keep_stack < 0.5)         # (HEADS*G, G)

    # ---- transformer blocks (fully unrolled; every tensor stays in VMEM) ------
    for blk in range(NUM_BLOCKS):
        w = w_ref[blk]                                    # (H, 5H) bf16: [Wq|Wk|Wv|W1|W2]^T
        wq, wkv = w[:, 0:H], w[:, H:3 * H]
        w1, w2 = w[:, 3 * H:4 * H], w[:, 4 * H:5 * H]
        pb = p_ref[blk]                                   # (8, 2H) f32 biases / LN params
        a_g, a_b = pb[0:1, 0:H], pb[0:1, H:H2]
        f_g, f_b = pb[1:2, 0:H], pb[1:2, H:H2]
        bq, bkv = pb[2:3, 0:H], pb[3:4, :]
        b1, b2 = pb[4:5, 0:H], pb[5:6, 0:H]

        q_ln = _ln(x, a_g, a_b)                           # (G, H)
        q_all = _mm(q_ln, wq) + bq                        # (G, H)
        # fused K/V projection; abs-pos K/V folded straight into K and V
        kvp = _mm(x, wkv) + bkv + poskv_rep               # (G, 2H)
        k_eff, v_eff = kvp[:, 0:H], kvp[:, H:H2]

        # head-masked stacked queries: rows [h*G:(h+1)*G] keep only head-h lanes
        q_stack = jnp.concatenate([q_all * m for m in head_m], axis=0)   # (HEADS*G, H)

        s = _mm_nt(q_stack, k_eff)                        # (HEADS*G, G): QK^T + Q posK^T
        s_time = jnp.sum(tk_rep * q_stack[:, None, :], axis=-1)          # (HEADS*G, L)
        s = (s + jnp.concatenate([s_time] * B, axis=1)) * inv_sqrt_d
        s = jnp.where(masked, NEG_INF, s)                 # off-block garbage overwritten here

        m_row = jnp.max(s, axis=-1, keepdims=True)
        e = jnp.exp(s - m_row)
        p = e / jnp.sum(e, axis=-1, keepdims=True)        # exact f32 softmax
        # fully-padded query rows become uniform; they are zeroed by *keep below,
        # matching the PyTorch reference behaviour.
        p_h = [p[h * G:(h + 1) * G, :] for h in range(HEADS)]            # (G, G) each

        o = _mm(p_h[0], v_eff * head_m[0])                # attn @ (V + posV), heads on lanes
        for h in range(1, HEADS):
            o = o + _mm(p_h[h], v_eff * head_m[h])
        p_k = p_h[0][:, :, None] * head_m3[0]             # per-lane head probabilities
        for h in range(1, HEADS):
            p_k = p_k + p_h[h][:, :, None] * head_m3[h]
        o = o + jnp.sum(p_k * tvt, axis=1)                # time-V term: ONE sublane reduce

        x = q_ln + o                                      # residual around attention
        x = _ln(x, f_g, f_b)
        h1 = jnp.maximum(_mm(x, w1) + b1, 0.0)
        x = (_mm(h1, w2) + b2 + x) * keep

    pl_last = p_ref[NUM_BLOCKS]
    feats = _ln(x, pl_last[0:1, 0:H], pl_last[0:1, H:H2])               # (G, H)
    feats3 = feats.reshape(B, L, H)
    out_ref[0] = jnp.sum(feats3 * pos_e.reshape(B, L, H), axis=-1)      # pos logits (B, L)
    out_ref[1] = jnp.sum(feats3 * neg_e.reshape(B, L, H), axis=-1)      # neg logits (B, L)


def _full_spec(shape):
    nd = len(shape)
    return pl.BlockSpec(shape, lambda *_: (0,) * nd)


# ---------------- parameters ----------------------------------------------------
def init_params(key):
    keys = jax.random.split(key, 8 + NUM_BLOCKS * 10)
    ki = iter(range(len(keys)))

    def norm(shape, scale=0.1):
        return (scale * jax.random.normal(keys[next(ki)], shape)).astype(F32)

    params = {
        "item_emb": norm((ITEM_NUM + 1, H)).at[0].set(0.0),   # padding_idx=0
        "abs_pos_K_emb": norm((L, H)),
        "abs_pos_V_emb": norm((L, H)),
        "time_matrix_K_emb": norm((TIME_SPAN + 1, H)),
        "time_matrix_V_emb": norm((TIME_SPAN + 1, H)),
        "time_slice_matrix_K_emb": norm((N_SLC, H)),
        "time_slice_matrix_V_emb": norm((N_SLC, H)),
        "last_ln_g": jnp.ones((H,), F32),
        "last_ln_b": jnp.zeros((H,), F32),
        "blocks": [],
    }
    for _ in range(NUM_BLOCKS):
        params["blocks"].append({
            "attn_ln_g": jnp.ones((H,), F32), "attn_ln_b": jnp.zeros((H,), F32),
            "Wq": norm((H, H)), "bq": norm((H,)),
            "Wk": norm((H, H)), "bk": norm((H,)),
            "Wv": norm((H, H)), "bv": norm((H,)),
            "fwd_ln_g": jnp.ones((H,), F32), "fwd_ln_b": jnp.zeros((H,), F32),
            "W1": norm((H, H)), "b1": norm((H,)),
            "W2": norm((H, H)), "b2": norm((H,)),
        })
    return params


def pack_params(params):
    """Pack everything into 3 contiguous slabs ONCE (outside the jitted forward)."""
    H2 = 2 * H
    # bf16 embedding-table slab (EMB_ROWS, 2H): item | [timeK|timeV] | [sliceK|sliceV]
    emb = jnp.zeros((EMB_ROWS, H2), F32)
    emb = emb.at[0:ITEM_NUM + 1, 0:H].set(params["item_emb"])
    emb = emb.at[TIME_OFF:TIME_OFF + TIME_SPAN + 1, 0:H].set(params["time_matrix_K_emb"])
    emb = emb.at[TIME_OFF:TIME_OFF + TIME_SPAN + 1, H:H2].set(params["time_matrix_V_emb"])
    emb = emb.at[SLC_OFF:SLC_OFF + N_SLC, 0:H].set(params["time_slice_matrix_K_emb"])
    emb = emb.at[SLC_OFF:SLC_OFF + N_SLC, H:H2].set(params["time_slice_matrix_V_emb"])
    emb = emb.astype(BF16)

    # bf16 weight slab (NUM_BLOCKS, H, 5H): pre-transposed [Wq | Wk | Wv | W1 | W2]
    w = jnp.stack([
        jnp.concatenate([blk["Wq"].T, blk["Wk"].T, blk["Wv"].T,
                         blk["W1"].T, blk["W2"].T], axis=1)
        for blk in params["blocks"]]).astype(BF16)

    # f32 bias / LayerNorm / abs-pos slab (NUM_BLOCKS + 2, 8, 2H)
    p = jnp.zeros((NUM_BLOCKS + 2, 8, H2), F32)
    for b, blk in enumerate(params["blocks"]):
        p = p.at[b, 0, 0:H].set(blk["attn_ln_g"])
        p = p.at[b, 0, H:H2].set(blk["attn_ln_b"])
        p = p.at[b, 1, 0:H].set(blk["fwd_ln_g"])
        p = p.at[b, 1, H:H2].set(blk["fwd_ln_b"])
        p = p.at[b, 2, 0:H].set(blk["bq"])
        p = p.at[b, 3, 0:H].set(blk["bk"])
        p = p.at[b, 3, H:H2].set(blk["bv"])
        p = p.at[b, 4, 0:H].set(blk["b1"])
        p = p.at[b, 5, 0:H].set(blk["b2"])
    p = p.at[NUM_BLOCKS, 0, 0:H].set(params["last_ln_g"])
    p = p.at[NUM_BLOCKS, 0, H:H2].set(params["last_ln_b"])
    p = p.at[NUM_BLOCKS + 1, 0:L, 0:H].set(params["abs_pos_K_emb"])
    p = p.at[NUM_BLOCKS + 1, 0:L, H:H2].set(params["abs_pos_V_emb"])
    return emb, w, p


# ---------------- forward (single fused kernel call) ----------------------------
@jax.jit
def tisasrec_forward(packed, user_ids, log_seqs, time_matrices, time_abs_matrices,
                     pos_seqs, neg_seqs):
    del user_ids, time_abs_matrices  # unused by the PyTorch forward() output path
    # TODO(synk): time_abs_matrix_K/V embeddings are built in PyTorch seq2feats but never
    # consumed by forward()'s attention call, so they are omitted here.
    emb_slab, w_slab, p_slab = packed

    # Only per-call work outside the kernel: pack the int indices into one vector.
    idx = jnp.concatenate([
        log_seqs.reshape(-1).astype(jnp.int32),
        pos_seqs.reshape(-1).astype(jnp.int32),
        neg_seqs.reshape(-1).astype(jnp.int32),
        time_matrices.reshape(-1).astype(jnp.int32),
    ]).reshape(-1, 1)                                    # (3*B*L + B*L*L, 1)

    inputs = (idx, emb_slab, w_slab, p_slab)
    out = pl.pallas_call(
        _fused_kernel,
        out_shape=jax.ShapeDtypeStruct((2, B, L), F32),
        grid=(1,),
        in_specs=[_full_spec(a.shape) for a in inputs],
        out_specs=_full_spec((2, B, L)),
        compiler_params=pltpu.CompilerParams(dimension_semantics=("arbitrary",)),
    )(*inputs)
    # TODO(synk): on v7x (2 TensorCores) a grid=(B,) "parallel" split over batch would use
    # the second core; at B=2, L=8 the single-program form has lower launch overhead.
    return out[0], out[1]


# ---------------- demo ----------------------------------------------------------
if __name__ == "__main__":
    key = jax.random.PRNGKey(0)
    kp, k1, k2, k3, k4, k5 = jax.random.split(key, 6)
    params = init_params(kp)
    packed = pack_params(params)      # stacked / transposed / cast ONCE, outside the jit

    log_seqs = jax.random.randint(k1, (B, L), 0, ITEM_NUM + 1)
    log_seqs = log_seqs.at[:, :2].set(0)                    # left padding like the data
    time_matrices = jax.random.randint(k2, (B, L, L), 0, TIME_SPAN + 1)
    time_abs_matrices = jax.random.randint(k5, (B, L, L), 0, TIME_SPAN * L + 1)
    pos_seqs = jax.random.randint(k3, (B, L), 1, ITEM_NUM + 1)
    neg_seqs = jax.random.randint(k4, (B, L), 1, ITEM_NUM + 1)
    user_ids = jnp.arange(B)

    pos_logits, neg_logits = tisasrec_forward(
        packed, user_ids, log_seqs, time_matrices, time_abs_matrices,
        pos_seqs, neg_seqs)
    jax.block_until_ready((pos_logits, neg_logits))
    assert pos_logits.shape == (B, L) and neg_logits.shape == (B, L)
    print("KERNEL_OK")
</pallas_src>

<mosaic_0001>
module attributes {stable_mosaic.version = 11 : i64} {
  func.func @_fused_kernel(%arg0: i32, %arg1: memref<176x1xi32, #tpu.memory_space<vmem>>, %arg2: memref<80x64xbf16, #tpu.memory_space<vmem>>, %arg3: memref<2x32x160xbf16, #tpu.memory_space<vmem>>, %arg4: memref<4x8x64xf32, #tpu.memory_space<vmem>>, %arg5: memref<2x2x8xf32, #tpu.memory_space<vmem>>) attributes {dimension_semantics = [#tpu.dimension_semantics<arbitrary>], iteration_bounds = array<i64: 1>, scalar_prefetch = 0 : i64, scratch_operands = 0 : i64, tpu.core_type = #tpu.core_type<tc>, window_params = [{pipeline_mode = #tpu.pipeline_mode<synchronous>, transform_indices = @transform_0, window_bounds = array<i64: 176, 1>}, {pipeline_mode = #tpu.pipeline_mode<synchronous>, transform_indices = @transform_1, window_bounds = array<i64: 80, 64>}, {pipeline_mode = #tpu.pipeline_mode<synchronous>, transform_indices = @transform_2, window_bounds = array<i64: 2, 32, 160>}, {pipeline_mode = #tpu.pipeline_mode<synchronous>, transform_indices = @transform_3, window_bounds = array<i64: 4, 8, 64>}, {pipeline_mode = #tpu.pipeline_mode<synchronous>, transform_indices = @transform_4, window_bounds = array<i64: 2, 2, 8>}]} {
    %c0 = arith.constant 0 : index
    %c0_0 = arith.constant 0 : index
    %0 = vector.load %arg1[%c0, %c0_0] : memref<176x1xi32, #tpu.memory_space<vmem>>, vector<48x1xi32>
    %c48 = arith.constant 48 : index
    %c0_1 = arith.constant 0 : index
    %1 = vector.load %arg1[%c48, %c0_1] : memref<176x1xi32, #tpu.memory_space<vmem>>, vector<128x1xi32>
    %c0_2 = arith.constant 0 : index
    %c0_3 = arith.constant 0 : index
    %2 = vector.load %arg2[%c0_2, %c0_3] : memref<80x64xbf16, #tpu.memory_space<vmem>>, vector<32x32xbf16>
    %3 = tpu.iota {dimensions = array<i32: 1>} : vector<48x32xi32>
    %4 = vector.broadcast %0 : vector<48x1xi32> to vector<48x32xi32>
    %5 = arith.cmpi eq, %4, %3 : vector<48x32xi32>
    %6 = arith.extui %5 : vector<48x32xi1> to vector<48x32xi32>
    %7 = arith.sitofp %6 : vector<48x32xi32> to vector<48x32xf32>
    %8 = arith.truncf %7 : vector<48x32xf32> to vector<48x32xbf16>
    %cst = arith.constant dense<0.000000e+00> : vector<48x32xf32>
    %9 = tpu.matmul %8, %2, %cst {dimension_numbers = #tpu.dot_dimension_numbers<[1], [0], [0], [1], [0, 0, 1, 1], [], []>} : vector<48x32xbf16>, vector<32x32xbf16>, vector<48x32xf32> -> vector<48x32xf32>
    %10 = vector.extract_strided_slice %0 {offsets = [0, 0], sizes = [16, 1], strides = [1, 1]} : vector<48x1xi32> to vector<16x1xi32>
    %c0_i32 = arith.constant 0 : i32
    %11 = vector.broadcast %c0_i32 : i32 to vector<16x1xi32>
    %12 = arith.cmpi ne, %10, %11 : vector<16x1xi32>
    %13 = arith.extui %12 : vector<16x1xi1> to vector<16x1xi32>
    %14 = arith.sitofp %13 : vector<16x1xi32> to vector<16x1xf32>
    %15 = vector.extract_strided_slice %9 {offsets = [0, 0], sizes = [16, 32], strides = [1, 1]} : vector<48x32xf32> to vector<16x32xf32>
    %cst_4 = arith.constant 5.65685415 : f32
    %16 = vector.broadcast %cst_4 : f32 to vector<16x32xf32>
    %17 = arith.mulf %15, %16 : vector<16x32xf32>
    %18 = vector.broadcast %14 : vector<16x1xf32> to vector<16x32xf32>
    %19 = arith.mulf %17, %18 : vector<16x32xf32>
    %20 = vector.extract_strided_slice %9 {offsets = [16, 0], sizes = [16, 32], strides = [1, 1]} : vector<48x32xf32> to vector<16x32xf32>
    %21 = vector.extract_strided_slice %9 {offsets = [32, 0], sizes = [16, 32], strides = [1, 1]} : vector<48x32xf32> to vector<16x32xf32>
    %c3_i32 = arith.constant 3 : i32
    %22 = vector.broadcast %c3_i32 : i32 to vector<128x1xi32>
    %23 = arith.andi %1, %22 : vector<128x1xi32>
    %c2_i32 = arith.constant 2 : i32
    %24 = vector.broadcast %c2_i32 : i32 to vector<128x1xi32>
    %25 = arith.shrsi %1, %24 : vector<128x1xi32>
    %26 = tpu.iota {dimensions = array<i32: 1>} : vector<128x32xi32>
    %27 = vector.broadcast %23 : vector<128x1xi32> to vector<128x32xi32>
    %28 = arith.cmpi eq, %27, %26 : vector<128x32xi32>
    %29 = arith.extui %28 : vector<128x32xi1> to vector<128x32xi32>
    %30 = arith.sitofp %29 : vector<128x32xi32> to vector<128x32xf32>
    %31 = arith.truncf %30 : vector<128x32xf32> to vector<128x32xbf16>
    %c32 = arith.constant 32 : index
    %c0_5 = arith.constant 0 : index
    %32 = vector.load %arg2[%c32, %c0_5] : memref<80x64xbf16, #tpu.memory_space<vmem>>, vector<32x64xbf16>
    %cst_6 = arith.constant dense<0.000000e+00> : vector<128x64xf32>
    %33 = tpu.matmul %31, %32, %cst_6 {dimension_numbers = #tpu.dot_dimension_numbers<[1], [0], [0], [1], [0, 0, 1, 1], [], []>} : vector<128x32xbf16>, vector<32x64xbf16>, vector<128x64xf32> -> vector<128x64xf32>
    %34 = tpu.iota {dimensions = array<i32: 1>} : vector<128x16xi32>
    %35 = vector.broadcast %25 : vector<128x1xi32> to vector<128x16xi32>
    %36 = arith.cmpi eq, %35, %34 : vector<128x16xi32>
    %37 = arith.extui %36 : vector<128x16xi1> to vector<128x16xi32>
    %38 = arith.sitofp %37 : vector<128x16xi32> to vector<128x16xf32>
    %39 = arith.truncf %38 : vector<128x16xf32> to vector<128x16xbf16>
    %c64 = arith.constant 64 : index
    %c0_7 = arith.constant 0 : index
    %40 = vector.load %arg2[%c64, %c0_7] : memref<80x64xbf16, #tpu.memory_space<vmem>>, vector<16x64xbf16>
    %cst_8 = arith.constant dense<0.000000e+00> : vector<128x64xf32>
    %41 = tpu.matmul %39, %40, %cst_8 {dimension_numbers = #tpu.dot_dimension_numbers<[1], [0], [0], [1], [0, 0, 1, 1], [], []>} : vector<128x16xbf16>, vector<16x64xbf16>, vector<128x64xf32> -> vector<128x64xf32>
    %42 = arith.addf %33, %41 : vector<128x64xf32>
    %43 = vector.extract_strided_slice %42 {offsets = [0, 0], sizes = [128, 32], strides = [1, 1]} : vector<128x64xf32> to vector<128x32xf32>
    %44 = vector.shape_cast %43 : vector<128x32xf32> to vector<16x8x32xf32>
    %45 = vector.extract_strided_slice %42 {offsets = [0, 32], sizes = [128, 32], strides = [1, 1]} : vector<128x64xf32> to vector<128x32xf32>
    %46 = vector.shape_cast %45 : vector<128x32xf32> to vector<16x8x32xf32>
    %47 = tpu.concatenate %44, %44 in 0 : vector<16x8x32xf32>, vector<16x8x32xf32> -> vector<32x8x32xf32>
    %48 = tpu.concatenate %46, %46 in 1 : vector<16x8x32xf32>, vector<16x8x32xf32> -> vector<16x16x32xf32>
    %c3 = arith.constant 3 : index
    %c0_9 = arith.constant 0 : index
    %c0_10 = arith.constant 0 : index
    %49 = vector.load %arg4[%c3, %c0_9, %c0_10] : memref<4x8x64xf32, #tpu.memory_space<vmem>>, vector<1x8x64xf32>
    %50 = vector.shape_cast %49 : vector<1x8x64xf32> to vector<8x64xf32>
    %51 = tpu.concatenate %50, %50 in 0 : vector<8x64xf32>, vector<8x64xf32> -> vector<16x64xf32>
    %52 = tpu.iota {dimensions = array<i32: 1>} : vector<1x32xi32>
    %c0_i32_11 = arith.constant 0 : i32
    %53 = vector.broadcast %c0_i32_11 : i32 to vector<1x32xi32>
    %54 = arith.cmpi sge, %52, %53 : vector<1x32xi32>
    %c16_i32 = arith.constant 16 : i32
    %55 = vector.broadcast %c16_i32 : i32 to vector<1x32xi32>
    %56 = arith.cmpi slt, %52, %55 : vector<1x32xi32>
    %57 = arith.andi %54, %56 : vector<1x32xi1>
    %58 = arith.extui %57 : vector<1x32xi1> to vector<1x32xi32>
    %59 = arith.sitofp %58 : vector<1x32xi32> to vector<1x32xf32>
    %c16_i32_12 = arith.constant 16 : i32
    %60 = vector.broadcast %c16_i32_12 : i32 to vector<1x32xi32>
    %61 = arith.cmpi sge, %52, %60 : vector<1x32xi32>
    %c32_i32 = arith.constant 32 : i32
    %62 = vector.broadcast %c32_i32 : i32 to vector<1x32xi32>
    %63 = arith.cmpi slt, %52, %62 : vector<1x32xi32>
    %64 = arith.andi %61, %63 : vector<1x32xi1>
    %65 = arith.extui %64 : vector<1x32xi1> to vector<1x32xi32>
    %66 = arith.sitofp %65 : vector<1x32xi32> to vector<1x32xf32>
    %67 = vector.shape_cast %59 : vector<1x32xf32> to vector<1x1x32xf32>
    %68 = vector.shape_cast %66 : vector<1x32xf32> to vector<1x1x32xf32>
    %69 = tpu.iota {dimensions = array<i32: 0>} : vector<32x16xi32>
    %70 = tpu.iota {dimensions = array<i32: 1>} : vector<32x16xi32>
    %c15_i32 = arith.constant 15 : i32
    %71 = vector.broadcast %c15_i32 : i32 to vector<32x16xi32>
    %72 = arith.andi %69, %71 : vector<32x16xi32>
    %c3_i32_13 = arith.constant 3 : i32
    %73 = vector.broadcast %c3_i32_13 : i32 to vector<32x16xi32>
    %74 = arith.shrsi %72, %73 : vector<32x16xi32>
    %c7_i32 = arith.constant 7 : i32
    %75 = vector.broadcast %c7_i32 : i32 to vector<32x16xi32>
    %76 = arith.andi %69, %75 : vector<32x16xi32>
    %c3_i32_14 = arith.constant 3 : i32
    %77 = vector.broadcast %c3_i32_14 : i32 to vector<32x16xi32>
    %78 = arith.shrsi %70, %77 : vector<32x16xi32>
    %c7_i32_15 = arith.constant 7 : i32
    %79 = vector.broadcast %c7_i32_15 : i32 to vector<32x16xi32>
    %80 = arith.andi %70, %79 : vector<32x16xi32>
    %81 = tpu.concatenate %14, %14 in 0 : vector<16x1xf32>, vector<16x1xf32> -> vector<32x1xf32>
    %82 = arith.cmpi ne, %78, %74 : vector<32x16xi32>
    %83 = arith.cmpi sgt, %80, %76 : vector<32x16xi32>
    %84 = arith.ori %82, %83 : vector<32x16xi1>
    %cst_16 = arith.constant 5.000000e-01 : f32
    %85 = vector.broadcast %cst_16 : f32 to vector<32x1xf32>
    %86 = arith.cmpf olt, %81, %85 : vector<32x1xf32>
    %87 = vector.broadcast %86 : vector<32x1xi1> to vector<32x16xi1>
    %88 = arith.ori %84, %87 : vector<32x16xi1>
    %c0_17 = arith.constant 0 : index
    %c0_18 = arith.constant 0 : index
    %c0_19 = arith.constant 0 : index
    %89 = vector.load %arg3[%c0_17, %c0_18, %c0_19] : memref<2x32x160xbf16, #tpu.memory_space<vmem>>, vector<1x32x160xbf16>
    %90 = vector.shape_cast %89 : vector<1x32x160xbf16> to vector<32x160xbf16>
    %91 = vector.extract_strided_slice %90 {offsets = [0, 0], sizes = [32, 32], strides = [1, 1]} : vector<32x160xbf16> to vector<32x32xbf16>
    %92 = vector.extract_strided_slice %90 {offsets = [0, 32], sizes = [32, 64], strides = [1, 1]} : vector<32x160xbf16> to vector<32x64xbf16>
    %93 = vector.extract_strided_slice %90 {offsets = [0, 96], sizes = [32, 32], strides = [1, 1]} : vector<32x160xbf16> to vector<32x32xbf16>
    %94 = vector.extract_strided_slice %90 {offsets = [0, 128], sizes = [32, 32], strides = [1, 1]} : vector<32x160xbf16> to vector<32x32xbf16>
    %c0_20 = arith.constant 0 : index
    %c0_21 = arith.constant 0 : index
    %c0_22 = arith.constant 0 : index
    %95 = vector.load %arg4[%c0_20, %c0_21, %c0_22] : memref<4x8x64xf32, #tpu.memory_space<vmem>>, vector<1x8x64xf32>
    %96 = vector.shape_cast %95 : vector<1x8x64xf32> to vector<8x64xf32>
    %97 = vector.extract_strided_slice %96 {offsets = [0, 0], sizes = [1, 32], strides = [1, 1]} : vector<8x64xf32> to vector<1x32xf32>
    %98 = vector.extract_strided_slice %96 {offsets = [0, 32], sizes = [1, 32], strides = [1, 1]} : vector<8x64xf32> to vector<1x32xf32>
    %99 = vector.extract_strided_slice %96 {offsets = [1, 0], sizes = [1, 32], strides = [1, 1]} : vector<8x64xf32> to vector<1x32xf32>
    %100 = vector.extract_strided_slice %96 {offsets = [1, 32], sizes = [1, 32], strides = [1, 1]} : vector<8x64xf32> to vector<1x32xf32>
    %101 = vector.extract_strided_slice %96 {offsets = [2, 0], sizes = [1, 32], strides = [1, 1]} : vector<8x64xf32> to vector<1x32xf32>
    %102 = vector.extract_strided_slice %96 {offsets = [3, 0], sizes = [1, 64], strides = [1, 1]} : vector<8x64xf32> to vector<1x64xf32>
    %103 = vector.extract_strided_slice %96 {offsets = [4, 0], sizes = [1, 32], strides = [1, 1]} : vector<8x64xf32> to vector<1x32xf32>
    %104 = vector.extract_strided_slice %96 {offsets = [5, 0], sizes = [1, 32], strides = [1, 1]} : vector<8x64xf32> to vector<1x32xf32>
    %cst_23 = arith.constant dense<0.000000e+00> : vector<16xf32>
    %105 = vector.multi_reduction <add>, %19, %cst_23 [1] : vector<16x32xf32> to vector<16xf32>
    %106 = vector.shape_cast %105 : vector<16xf32> to vector<16x1xf32>
    %cst_24 = arith.constant 3.200000e+01 : f32
    %107 = vector.broadcast %cst_24 : f32 to vector<16x1xf32>
    %108 = arith.divf %106, %107 : vector<16x1xf32>
    %109 = vector.broadcast %108 : vector<16x1xf32> to vector<16x32xf32>
    %110 = arith.subf %19, %109 : vector<16x32xf32>
    %111 = arith.mulf %110, %110 : vector<16x32xf32>
    %cst_25 = arith.constant dense<0.000000e+00> : vector<16xf32>
    %112 = vector.multi_reduction <add>, %111, %cst_25 [1] : vector<16x32xf32> to vector<16xf32>
    %113 = vector.shape_cast %112 : vector<16xf32> to vector<16x1xf32>
    %cst_26 = arith.constant 3.200000e+01 : f32
    %114 = vector.broadcast %cst_26 : f32 to vector<16x1xf32>
    %115 = arith.divf %113, %114 : vector<16x1xf32>
    %cst_27 = arith.constant 9.99999993E-9 : f32
    %116 = vector.broadcast %cst_27 : f32 to vector<16x1xf32>
    %117 = arith.addf %115, %116 : vector<16x1xf32>
    %118 = math.rsqrt %117 : vector<16x1xf32>
    %119 = vector.broadcast %118 : vector<16x1xf32> to vector<16x32xf32>
    %120 = arith.mulf %110, %119 : vector<16x32xf32>
    %121 = vector.broadcast %97 : vector<1x32xf32> to vector<16x32xf32>
    %122 = arith.mulf %120, %121 : vector<16x32xf32>
    %123 = vector.broadcast %98 : vector<1x32xf32> to vector<16x32xf32>
    %124 = arith.addf %122, %123 : vector<16x32xf32>
    %125 = arith.truncf %124 : vector<16x32xf32> to vector<16x32xbf16>
    %cst_28 = arith.constant dense<0.000000e+00> : vector<16x32xf32>
    %126 = tpu.matmul %125, %91, %cst_28 {dimension_numbers = #tpu.dot_dimension_numbers<[1], [0], [0], [1], [0, 0, 1, 1], [], []>} : vector<16x32xbf16>, vector<32x32xbf16>, vector<16x32xf32> -> vector<16x32xf32>
    %127 = vector.broadcast %101 : vector<1x32xf32> to vector<16x32xf32>
    %128 = arith.addf %126, %127 : vector<16x32xf32>
    %129 = arith.truncf %19 : vector<16x32xf32> to vector<16x32xbf16>
    %cst_29 = arith.constant dense<0.000000e+00> : vector<16x64xf32>
    %130 = tpu.matmul %129, %92, %cst_29 {dimension_numbers = #tpu.dot_dimension_numbers<[1], [0], [0], [1], [0, 0, 1, 1], [], []>} : vector<16x32xbf16>, vector<32x64xbf16>, vector<16x64xf32> -> vector<16x64xf32>
    %131 = vector.broadcast %102 : vector<1x64xf32> to vector<16x64xf32>
    %132 = arith.addf %130, %131 : vector<16x64xf32>
    %133 = arith.addf %132, %51 : vector<16x64xf32>
    %134 = vector.extract_strided_slice %133 {offsets = [0, 0], sizes = [16, 32], strides = [1, 1]} : vector<16x64xf32> to vector<16x32xf32>
    %135 = vector.extract_strided_slice %133 {offsets = [0, 32], sizes = [16, 32], strides = [1, 1]} : vector<16x64xf32> to vector<16x32xf32>
    %136 = vector.broadcast %59 : vector<1x32xf32> to vector<16x32xf32>
    %137 = arith.mulf %128, %136 : vector<16x32xf32>
    %138 = vector.broadcast %66 : vector<1x32xf32> to vector<16x32xf32>
    %139 = arith.mulf %128, %138 : vector<16x32xf32>
    %140 = tpu.concatenate %137, %139 in 0 : vector<16x32xf32>, vector<16x32xf32> -> vector<32x32xf32>
    %141 = arith.truncf %140 : vector<32x32xf32> to vector<32x32xbf16>
    %142 = arith.truncf %134 : vector<16x32xf32> to vector<16x32xbf16>
    %cst_30 = arith.constant dense<0.000000e+00> : vector<32x16xf32>
    %143 = tpu.matmul %141, %142, %cst_30 {dimension_numbers = #tpu.dot_dimension_numbers<[1], [1], [0], [0], [0, 0, 1, 0], [], []>} : vector<32x32xbf16>, vector<16x32xbf16>, vector<32x16xf32> -> vector<32x16xf32>
    %144 = vector.shape_cast %140 : vector<32x32xf32> to vector<32x1x32xf32>
    %145 = vector.broadcast %144 : vector<32x1x32xf32> to vector<32x8x32xf32>
    %146 = arith.mulf %47, %145 : vector<32x8x32xf32>
    %cst_31 = arith.constant dense<0.000000e+00> : vector<32x8xf32>
    %147 = vector.multi_reduction <add>, %146, %cst_31 [2] : vector<32x8x32xf32> to vector<32x8xf32>
    %148 = tpu.concatenate %147, %147 in 1 : vector<32x8xf32>, vector<32x8xf32> -> vector<32x16xf32>
    %149 = arith.addf %143, %148 : vector<32x16xf32>
    %cst_32 = arith.constant 2.500000e-01 : f32
    %150 = vector.broadcast %cst_32 : f32 to vector<32x16xf32>
    %151 = arith.mulf %149, %150 : vector<32x16xf32>
    %cst_33 = arith.constant -4.2949673E+9 : f32
    %152 = vector.broadcast %cst_33 : f32 to vector<32x16xf32>
    %153 = arith.select %88, %152, %151 : vector<32x16xi1>, vector<32x16xf32>
    %cst_34 = arith.constant dense<0xFF800000> : vector<32xf32>
    %154 = vector.multi_reduction <maximumf>, %153, %cst_34 [1] : vector<32x16xf32> to vector<32xf32>
    %155 = vector.shape_cast %154 : vector<32xf32> to vector<32x1xf32>
    %156 = vector.broadcast %155 : vector<32x1xf32> to vector<32x16xf32>
    %157 = arith.subf %153, %156 : vector<32x16xf32>
    %158 = math.exp %157 : vector<32x16xf32>
    %cst_35 = arith.constant dense<0.000000e+00> : vector<32xf32>
    %159 = vector.multi_reduction <add>, %158, %cst_35 [1] : vector<32x16xf32> to vector<32xf32>
    %160 = vector.shape_cast %159 : vector<32xf32> to vector<32x1xf32>
    %161 = vector.broadcast %160 : vector<32x1xf32> to vector<32x16xf32>
    %162 = arith.divf %158, %161 : vector<32x16xf32>
    %163 = vector.extract_strided_slice %162 {offsets = [0, 0], sizes = [16, 16], strides = [1, 1]} : vector<32x16xf32> to vector<16x16xf32>
    %164 = vector.extract_strided_slice %162 {offsets = [16, 0], sizes = [16, 16], strides = [1, 1]} : vector<32x16xf32> to vector<16x16xf32>
    %165 = vector.broadcast %59 : vector<1x32xf32> to vector<16x32xf32>
    %166 = arith.mulf %135, %165 : vector<16x32xf32>
    %167 = arith.truncf %163 : vector<16x16xf32> to vector<16x16xbf16>
    %168 = arith.truncf %166 : vector<16x32xf32> to vector<16x32xbf16>
    %cst_36 = arith.constant dense<0.000000e+00> : vector<16x32xf32>
    %169 = tpu.matmul %167, %168, %cst_36 {dimension_numbers = #tpu.dot_dimension_numbers<[1], [0], [0], [1], [0, 0, 1, 1], [], []>} : vector<16x16xbf16>, vector<16x32xbf16>, vector<16x32xf32> -> vector<16x32xf32>
    %170 = vector.broadcast %66 : vector<1x32xf32> to vector<16x32xf32>
    %171 = arith.mulf %135, %170 : vector<16x32xf32>
    %172 = arith.truncf %164 : vector<16x16xf32> to vector<16x16xbf16>
    %173 = arith.truncf %171 : vector<16x32xf32> to vector<16x32xbf16>
    %cst_37 = arith.constant dense<0.000000e+00> : vector<16x32xf32>
    %174 = tpu.matmul %172, %173, %cst_37 {dimension_numbers = #tpu.dot_dimension_numbers<[1], [0], [0], [1], [0, 0, 1, 1], [], []>} : vector<16x16xbf16>, vector<16x32xbf16>, vector<16x32xf32> -> vector<16x32xf32>
    %175 = arith.addf %169, %174 : vector<16x32xf32>
    %176 = vector.shape_cast %163 : vector<16x16xf32> to vector<16x16x1xf32>
    %177 = vector.broadcast %176 : vector<16x16x1xf32> to vector<16x16x32xf32>
    %178 = vector.broadcast %67 : vector<1x1x32xf32> to vector<16x16x32xf32>
    %179 = arith.mulf %177, %178 : vector<16x16x32xf32>
    %180 = vector.shape_cast %164 : vector<16x16xf32> to vector<16x16x1xf32>
    %181 = vector.broadcast %180 : vector<16x16x1xf32> to vector<16x16x32xf32>
    %182 = vector.broadcast %68 : vector<1x1x32xf32> to vector<16x16x32xf32>
    %183 = arith.mulf %181, %182 : vector<16x16x32xf32>
    %184 = arith.addf %179, %183 : vector<16x16x32xf32>
    %185 = arith.mulf %184, %48 : vector<16x16x32xf32>
    %cst_38 = arith.constant dense<0.000000e+00> : vector<16x32xf32>
    %186 = vector.multi_reduction <add>, %185, %cst_38 [1] : vector<16x16x32xf32> to vector<16x32xf32>
    %187 = arith.addf %175, %186 : vector<16x32xf32>
    %188 = arith.addf %124, %187 : vector<16x32xf32>
    %cst_39 = arith.constant dense<0.000000e+00> : vector<16xf32>
    %189 = vector.multi_reduction <add>, %188, %cst_39 [1] : vector<16x32xf32> to vector<16xf32>
    %190 = vector.shape_cast %189 : vector<16xf32> to vector<16x1xf32>
    %cst_40 = arith.constant 3.200000e+01 : f32
    %191 = vector.broadcast %cst_40 : f32 to vector<16x1xf32>
    %192 = arith.divf %190, %191 : vector<16x1xf32>
    %193 = vector.broadcast %192 : vector<16x1xf32> to vector<16x32xf32>
    %194 = arith.subf %188, %193 : vector<16x32xf32>
    %195 = arith.mulf %194, %194 : vector<16x32xf32>
    %cst_41 = arith.constant dense<0.000000e+00> : vector<16xf32>
    %196 = vector.multi_reduction <add>, %195, %cst_41 [1] : vector<16x32xf32> to vector<16xf32>
    %197 = vector.shape_cast %196 : vector<16xf32> to vector<16x1xf32>
    %cst_42 = arith.constant 3.200000e+01 : f32
    %198 = vector.broadcast %cst_42 : f32 to vector<16x1xf32>
    %199 = arith.divf %197, %198 : vector<16x1xf32>
    %cst_43 = arith.constant 9.99999993E-9 : f32
    %200 = vector.broadcast %cst_43 : f32 to vector<16x1xf32>
    %201 = arith.addf %199, %200 : vector<16x1xf32>
    %202 = math.rsqrt %201 : vector<16x1xf32>
    %203 = vector.broadcast %202 : vector<16x1xf32> to vector<16x32xf32>
    %204 = arith.mulf %194, %203 : vector<16x32xf32>
    %205 = vector.broadcast %99 : vector<1x32xf32> to vector<16x32xf32>
    %206 = arith.mulf %204, %205 : vector<16x32xf32>
    %207 = vector.broadcast %100 : vector<1x32xf32> to vector<16x32xf32>
    %208 = arith.addf %206, %207 : vector<16x32xf32>
    %209 = arith.truncf %208 : vector<16x32xf32> to vector<16x32xbf16>
    %cst_44 = arith.constant dense<0.000000e+00> : vector<16x32xf32>
    %210 = tpu.matmul %209, %93, %cst_44 {dimension_numbers = #tpu.dot_dimension_numbers<[1], [0], [0], [1], [0, 0, 1, 1], [], []>} : vector<16x32xbf16>, vector<32x32xbf16>, vector<16x32xf32> -> vector<16x32xf32>
    %211 = vector.broadcast %103 : vector<1x32xf32> to vector<16x32xf32>
    %212 = arith.addf %210, %211 : vector<16x32xf32>
    %cst_45 = arith.constant 0.000000e+00 : f32
    %213 = vector.broadcast %cst_45 : f32 to vector<16x32xf32>
    %214 = arith.maximumf %212, %213 : vector<16x32xf32>
    %215 = arith.truncf %214 : vector<16x32xf32> to vector<16x32xbf16>
    %cst_46 = arith.constant dense<0.000000e+00> : vector<16x32xf32>
    %216 = tpu.matmul %215, %94, %cst_46 {dimension_numbers = #tpu.dot_dimension_numbers<[1], [0], [0], [1], [0, 0, 1, 1], [], []>} : vector<16x32xbf16>, vector<32x32xbf16>, vector<16x32xf32> -> vector<16x32xf32>
    %217 = vector.broadcast %104 : vector<1x32xf32> to vector<16x32xf32>
    %218 = arith.addf %216, %217 : vector<16x32xf32>
    %219 = arith.addf %218, %208 : vector<16x32xf32>
    %220 = vector.broadcast %14 : vector<16x1xf32> to vector<16x32xf32>
    %221 = arith.mulf %219, %220 : vector<16x32xf32>
    %c1 = arith.constant 1 : index
    %c0_47 = arith.constant 0 : index
    %c0_48 = arith.constant 0 : index
    %222 = vector.load %arg3[%c1, %c0_47, %c0_48] : memref<2x32x160xbf16, #tpu.memory_space<vmem>>, vector<1x32x160xbf16>
    %223 = vector.shape_cast %222 : vector<1x32x160xbf16> to vector<32x160xbf16>
    %224 = vector.extract_strided_slice %223 {offsets = [0, 0], sizes = [32, 32], strides = [1, 1]} : vector<32x160xbf16> to vector<32x32xbf16>
    %225 = vector.extract_strided_slice %223 {offsets = [0, 32], sizes = [32, 64], strides = [1, 1]} : vector<32x160xbf16> to vector<32x64xbf16>
    %226 = vector.extract_strided_slice %223 {offsets = [0, 96], sizes = [32, 32], strides = [1, 1]} : vector<32x160xbf16> to vector<32x32xbf16>
    %227 = vector.extract_strided_slice %223 {offsets = [0, 128], sizes = [32, 32], strides = [1, 1]} : vector<32x160xbf16> to vector<32x32xbf16>
    %c1_49 = arith.constant 1 : index
    %c0_50 = arith.constant 0 : index
    %c0_51 = arith.constant 0 : index
    %228 = vector.load %arg4[%c1_49, %c0_50, %c0_51] : memref<4x8x64xf32, #tpu.memory_space<vmem>>, vector<1x8x64xf32>
    %229 = vector.shape_cast %228 : vector<1x8x64xf32> to vector<8x64xf32>
    %230 = vector.extract_strided_slice %229 {offsets = [0, 0], sizes = [1, 32], strides = [1, 1]} : vector<8x64xf32> to vector<1x32xf32>
    %231 = vector.extract_strided_slice %229 {offsets = [0, 32], sizes = [1, 32], strides = [1, 1]} : vector<8x64xf32> to vector<1x32xf32>
    %232 = vector.extract_strided_slice %229 {offsets = [1, 0], sizes = [1, 32], strides = [1, 1]} : vector<8x64xf32> to vector<1x32xf32>
    %233 = vector.extract_strided_slice %229 {offsets = [1, 32], sizes = [1, 32], strides = [1, 1]} : vector<8x64xf32> to vector<1x32xf32>
    %234 = vector.extract_strided_slice %229 {offsets = [2, 0], sizes = [1, 32], strides = [1, 1]} : vector<8x64xf32> to vector<1x32xf32>
    %235 = vector.extract_strided_slice %229 {offsets = [3, 0], sizes = [1, 64], strides = [1, 1]} : vector<8x64xf32> to vector<1x64xf32>
    %236 = vector.extract_strided_slice %229 {offsets = [4, 0], sizes = [1, 32], strides = [1, 1]} : vector<8x64xf32> to vector<1x32xf32>
    %237 = vector.extract_strided_slice %229 {offsets = [5, 0], sizes = [1, 32], strides = [1, 1]} : vector<8x64xf32> to vector<1x32xf32>
    %cst_52 = arith.constant dense<0.000000e+00> : vector<16xf32>
    %238 = vector.multi_reduction <add>, %221, %cst_52 [1] : vector<16x32xf32> to vector<16xf32>
    %239 = vector.shape_cast %238 : vector<16xf32> to vector<16x1xf32>
    %cst_53 = arith.constant 3.200000e+01 : f32
    %240 = vector.broadcast %cst_53 : f32 to vector<16x1xf32>
    %241 = arith.divf %239, %240 : vector<16x1xf32>
    %242 = vector.broadcast %241 : vector<16x1xf32> to vector<16x32xf32>
    %243 = arith.subf %221, %242 : vector<16x32xf32>
    %244 = arith.mulf %243, %243 : vector<16x32xf32>
    %cst_54 = arith.constant dense<0.000000e+00> : vector<16xf32>
    %245 = vector.multi_reduction <add>, %244, %cst_54 [1] : vector<16x32xf32> to vector<16xf32>
    %246 = vector.shape_cast %245 : vector<16xf32> to vector<16x1xf32>
    %cst_55 = arith.constant 3.200000e+01 : f32
    %247 = vector.broadcast %cst_55 : f32 to vector<16x1xf32>
    %248 = arith.divf %246, %247 : vector<16x1xf32>
    %cst_56 = arith.constant 9.99999993E-9 : f32
    %249 = vector.broadcast %cst_56 : f32 to vector<16x1xf32>
    %250 = arith.addf %248, %249 : vector<16x1xf32>
    %251 = math.rsqrt %250 : vector<16x1xf32>
    %252 = vector.broadcast %251 : vector<16x1xf32> to vector<16x32xf32>
    %253 = arith.mulf %243, %252 : vector<16x32xf32>
    %254 = vector.broadcast %230 : vector<1x32xf32> to vector<16x32xf32>
    %255 = arith.mulf %253, %254 : vector<16x32xf32>
    %256 = vector.broadcast %231 : vector<1x32xf32> to vector<16x32xf32>
    %257 = arith.addf %255, %256 : vector<16x32xf32>
    %258 = arith.truncf %257 : vector<16x32xf32> to vector<16x32xbf16>
    %cst_57 = arith.constant dense<0.000000e+00> : vector<16x32xf32>
    %259 = tpu.matmul %258, %224, %cst_57 {dimension_numbers = #tpu.dot_dimension_numbers<[1], [0], [0], [1], [0, 0, 1, 1], [], []>} : vector<16x32xbf16>, vector<32x32xbf16>, vector<16x32xf32> -> vector<16x32xf32>
    %260 = vector.broadcast %234 : vector<1x32xf32> to vector<16x32xf32>
    %261 = arith.addf %259, %260 : vector<16x32xf32>
    %262 = arith.truncf %221 : vector<16x32xf32> to vector<16x32xbf16>
    %cst_58 = arith.constant dense<0.000000e+00> : vector<16x64xf32>
    %263 = tpu.matmul %262, %225, %cst_58 {dimension_numbers = #tpu.dot_dimension_numbers<[1], [0], [0], [1], [0, 0, 1, 1], [], []>} : vector<16x32xbf16>, vector<32x64xbf16>, vector<16x64xf32> -> vector<16x64xf32>
    %264 = vector.broadcast %235 : vector<1x64xf32> to vector<16x64xf32>
    %265 = arith.addf %263, %264 : vector<16x64xf32>
    %266 = arith.addf %265, %51 : vector<16x64xf32>
    %267 = vector.extract_strided_slice %266 {offsets = [0, 0], sizes = [16, 32], strides = [1, 1]} : vector<16x64xf32> to vector<16x32xf32>
    %268 = vector.extract_strided_slice %266 {offsets = [0, 32], sizes = [16, 32], strides = [1, 1]} : vector<16x64xf32> to vector<16x32xf32>
    %269 = vector.broadcast %59 : vector<1x32xf32> to vector<16x32xf32>
    %270 = arith.mulf %261, %269 : vector<16x32xf32>
    %271 = vector.broadcast %66 : vector<1x32xf32> to vector<16x32xf32>
    %272 = arith.mulf %261, %271 : vector<16x32xf32>
    %273 = tpu.concatenate %270, %272 in 0 : vector<16x32xf32>, vector<16x32xf32> -> vector<32x32xf32>
    %274 = arith.truncf %273 : vector<32x32xf32> to vector<32x32xbf16>
    %275 = arith.truncf %267 : vector<16x32xf32> to vector<16x32xbf16>
    %cst_59 = arith.constant dense<0.000000e+00> : vector<32x16xf32>
    %276 = tpu.matmul %274, %275, %cst_59 {dimension_numbers = #tpu.dot_dimension_numbers<[1], [1], [0], [0], [0, 0, 1, 0], [], []>} : vector<32x32xbf16>, vector<16x32xbf16>, vector<32x16xf32> -> vector<32x16xf32>
    %277 = vector.shape_cast %273 : vector<32x32xf32> to vector<32x1x32xf32>
    %278 = vector.broadcast %277 : vector<32x1x32xf32> to vector<32x8x32xf32>
    %279 = arith.mulf %47, %278 : vector<32x8x32xf32>
    %cst_60 = arith.constant dense<0.000000e+00> : vector<32x8xf32>
    %280 = vector.multi_reduction <add>, %279, %cst_60 [2] : vector<32x8x32xf32> to vector<32x8xf32>
    %281 = tpu.concatenate %280, %280 in 1 : vector<32x8xf32>, vector<32x8xf32> -> vector<32x16xf32>
    %282 = arith.addf %276, %281 : vector<32x16xf32>
    %cst_61 = arith.constant 2.500000e-01 : f32
    %283 = vector.broadcast %cst_61 : f32 to vector<32x16xf32>
    %284 = arith.mulf %282, %283 : vector<32x16xf32>
    %cst_62 = arith.constant -4.2949673E+9 : f32
    %285 = vector.broadcast %cst_62 : f32 to vector<32x16xf32>
    %286 = arith.select %88, %285, %284 : vector<32x16xi1>, vector<32x16xf32>
    %cst_63 = arith.constant dense<0xFF800000> : vector<32xf32>
    %287 = vector.multi_reduction <maximumf>, %286, %cst_63 [1] : vector<32x16xf32> to vector<32xf32>
    %288 = vector.shape_cast %287 : vector<32xf32> to vector<32x1xf32>
    %289 = vector.broadcast %288 : vector<32x1xf32> to vector<32x16xf32>
    %290 = arith.subf %286, %289 : vector<32x16xf32>
    %291 = math.exp %290 : vector<32x16xf32>
    %cst_64 = arith.constant dense<0.000000e+00> : vector<32xf32>
    %292 = vector.multi_reduction <add>, %291, %cst_64 [1] : vector<32x16xf32> to vector<32xf32>
    %293 = vector.shape_cast %292 : vector<32xf32> to vector<32x1xf32>
    %294 = vector.broadcast %293 : vector<32x1xf32> to vector<32x16xf32>
    %295 = arith.divf %291, %294 : vector<32x16xf32>
    %296 = vector.extract_strided_slice %295 {offsets = [0, 0], sizes = [16, 16], strides = [1, 1]} : vector<32x16xf32> to vector<16x16xf32>
    %297 = vector.extract_strided_slice %295 {offsets = [16, 0], sizes = [16, 16], strides = [1, 1]} : vector<32x16xf32> to vector<16x16xf32>
    %298 = vector.broadcast %59 : vector<1x32xf32> to vector<16x32xf32>
    %299 = arith.mulf %268, %298 : vector<16x32xf32>
    %300 = arith.truncf %296 : vector<16x16xf32> to vector<16x16xbf16>
    %301 = arith.truncf %299 : vector<16x32xf32> to vector<16x32xbf16>
    %cst_65 = arith.constant dense<0.000000e+00> : vector<16x32xf32>
    %302 = tpu.matmul %300, %301, %cst_65 {dimension_numbers = #tpu.dot_dimension_numbers<[1], [0], [0], [1], [0, 0, 1, 1], [], []>} : vector<16x16xbf16>, vector<16x32xbf16>, vector<16x32xf32> -> vector<16x32xf32>
    %303 = vector.broadcast %66 : vector<1x32xf32> to vector<16x32xf32>
    %304 = arith.mulf %268, %303 : vector<16x32xf32>
    %305 = arith.truncf %297 : vector<16x16xf32> to vector<16x16xbf16>
    %306 = arith.truncf %304 : vector<16x32xf32> to vector<16x32xbf16>
    %cst_66 = arith.constant dense<0.000000e+00> : vector<16x32xf32>
    %307 = tpu.matmul %305, %306, %cst_66 {dimension_numbers = #tpu.dot_dimension_numbers<[1], [0], [0], [1], [0, 0, 1, 1], [], []>} : vector<16x16xbf16>, vector<16x32xbf16>, vector<16x32xf32> -> vector<16x32xf32>
    %308 = arith.addf %302, %307 : vector<16x32xf32>
    %309 = vector.shape_cast %296 : vector<16x16xf32> to vector<16x16x1xf32>
    %310 = vector.broadcast %309 : vector<16x16x1xf32> to vector<16x16x32xf32>
    %311 = vector.broadcast %67 : vector<1x1x32xf32> to vector<16x16x32xf32>
    %312 = arith.mulf %310, %311 : vector<16x16x32xf32>
    %313 = vector.shape_cast %297 : vector<16x16xf32> to vector<16x16x1xf32>
    %314 = vector.broadcast %313 : vector<16x16x1xf32> to vector<16x16x32xf32>
    %315 = vector.broadcast %68 : vector<1x1x32xf32> to vector<16x16x32xf32>
    %316 = arith.mulf %314, %315 : vector<16x16x32xf32>
    %317 = arith.addf %312, %316 : vector<16x16x32xf32>
    %318 = arith.mulf %317, %48 : vector<16x16x32xf32>
    %cst_67 = arith.constant dense<0.000000e+00> : vector<16x32xf32>
    %319 = vector.multi_reduction <add>, %318, %cst_67 [1] : vector<16x16x32xf32> to vector<16x32xf32>
    %320 = arith.addf %308, %319 : vector<16x32xf32>
    %321 = arith.addf %257, %320 : vector<16x32xf32>
    %cst_68 = arith.constant dense<0.000000e+00> : vector<16xf32>
    %322 = vector.multi_reduction <add>, %321, %cst_68 [1] : vector<16x32xf32> to vector<16xf32>
    %323 = vector.shape_cast %322 : vector<16xf32> to vector<16x1xf32>
    %cst_69 = arith.constant 3.200000e+01 : f32
    %324 = vector.broadcast %cst_69 : f32 to vector<16x1xf32>
    %325 = arith.divf %323, %324 : vector<16x1xf32>
    %326 = vector.broadcast %325 : vector<16x1xf32> to vector<16x32xf32>
    %327 = arith.subf %321, %326 : vector<16x32xf32>
    %328 = arith.mulf %327, %327 : vector<16x32xf32>
    %cst_70 = arith.constant dense<0.000000e+00> : vector<16xf32>
    %329 = vector.multi_reduction <add>, %328, %cst_70 [1] : vector<16x32xf32> to vector<16xf32>
    %330 = vector.shape_cast %329 : vector<16xf32> to vector<16x1xf32>
    %cst_71 = arith.constant 3.200000e+01 : f32
    %331 = vector.broadcast %cst_71 : f32 to vector<16x1xf32>
    %332 = arith.divf %330, %331 : vector<16x1xf32>
    %cst_72 = arith.constant 9.99999993E-9 : f32
    %333 = vector.broadcast %cst_72 : f32 to vector<16x1xf32>
    %334 = arith.addf %332, %333 : vector<16x1xf32>
    %335 = math.rsqrt %334 : vector<16x1xf32>
    %336 = vector.broadcast %335 : vector<16x1xf32> to vector<16x32xf32>
    %337 = arith.mulf %327, %336 : vector<16x32xf32>
    %338 = vector.broadcast %232 : vector<1x32xf32> to vector<16x32xf32>
    %339 = arith.mulf %337, %338 : vector<16x32xf32>
    %340 = vector.broadcast %233 : vector<1x32xf32> to vector<16x32xf32>
    %341 = arith.addf %339, %340 : vector<16x32xf32>
    %342 = arith.truncf %341 : vector<16x32xf32> to vector<16x32xbf16>
    %cst_73 = arith.constant dense<0.000000e+00> : vector<16x32xf32>
    %343 = tpu.matmul %342, %226, %cst_73 {dimension_numbers = #tpu.dot_dimension_numbers<[1], [0], [0], [1], [0, 0, 1, 1], [], []>} : vector<16x32xbf16>, vector<32x32xbf16>, vector<16x32xf32> -> vector<16x32xf32>
    %344 = vector.broadcast %236 : vector<1x32xf32> to vector<16x32xf32>
    %345 = arith.addf %343, %344 : vector<16x32xf32>
    %cst_74 = arith.constant 0.000000e+00 : f32
    %346 = vector.broadcast %cst_74 : f32 to vector<16x32xf32>
    %347 = arith.maximumf %345, %346 : vector<16x32xf32>
    %348 = arith.truncf %347 : vector<16x32xf32> to vector<16x32xbf16>
    %cst_75 = arith.constant dense<0.000000e+00> : vector<16x32xf32>
    %349 = tpu.matmul %348, %227, %cst_75 {dimension_numbers = #tpu.dot_dimension_numbers<[1], [0], [0], [1], [0, 0, 1, 1], [], []>} : vector<16x32xbf16>, vector<32x32xbf16>, vector<16x32xf32> -> vector<16x32xf32>
    %350 = vector.broadcast %237 : vector<1x32xf32> to vector<16x32xf32>
    %351 = arith.addf %349, %350 : vector<16x32xf32>
    %352 = arith.addf %351, %341 : vector<16x32xf32>
    %353 = vector.broadcast %14 : vector<16x1xf32> to vector<16x32xf32>
    %354 = arith.mulf %352, %353 : vector<16x32xf32>
    %c2 = arith.constant 2 : index
    %c0_76 = arith.constant 0 : index
    %c0_77 = arith.constant 0 : index
    %355 = vector.load %arg4[%c2, %c0_76, %c0_77] : memref<4x8x64xf32, #tpu.memory_space<vmem>>, vector<1x8x64xf32>
    %356 = vector.shape_cast %355 : vector<1x8x64xf32> to vector<8x64xf32>
    %357 = vector.extract_strided_slice %356 {offsets = [0, 0], sizes = [1, 32], strides = [1, 1]} : vector<8x64xf32> to vector<1x32xf32>
    %358 = vector.extract_strided_slice %356 {offsets = [0, 32], sizes = [1, 32], strides = [1, 1]} : vector<8x64xf32> to vector<1x32xf32>
    %cst_78 = arith.constant dense<0.000000e+00> : vector<16xf32>
    %359 = vector.multi_reduction <add>, %354, %cst_78 [1] : vector<16x32xf32> to vector<16xf32>
    %360 = vector.shape_cast %359 : vector<16xf32> to vector<16x1xf32>
    %cst_79 = arith.constant 3.200000e+01 : f32
    %361 = vector.broadcast %cst_79 : f32 to vector<16x1xf32>
    %362 = arith.divf %360, %361 : vector<16x1xf32>
    %363 = vector.broadcast %362 : vector<16x1xf32> to vector<16x32xf32>
    %364 = arith.subf %354, %363 : vector<16x32xf32>
    %365 = arith.mulf %364, %364 : vector<16x32xf32>
    %cst_80 = arith.constant dense<0.000000e+00> : vector<16xf32>
    %366 = vector.multi_reduction <add>, %365, %cst_80 [1] : vector<16x32xf32> to vector<16xf32>
    %367 = vector.shape_cast %366 : vector<16xf32> to vector<16x1xf32>
    %cst_81 = arith.constant 3.200000e+01 : f32
    %368 = vector.broadcast %cst_81 : f32 to vector<16x1xf32>
    %369 = arith.divf %367, %368 : vector<16x1xf32>
    %cst_82 = arith.constant 9.99999993E-9 : f32
    %370 = vector.broadcast %cst_82 : f32 to vector<16x1xf32>
    %371 = arith.addf %369, %370 : vector<16x1xf32>
    %372 = math.rsqrt %371 : vector<16x1xf32>
    %373 = vector.broadcast %372 : vector<16x1xf32> to vector<16x32xf32>
    %374 = arith.mulf %364, %373 : vector<16x32xf32>
    %375 = vector.broadcast %357 : vector<1x32xf32> to vector<16x32xf32>
    %376 = arith.mulf %374, %375 : vector<16x32xf32>
    %377 = vector.broadcast %358 : vector<1x32xf32> to vector<16x32xf32>
    %378 = arith.addf %376, %377 : vector<16x32xf32>
    %379 = vector.shape_cast %378 : vector<16x32xf32> to vector<2x8x32xf32>
    %380 = vector.shape_cast %20 : vector<16x32xf32> to vector<2x8x32xf32>
    %381 = arith.mulf %379, %380 : vector<2x8x32xf32>
    %cst_83 = arith.constant dense<0.000000e+00> : vector<2x8xf32>
    %382 = vector.multi_reduction <add>, %381, %cst_83 [2] : vector<2x8x32xf32> to vector<2x8xf32>
    %c0_84 = arith.constant 0 : index
    %c0_85 = arith.constant 0 : index
    %c0_86 = arith.constant 0 : index
    %383 = vector.load %arg5[%c0_84, %c0_85, %c0_86] : memref<2x2x8xf32, #tpu.memory_space<vmem>>, vector<1x2x8xf32>
    %384 = vector.shape_cast %383 : vector<1x2x8xf32> to vector<2x8xf32>
    %385 = vector.shape_cast %382 : vector<2x8xf32> to vector<1x2x8xf32>
    tpu.vector_store %arg5[%c0_84, %c0_85, %c0_86], %385 {strides = array<i32>} : memref<2x2x8xf32, #tpu.memory_space<vmem>>, vector<1x2x8xf32>,
    %386 = vector.shape_cast %21 : vector<16x32xf32> to vector<2x8x32xf32>
    %387 = arith.mulf %379, %386 : vector<2x8x32xf32>
    %cst_87 = arith.constant dense<0.000000e+00> : vector<2x8xf32>
    %388 = vector.multi_reduction <add>, %387, %cst_87 [2] : vector<2x8x32xf32> to vector<2x8xf32>
    %c1_88 = arith.constant 1 : index
    %c0_89 = arith.constant 0 : index
    %c0_90 = arith.constant 0 : index
    %389 = vector.load %arg5[%c1_88, %c0_89, %c0_90] : memref<2x2x8xf32, #tpu.memory_space<vmem>>, vector<1x2x8xf32>
    %390 = vector.shape_cast %389 : vector<1x2x8xf32> to vector<2x8xf32>
    %391 = vector.shape_cast %388 : vector<2x8xf32> to vector<1x2x8xf32>
    tpu.vector_store %arg5[%c1_88, %c0_89, %c0_90], %391 {strides = array<i32>} : memref<2x2x8xf32, #tpu.memory_space<vmem>>, vector<1x2x8xf32>,
    return
  }
  func.func @transform_0(%arg0: i32) -> (i32, i32) {
    %c0_i32 = arith.constant 0 : i32
    %c0_i32_0 = arith.constant 0 : i32
    %c0_i32_1 = arith.constant 0 : i32
    return %c0_i32, %c0_i32_0 : i32, i32
  }
  func.func @transform_1(%arg0: i32) -> (i32, i32) {
    %c0_i32 = arith.constant 0 : i32
    %c0_i32_0 = arith.constant 0 : i32
    %c0_i32_1 = arith.constant 0 : i32
    return %c0_i32, %c0_i32_0 : i32, i32
  }
  func.func @transform_2(%arg0: i32) -> (i32, i32, i32) {
    %c0_i32 = arith.constant 0 : i32
    %c0_i32_0 = arith.constant 0 : i32
    %c0_i32_1 = arith.constant 0 : i32
    %c0_i32_2 = arith.constant 0 : i32
    return %c0_i32, %c0_i32_0, %c0_i32_1 : i32, i32, i32
  }
  func.func @transform_3(%arg0: i32) -> (i32, i32, i32) {
    %c0_i32 = arith.constant 0 : i32
    %c0_i32_0 = arith.constant 0 : i32
    %c0_i32_1 = arith.constant 0 : i32
    %c0_i32_2 = arith.constant 0 : i32
    return %c0_i32, %c0_i32_0, %c0_i32_1 : i32, i32, i32
  }
  func.func @transform_4(%arg0: i32) -> (i32, i32, i32) {
    %c0_i32 = arith.constant 0 : i32
    %c0_i32_0 = arith.constant 0 : i32
    %c0_i32_1 = arith.constant 0 : i32
    %c0_i32_2 = arith.constant 0 : i32
    return %c0_i32, %c0_i32_0, %c0_i32_1 : i32, i32, i32
  }
}

</mosaic_0001>

<llo_original>
// kernel: tisasrec_forward.1
$region0: #{tisasrec_forward.1}
  #allocation0 [shape = 'u32[]', space=smem, size = 0x4, offset = 0x4, fixed_abs, tag = 'smem constant byte address 0x4 - core index']
  #allocation1 [shape = 'u32[72,128]{1,0:T(1,128)}', space=vmem, size = 0x9000, scoped, tag = 'internal scratch']
  %s0 = inlined_call_operand.vmem [shape: s32[176,1], index: 0, kind: input, shape index: {}]
  %s1 = inlined_call_operand.vmem [shape: bf16[80,64], index: 1, kind: input, shape index: {}]
  %s2 = inlined_call_operand.vmem [shape: bf16[2,32,160], index: 2, kind: input, shape index: {}]
  %s3 = inlined_call_operand.vmem [shape: f32[4,8,64], index: 3, kind: input, shape index: {}]
  %s4 = inlined_call_operand.vmem [shape: f32[2,2,8], index: 4, kind: output, shape index: {}]
  %s5 = sld [smem:[#allocation0]]
  $region26: #{tisasrec_forward.1} parent=0
    _
  %s7 = ssub.s32 1, %s5
  %s8 = scalar_select 0, %s7, %s5
  // Predicated region
  $region2: #{tisasrec_forward.1} parent=0 // pred_check
    _
  $region3: #{tisasrec_forward.1} parent=0 // pred_check_branch
    %10 = sbr.rel (0) target = $region5
  $region4: #{tisasrec_forward.1} parent=0 // pred_region
    _
  $region5: #{tisasrec_forward.1} parent=0 // pred_fallthru
    _
  // Predicated region
  $region6: #{tisasrec_forward.1} parent=0 // pred_check
    _
  $region7: #{tisasrec_forward.1} parent=0 // pred_check_branch
    %12 = sbr.rel (0) target = $region9
  $region8: #{tisasrec_forward.1} parent=0 // pred_region
    _
  $region9: #{tisasrec_forward.1} parent=0 // pred_fallthru
    _
  // Predicated region
  $region10: #{tisasrec_forward.1} parent=0 // pred_check
    _
  $region11: #{tisasrec_forward.1} parent=0 // pred_check_branch
    %14 = sbr.rel (0) target = $region13
  $region12: #{tisasrec_forward.1} parent=0 // pred_region
    _
  $region13: #{tisasrec_forward.1} parent=0 // pred_fallthru
    _
  // Predicated region
  $region14: #{tisasrec_forward.1} parent=0 // pred_check
    _
  $region15: #{tisasrec_forward.1} parent=0 // pred_check_branch
    %16 = sbr.rel (0) target = $region17
  $region16: #{tisasrec_forward.1} parent=0 // pred_region
    _
  $region17: #{tisasrec_forward.1} parent=0 // pred_fallthru
    _
  %v18 = vld [vmem:[%s0] sm:$0xff]
  %v19 = vld [vmem:[%s0 + $0x8] sm:$0xff]
  %v20 = vld [vmem:[%s0 + $0x10] sm:$0xff]
  %v21 = vld [vmem:[%s0 + $0x18] sm:$0xff]
  %v22 = vld [vmem:[%s0 + $0x20] sm:$0xff]
  %v23 = vld [vmem:[%s0 + $0x28] sm:$0xff]
  %v24 = vld [vmem:[%s0 + $0x30] sm:$0xff]
  %v25 = vld [vmem:[%s0 + $0x38] sm:$0xff]
  %v26 = vld [vmem:[%s0 + $0x40] sm:$0xff]
  %v27 = vld [vmem:[%s0 + $0x48] sm:$0xff]
  %v28 = vld [vmem:[%s0 + $0x50] sm:$0xff]
  %v29 = vld [vmem:[%s0 + $0x58] sm:$0xff]
  %v30 = vld [vmem:[%s0 + $0x60] sm:$0xff]
  %v31 = vld [vmem:[%s0 + $0x68] sm:$0xff]
  %v32 = vld [vmem:[%s0 + $0x70] sm:$0xff]
  %v33 = vld [vmem:[%s0 + $0x78] sm:$0xff]
  %v34 = vld [vmem:[%s0 + $0x80] sm:$0xff]
  %v35 = vld [vmem:[%s0 + $0x88] sm:$0xff]
  %v36 = vld [vmem:[%s0 + $0x90] sm:$0xff]
  %v37 = vld [vmem:[%s0 + $0x98] sm:$0xff]
  %v38 = vld [vmem:[%s0 + $0xa0] sm:$0xff]
  %v39 = vld [vmem:[%s0 + $0xa8] sm:$0xff]
  %v40 = vld [vmem:[%s1] sm:$0xf]
  %v41 = vld [vmem:[%s1 + $0x4] sm:$0xf]
  %v42 = vld [vmem:[%s1 + $0x8] sm:$0xf]
  %v43 = vld [vmem:[%s1 + $0xc] sm:$0xf]
  %v44 = vlaneseq
  %v45 = vand.u32 %v44, 127
  %46 = vset.pattern.permute.xlu0 0
  %47 = vperm.xlu0 %46, %v18
  %v48 = vpop.permute.xlu0 %47
  %49 = vset.pattern.permute.xlu0 0
  %50 = vperm.xlu0 %49, %v19
  %v51 = vpop.permute.xlu0 %50
  %52 = vset.pattern.permute.xlu0 0
  %53 = vperm.xlu0 %52, %v20
  %v54 = vpop.permute.xlu0 %53
  %55 = vset.pattern.permute.xlu0 0
  %56 = vperm.xlu0 %55, %v21
  %v57 = vpop.permute.xlu0 %56
  %58 = vset.pattern.permute.xlu0 0
  %59 = vperm.xlu0 %58, %v22
  %v60 = vpop.permute.xlu0 %59
  %61 = vset.pattern.permute.xlu0 0
  %62 = vperm.xlu0 %61, %v23
  %v63 = vpop.permute.xlu0 %62
  %vm64 = vcmp.eq.s32.totalorder %v48, %v45
  %vm65 = vcmp.eq.s32.totalorder %v51, %v45
  %vm66 = vcmp.eq.s32.totalorder %v54, %v45
  %vm67 = vcmp.eq.s32.totalorder %v57, %v45
  %vm68 = vcmp.eq.s32.totalorder %v60, %v45
  %vm69 = vcmp.eq.s32.totalorder %v63, %v45
  %v70 = vsel %vm64, 1, 0
  %v71 = vsel %vm65, 1, 0
  %v72 = vsel %vm66, 1, 0
  %v73 = vsel %vm67, 1, 0
  %v74 = vsel %vm68, 1, 0
  %v75 = vsel %vm69, 1, 0
  %v76 = vcvt.s32.f32 %v70
  %v77 = vcvt.s32.f32 %v71
  %v78 = vcvt.s32.f32 %v72
  %v79 = vcvt.s32.f32 %v73
  %v80 = vcvt.s32.f32 %v74
  %v81 = vcvt.s32.f32 %v75
  %v82 = vpack.c.bf16 %v77, %v76
  %v83 = vpack.c.bf16 %v79, %v78
  %v84 = vpack.c.bf16 %v81, %v80
  %v89 = vunpack.c.l.b16 %v40
  %v90 = vunpack.c.l.b16 %v41
  %v91 = vunpack.c.l.b16 %v42
  %v92 = vunpack.c.l.b16 %v43
  %v93 = vpack.c.b16 %v90, %v89
  %v94 = vpack.c.b16 %v92, %v91
  %vm97 = vcmask 261120
  %v99 = vsel %vm97, %v82, 0
  %v102 = vsel %vm97, %v83, 0
  %v105 = vsel %vm97, %v84, 0
  %107 = vmatpush.bf16.msra.mxu0 0
  %108 = vmatpush.bf16.msra.mxu0 0
  %109 = vmatpush.bf16.msra.mxu0 0
  %110 = vmatpush.bf16.msra.mxu0 0
  %111 = vmatpush.bf16.msra.mxu0 0
  %112 = vmatpush.bf16.msra.mxu0 0
  %113 = vmatpush.bf16.msra.mxu0 %v94
  %114 = vmatpush.bf16.msra.mxu0 %v93
  %115 = vmatmul.bf16.gmra.mxu0 %v99
  %v116 = vpop.f32.mrf.mxu0
  %v117 = vadd.f32 0.0, %v116
  %v118 = vpop.f32.mrf.mxu0
  %v119 = vadd.f32 0.0, %v118
  %120 = vmatmul.bf16.gmra.mxu0 %v102
  %v121 = vpop.f32.mrf.mxu0
  %v122 = vadd.f32 0.0, %v121
  %v123 = vpop.f32.mrf.mxu0
  %v124 = vadd.f32 0.0, %v123
  %125 = vmatmul.bf16.gmra.mxu0 %v105
  %v126 = vpop.f32.mrf.mxu0
  %v127 = vadd.f32 0.0, %v126
  %v128 = vpop.f32.mrf.mxu0
  %v129 = vadd.f32 0.0, %v128
  %130 = vdwg.mxu0
  %vm131 = vcmp.ne.s32.totalorder %v18, 0
  %vm132 = vcmp.ne.s32.totalorder %v19, 0
  %v133 = vsel %vm131, 1, 0
  %v134 = vsel %vm132, 1, 0
  %v135 = vcvt.s32.f32 %v133
  %v136 = vcvt.s32.f32 %v134
  %v137 = vmul.f32 %v117, 5.656854
  %v138 = vmul.f32 %v119, 5.656854
  %140 = vset.pattern.permute.xlu0 0
  %141 = vperm.xlu0 %140, %v135
  %v142 = vpop.permute.xlu0 %141
  %145 = vset.pattern.permute.xlu0 0
  %146 = vperm.xlu0 %145, %v136
  %v147 = vpop.permute.xlu0 %146
  %v149 = vmul.f32 %v137, %v142
  %v150 = vmul.f32 %v138, %v147
  %v151 = vand.u32 %v24, 3
  %v152 = vand.u32 %v25, 3
  %v153 = vand.u32 %v26, 3
  %v154 = vand.u32 %v27, 3
  %v155 = vand.u32 %v28, 3
  %v156 = vand.u32 %v29, 3
  %v157 = vand.u32 %v30, 3
  %v158 = vand.u32 %v31, 3
  %v159 = vand.u32 %v32, 3
  %v160 = vand.u32 %v33, 3
  %v161 = vand.u32 %v34, 3
  %v162 = vand.u32 %v35, 3
  %v163 = vand.u32 %v36, 3
  %v164 = vand.u32 %v37, 3
  %v165 = vand.u32 %v38, 3
  %v166 = vand.u32 %v39, 3
  %v167 = vshra.s32 %v24, 2
  %v168 = vshra.s32 %v25, 2
  %v169 = vshra.s32 %v26, 2
  %v170 = vshra.s32 %v27, 2
  %v171 = vshra.s32 %v28, 2
  %v172 = vshra.s32 %v29, 2
  %v173 = vshra.s32 %v30, 2
  %v174 = vshra.s32 %v31, 2
  %v175 = vshra.s32 %v32, 2
  %v176 = vshra.s32 %v33, 2
  %v177 = vshra.s32 %v34, 2
  %v178 = vshra.s32 %v35, 2
  %v179 = vshra.s32 %v36, 2
  %v180 = vshra.s32 %v37, 2
  %v181 = vshra.s32 %v38, 2
  %v182 = vshra.s32 %v39, 2
  %183 = vset.pattern.permute.xlu0 0
  %184 = vperm.xlu0 %183, %v151
  %v185 = vpop.permute.xlu0 %184
  %186 = vset.pattern.permute.xlu0 0
  %187 = vperm.xlu0 %186, %v152
  %v188 = vpop.permute.xlu0 %187
  %189 = vset.pattern.permute.xlu0 0
  %190 = vperm.xlu0 %189, %v153
  %v191 = vpop.permute.xlu0 %190
  %192 = vset.pattern.permute.xlu0 0
  %193 = vperm.xlu0 %192, %v154
  %v194 = vpop.permute.xlu0 %193
  %195 = vset.pattern.permute.xlu0 0
  %196 = vperm.xlu0 %195, %v155
  %v197 = vpop.permute.xlu0 %196
  %198 = vset.pattern.permute.xlu0 0
  %199 = vperm.xlu0 %198, %v156
  %v200 = vpop.permute.xlu0 %199
  %201 = vset.pattern.permute.xlu0 0
  %202 = vperm.xlu0 %201, %v157
  %v203 = vpop.permute.xlu0 %202
  %204 = vset.pattern.permute.xlu0 0
  %205 = vperm.xlu0 %204, %v158
  %v206 = vpop.permute.xlu0 %205
  %207 = vset.pattern.permute.xlu0 0
  %208 = vperm.xlu0 %207, %v159
  %v209 = vpop.permute.xlu0 %208
  %210 = vset.pattern.permute.xlu0 0
  %211 = vperm.xlu0 %210, %v160
  %v212 = vpop.permute.xlu0 %211
  %213 = vset.pattern.permute.xlu0 0
  %214 = vperm.xlu0 %213, %v161
  %v215 = vpop.permute.xlu0 %214
  %216 = vset.pattern.permute.xlu0 0
  %217 = vperm.xlu0 %216, %v162
  %v218 = vpop.permute.xlu0 %217
  %219 = vset.pattern.permute.xlu0 0
  %220 = vperm.xlu0 %219, %v163
  %v221 = vpop.permute.xlu0 %220
  %222 = vset.pattern.permute.xlu0 0
  %223 = vperm.xlu0 %222, %v164
  %v224 = vpop.permute.xlu0 %223
  %225 = vset.pattern.permute.xlu0 0
  %226 = vperm.xlu0 %225, %v165
  %v227 = vpop.permute.xlu0 %226
  %228 = vset.pattern.permute.xlu0 0
  %229 = vperm.xlu0 %228, %v166
  %v230 = vpop.permute.xlu0 %229
  %vm231 = vcmp.eq.s32.totalorder %v185, %v45
  %vm232 = vcmp.eq.s32.totalorder %v188, %v45
  %vm233 = vcmp.eq.s32.totalorder %v191, %v45
  %vm234 = vcmp.eq.s32.totalorder %v194, %v45
  %vm235 = vcmp.eq.s32.totalorder %v197, %v45
  %vm236 = vcmp.eq.s32.totalorder %v200, %v45
  %vm237 = vcmp.eq.s32.totalorder %v203, %v45
  %vm238 = vcmp.eq.s32.totalorder %v206, %v45
  %vm239 = vcmp.eq.s32.totalorder %v209, %v45
  %vm240 = vcmp.eq.s32.totalorder %v212, %v45
  %vm241 = vcmp.eq.s32.totalorder %v215, %v45
  %vm242 = vcmp.eq.s32.totalorder %v218, %v45
  %vm243 = vcmp.eq.s32.totalorder %v221, %v45
  %vm244 = vcmp.eq.s32.totalorder %v224, %v45
  %vm245 = vcmp.eq.s32.totalorder %v227, %v45
  %vm246 = vcmp.eq.s32.totalorder %v230, %v45
  %v247 = vsel %vm231, 1, 0
  %v248 = vsel %vm232, 1, 0
  %v249 = vsel %vm233, 1, 0
  %v250 = vsel %vm234, 1, 0
  %v251 = vsel %vm235, 1, 0
  %v252 = vsel %vm236, 1, 0
  %v253 = vsel %vm237, 1, 0
  %v254 = vsel %vm238, 1, 0
  %v255 = vsel %vm239, 1, 0
  %v256 = vsel %vm240, 1, 0
  %v257 = vsel %vm241, 1, 0
  %v258 = vsel %vm242, 1, 0
  %v259 = vsel %vm243, 1, 0
  %v260 = vsel %vm244, 1, 0
  %v261 = vsel %vm245, 1, 0
  %v262 = vsel %vm246, 1, 0
  %v263 = vcvt.s32.f32 %v247
  %v264 = vcvt.s32.f32 %v248
  %v265 = vcvt.s32.f32 %v249
  %v266 = vcvt.s32.f32 %v250
  %v267 = vcvt.s32.f32 %v251
  %v268 = vcvt.s32.f32 %v252
  %v269 = vcvt.s32.f32 %v253
  %v270 = vcvt.s32.f32 %v254
  %v271 = vcvt.s32.f32 %v255
  %v272 = vcvt.s32.f32 %v256
  %v273 = vcvt.s32.f32 %v257
  %v274 = vcvt.s32.f32 %v258
  %v275 = vcvt.s32.f32 %v259
  %v276 = vcvt.s32.f32 %v260
  %v277 = vcvt.s32.f32 %v261
  %v278 = vcvt.s32.f32 %v262
  %v279 = vpack.c.bf16 %v264, %v263
  %v280 = vpack.c.bf16 %v266, %v265
  %v281 = vpack.c.bf16 %v268, %v267
  %v282 = vpack.c.bf16 %v270, %v269
  %v283 = vpack.c.bf16 %v272, %v271
  %v284 = vpack.c.bf16 %v274, %v273
  %v285 = vpack.c.bf16 %v276, %v275
  %v286 = vpack.c.bf16 %v278, %v277
  %v287 = vld [vmem:[%s1 + $0x10] sm:$0xf]
  %v288 = vld [vmem:[%s1 + $0x14] sm:$0xf]
  %v289 = vld [vmem:[%s1 + $0x18] sm:$0xf]
  %v290 = vld [vmem:[%s1 + $0x1c] sm:$0xf]
  %291 = vset.pattern.permute.xlu0 0
  %292 = vperm.xlu0 %291, %v167
  %v293 = vpop.permute.xlu0 %292
  %294 = vset.pattern.permute.xlu0 0
  %295 = vperm.xlu0 %294, %v168
  %v296 = vpop.permute.xlu0 %295
  %297 = vset.pattern.permute.xlu0 0
  %298 = vperm.xlu0 %297, %v169
  %v299 = vpop.permute.xlu0 %298
  %300 = vset.pattern.permute.xlu0 0
  %301 = vperm.xlu0 %300, %v170
  %v302 = vpop.permute.xlu0 %301
  %303 = vset.pattern.permute.xlu0 0
  %304 = vperm.xlu0 %303, %v171
  %v305 = vpop.permute.xlu0 %304
  %306 = vset.pattern.permute.xlu0 0
  %307 = vperm.xlu0 %306, %v172
  %v308 = vpop.permute.xlu0 %307
  %309 = vset.pattern.permute.xlu0 0
  %310 = vperm.xlu0 %309, %v173
  %v311 = vpop.permute.xlu0 %310
  %312 = vset.pattern.permute.xlu0 0
  %313 = vperm.xlu0 %312, %v174
  %v314 = vpop.permute.xlu0 %313
  %315 = vset.pattern.permute.xlu0 0
  %316 = vperm.xlu0 %315, %v175
  %v317 = vpop.permute.xlu0 %316
  %318 = vset.pattern.permute.xlu0 0
  %319 = vperm.xlu0 %318, %v176
  %v320 = vpop.permute.xlu0 %319
  %321 = vset.pattern.permute.xlu0 0
  %322 = vperm.xlu0 %321, %v177
  %v323 = vpop.permute.xlu0 %322
  %324 = vset.pattern.permute.xlu0 0
  %325 = vperm.xlu0 %324, %v178
  %v326 = vpop.permute.xlu0 %325
  %327 = vset.pattern.permute.xlu0 0
  %328 = vperm.xlu0 %327, %v179
  %v329 = vpop.permute.xlu0 %328
  %330 = vset.pattern.permute.xlu0 0
  %331 = vperm.xlu0 %330, %v180
  %v332 = vpop.permute.xlu0 %331
  %333 = vset.pattern.permute.xlu0 0
  %334 = vperm.xlu0 %333, %v181
  %v335 = vpop.permute.xlu0 %334
  %336 = vset.pattern.permute.xlu0 0
  %337 = vperm.xlu0 %336, %v182
  %v338 = vpop.permute.xlu0 %337
  %vm339 = vcmp.eq.s32.totalorder %v293, %v45
  %vm340 = vcmp.eq.s32.totalorder %v296, %v45
  %vm341 = vcmp.eq.s32.totalorder %v299, %v45
  %vm342 = vcmp.eq.s32.totalorder %v302, %v45
  %vm343 = vcmp.eq.s32.totalorder %v305, %v45
  %vm344 = vcmp.eq.s32.totalorder %v308, %v45
  %vm345 = vcmp.eq.s32.totalorder %v311, %v45
  %vm346 = vcmp.eq.s32.totalorder %v314, %v45
  %vm347 = vcmp.eq.s32.totalorder %v317, %v45
  %vm348 = vcmp.eq.s32.totalorder %v320, %v45
  %vm349 = vcmp.eq.s32.totalorder %v323, %v45
  %vm350 = vcmp.eq.s32.totalorder %v326, %v45
  %vm351 = vcmp.eq.s32.totalorder %v329, %v45
  %vm352 = vcmp.eq.s32.totalorder %v332, %v45
  %vm353 = vcmp.eq.s32.totalorder %v335, %v45
  %vm354 = vcmp.eq.s32.totalorder %v338, %v45
  %v355 = vsel %vm339, 1, 0
  %v356 = vsel %vm340, 1, 0
  %v357 = vsel %vm341, 1, 0
  %v358 = vsel %vm342, 1, 0
  %v359 = vsel %vm343, 1, 0
  %v360 = vsel %vm344, 1, 0
  %v361 = vsel %vm345, 1, 0
  %v362 = vsel %vm346, 1, 0
  %v363 = vsel %vm347, 1, 0
  %v364 = vsel %vm348, 1, 0
  %v365 = vsel %vm349, 1, 0
  %v366 = vsel %vm350, 1, 0
  %v367 = vsel %vm351, 1, 0
  %v368 = vsel %vm352, 1, 0
  %v369 = vsel %vm353, 1, 0
  %v370 = vsel %vm354, 1, 0
  %v371 = vcvt.s32.f32 %v355
  %v372 = vcvt.s32.f32 %v356
  %v373 = vcvt.s32.f32 %v357
  %v374 = vcvt.s32.f32 %v358
  %v375 = vcvt.s32.f32 %v359
  %v376 = vcvt.s32.f32 %v360
  %v377 = vcvt.s32.f32 %v361
  %v378 = vcvt.s32.f32 %v362
  %v379 = vcvt.s32.f32 %v363
  %v380 = vcvt.s32.f32 %v364
  %v381 = vcvt.s32.f32 %v365
  %v382 = vcvt.s32.f32 %v366
  %v383 = vcvt.s32.f32 %v367
  %v384 = vcvt.s32.f32 %v368
  %v385 = vcvt.s32.f32 %v369
  %v386 = vcvt.s32.f32 %v370
  %v387 = vpack.c.bf16 %v372, %v371
  %v388 = vpack.c.bf16 %v374, %v373
  %v389 = vpack.c.bf16 %v376, %v375
  %v390 = vpack.c.bf16 %v378, %v377
  %v391 = vpack.c.bf16 %v380, %v379
  %v392 = vpack.c.bf16 %v382, %v381
  %v393 = vpack.c.bf16 %v384, %v383
  %v394 = vpack.c.bf16 %v386, %v385
  %v395 = vld [vmem:[%s1 + $0x20] sm:$0xf]
  %v396 = vld [vmem:[%s1 + $0x24] sm:$0xf]
  %v399 = vunpack.c.l.b16 %v395
  %v400 = vunpack.c.l.b16 %v396
  %v401 = vpack.c.b16 %v400, %v399
  %vm403 = vcmask 130048
  %v405 = vsel %vm403, %v387, 0
  %v408 = vsel %vm403, %v388, 0
  %v411 = vsel %vm403, %v389, 0
  %v414 = vsel %vm403, %v390, 0
  %v417 = vsel %vm403, %v391, 0
  %v420 = vsel %vm403, %v392, 0
  %v423 = vsel %vm403, %v393, 0
  %v426 = vsel %vm403, %v394, 0
  %428 = vmatpush.bf16.msra.mxu0 0
  %429 = vmatpush.bf16.msra.mxu0 0
  %430 = vmatpush.bf16.msra.mxu0 0
  %431 = vmatpush.bf16.msra.mxu0 0
  %432 = vmatpush.bf16.msra.mxu0 0
  %433 = vmatpush.bf16.msra.mxu0 0
  %434 = vmatpush.bf16.msra.mxu0 0
  %435 = vmatpush.bf16.msra.mxu0 %v401
  %436 = vmatmul.bf16.gmra.mxu0 %v405
  %v437 = vpop.f32.mrf.mxu0
  %v438 = vadd.f32 0.0, %v437
  %v439 = vpop.f32.mrf.mxu0
  %v440 = vadd.f32 0.0, %v439
  %441 = vmatmul.bf16.gmra.mxu0 %v408
  %v442 = vpop.f32.mrf.mxu0
  %v443 = vadd.f32 0.0, %v442
  %v444 = vpop.f32.mrf.mxu0
  %v445 = vadd.f32 0.0, %v444
  %446 = vmatmul.bf16.gmra.mxu0 %v411
  %v447 = vpop.f32.mrf.mxu0
  %v448 = vadd.f32 0.0, %v447
  %v449 = vpop.f32.mrf.mxu0
  %v450 = vadd.f32 0.0, %v449
  %451 = vmatmul.bf16.gmra.mxu0 %v414
  %v452 = vpop.f32.mrf.mxu0
  %v453 = vadd.f32 0.0, %v452
  %v454 = vpop.f32.mrf.mxu0
  %v455 = vadd.f32 0.0, %v454
  %456 = vmatmul.bf16.gmra.mxu0 %v417
  %v457 = vpop.f32.mrf.mxu0
  %v458 = vadd.f32 0.0, %v457
  %v459 = vpop.f32.mrf.mxu0
  %v460 = vadd.f32 0.0, %v459
  %461 = vmatmul.bf16.gmra.mxu0 %v420
  %v462 = vpop.f32.mrf.mxu0
  %v463 = vadd.f32 0.0, %v462
  %v464 = vpop.f32.mrf.mxu0
  %v465 = vadd.f32 0.0, %v464
  %466 = vmatmul.bf16.gmra.mxu0 %v423
  %v467 = vpop.f32.mrf.mxu0
  %v468 = vadd.f32 0.0, %v467
  %v469 = vpop.f32.mrf.mxu0
  %v470 = vadd.f32 0.0, %v469
  %471 = vmatmul.bf16.gmra.mxu0 %v426
  %v472 = vpop.f32.mrf.mxu0
  %v473 = vadd.f32 0.0, %v472
  %v474 = vpop.f32.mrf.mxu0
  %v475 = vadd.f32 0.0, %v474
  %476 = vdwg.mxu0
  %v481 = vunpack.c.l.b16 %v287
  %v482 = vunpack.c.l.b16 %v288
  %v483 = vunpack.c.l.b16 %v289
  %v484 = vunpack.c.l.b16 %v290
  %v485 = vpack.c.b16 %v482, %v481
  %v486 = vpack.c.b16 %v484, %v483
  %v490 = vsel %vm97, %v279, 0
  %v493 = vsel %vm97, %v280, 0
  %v496 = vsel %vm97, %v281, 0
  %v499 = vsel %vm97, %v282, 0
  %v502 = vsel %vm97, %v283, 0
  %v505 = vsel %vm97, %v284, 0
  %v508 = vsel %vm97, %v285, 0
  %v511 = vsel %vm97, %v286, 0
  %513 = vmatpush.bf16.msra.mxu0 0
  %514 = vmatpush.bf16.msra.mxu0 0
  %515 = vmatpush.bf16.msra.mxu0 0
  %516 = vmatpush.bf16.msra.mxu0 0
  %517 = vmatpush.bf16.msra.mxu0 0
  %518 = vmatpush.bf16.msra.mxu0 0
  %519 = vmatpush.bf16.msra.mxu0 %v486
  %520 = vmatpush.bf16.msra.mxu0 %v485
  %521 = vmatmul.bf16.gmra.mxu0 %v490
  %v522 = vpop.f32.mrf.mxu0
  %v523 = vadd.f32 %v438, %v522
  %v524 = vpop.f32.mrf.mxu0
  %v525 = vadd.f32 %v440, %v524
  %526 = vmatmul.bf16.gmra.mxu0 %v493
  %v527 = vpop.f32.mrf.mxu0
  %v528 = vadd.f32 %v443, %v527
  %v529 = vpop.f32.mrf.mxu0
  %v530 = vadd.f32 %v445, %v529
  %531 = vmatmul.bf16.gmra.mxu0 %v496
  %v532 = vpop.f32.mrf.mxu0
  %v533 = vadd.f32 %v448, %v532
  %v534 = vpop.f32.mrf.mxu0
  %v535 = vadd.f32 %v450, %v534
  %536 = vmatmul.bf16.gmra.mxu0 %v499
  %v537 = vpop.f32.mrf.mxu0
  %v538 = vadd.f32 %v453, %v537
  %v539 = vpop.f32.mrf.mxu0
  %v540 = vadd.f32 %v455, %v539
  %541 = vmatmul.bf16.gmra.mxu0 %v502
  %v542 = vpop.f32.mrf.mxu0
  %v543 = vadd.f32 %v458, %v542
  %v544 = vpop.f32.mrf.mxu0
  %v545 = vadd.f32 %v460, %v544
  %546 = vmatmul.bf16.gmra.mxu0 %v505
  %v547 = vpop.f32.mrf.mxu0
  %v548 = vadd.f32 %v463, %v547
  %v549 = vpop.f32.mrf.mxu0
  %v550 = vadd.f32 %v465, %v549
  %551 = vmatmul.bf16.gmra.mxu0 %v508
  %v552 = vpop.f32.mrf.mxu0
  %v553 = vadd.f32 %v468, %v552
  %v554 = vpop.f32.mrf.mxu0
  %v555 = vadd.f32 %v470, %v554
  %556 = vmatmul.bf16.gmra.mxu0 %v511
  %v557 = vpop.f32.mrf.mxu0
  %v558 = vadd.f32 %v473, %v557
  %v559 = vpop.f32.mrf.mxu0
  %v560 = vadd.f32 %v475, %v559
  %561 = vdwg.mxu0
  %s562 = scalar_lea.vmem %s3, 24
  %v563 = vld [vmem:[%s562] sm:$0xff]
  %vm564 = vcmp.ge.s32.totalorder %v45, 0
  %vm565 = vcmp.lt.s32.totalorder %v45, 16
  %vm566 = vmand %vm564, %vm565
  %v567 = vsel %vm566, 1, 0
  %v568 = vcvt.s32.f32 %v567
  %vm569 = vcmp.ge.s32.totalorder %v45, 16
  %vm570 = vcmp.lt.s32.totalorder %v45, 32
  %vm571 = vmand %vm569, %vm570
  %v572 = vsel %vm571, 1, 0
  %v573 = vcvt.s32.f32 %v572
  %v574 = vlaneseq
  %v575 = vshrl.u32 %v574, 7
  %v576 = vadd.s32 %v575, 8
  %v577 = vadd.s32 %v575, 16
  %v578 = vadd.s32 %v575, 24
  %v579 = vand.u32 %v575, 15
  %v580 = vand.u32 %v576, 15
  %v581 = vand.u32 %v577, 15
  %v582 = vand.u32 %v578, 15
  %v583 = vshra.s32 %v579, 3
  %v584 = vshra.s32 %v580, 3
  %v585 = vshra.s32 %v581, 3
  %v586 = vshra.s32 %v582, 3
  %v587 = vand.u32 %v575, 7
  %v588 = vand.u32 %v576, 7
  %v589 = vand.u32 %v577, 7
  %v590 = vand.u32 %v578, 7
  %v591 = vshra.s32 %v45, 3
  %v592 = vand.u32 %v45, 7
  %vm593 = vcmp.ne.s32.totalorder %v591, %v583
  %vm594 = vcmp.ne.s32.totalorder %v591, %v584
  %vm595 = vcmp.ne.s32.totalorder %v591, %v585
  %vm596 = vcmp.ne.s32.totalorder %v591, %v586
  %vm597 = vcmp.gt.s32.totalorder %v592, %v587
  %vm598 = vcmp.gt.s32.totalorder %v592, %v588
  %vm599 = vcmp.gt.s32.totalorder %v592, %v589
  %vm600 = vcmp.gt.s32.totalorder %v592, %v590
  %vm601 = vmor %vm593, %vm597
  %vm602 = vmor %vm594, %vm598
  %vm603 = vmor %vm595, %vm599
  %vm604 = vmor %vm596, %vm600
  %vm605 = vcmp.lt.f32.partialorder %v135, 0.5
  %vm606 = vcmp.lt.f32.partialorder %v136, 0.5
  %v607 = vsel %vm605, 1, 0
  %v608 = vsel %vm606, 1, 0
  %609 = vset.pattern.permute.xlu0 0
  %610 = vperm.xlu0 %609, %v607
  %v611 = vpop.permute.xlu0 %610
  %612 = vset.pattern.permute.xlu0 0
  %613 = vperm.xlu0 %612, %v608
  %v614 = vpop.permute.xlu0 %613
  %vm615 = vcmp.eq.s32.totalorder %v611, 1
  %vm616 = vcmp.eq.s32.totalorder %v614, 1
  %vm617 = vmor %vm601, %vm615
  %vm618 = vmor %vm602, %vm616
  %vm619 = vmor %vm603, %vm615
  %vm620 = vmor %vm604, %vm616
  %v621 = vld [vmem:[%s2] sm:$0xff]
  %v622 = vld [vmem:[%s2 + $0x8] sm:$0xff]
  %v623 = vld [vmem:[%s2 + $0x10] sm:$0xff]
  %v624 = vld [vmem:[%s2 + $0x18] sm:$0xff]
  %v625 = vld [vmem:[%s3] sm:$0xff]
  %v626 = vsel %vm97, %v149, 0.0
  %627 = vadd.xlane.f32.xlu0 %v626
  %v628 = vpop.xlane.xlu0 %627
  %v629 = vsel %vm97, %v150, 0.0
  %630 = vadd.xlane.f32.xlu0 %v629
  %v631 = vpop.xlane.xlu0 %630
  %v632 = vrcp.pop 32.0
  %v633 = vmul.f32 32.0, %v632
  %v634 = vsub.f32 1.0, %v633
  %v635 = vmul.f32 %v632, %v634
  %v636 = vadd.f32 %v632, %v635
  %vm637 = vweird.f32 %v632
  %v638 = vsel %vm637, %v632, %v636
  %v639 = vmul.f32 %v628, %v638
  %v640 = vmul.f32 %v631, %v638
  %v641 = vsub.f32 %v149, %v639
  %v642 = vsub.f32 %v150, %v640
  %v643 = vmul.f32 %v641, %v641
  %v644 = vmul.f32 %v642, %v642
  %v645 = vsel %vm97, %v643, 0.0
  %646 = vadd.xlane.f32.xlu0 %v645
  %v647 = vpop.xlane.xlu0 %646
  %v648 = vsel %vm97, %v644, 0.0
  %649 = vadd.xlane.f32.xlu0 %v648
  %v650 = vpop.xlane.xlu0 %649
  %v651 = vmul.f32 %v647, %v638
  %v652 = vmul.f32 %v650, %v638
  %v653 = vadd.f32 %v651, 1e-08
  %v654 = vadd.f32 %v652, 1e-08
  %v655 = vrsqrt.pop %v653
  %v656 = vmul.f32 %v655, %v653
  %v657 = vmul.f32 %v656, %v655
  %v658 = vmul.f32 0.5, %v657
  %v659 = vsub.f32 1.5, %v658
  %v660 = vmul.f32 %v655, %v659
  %vm661 = vweird.f32 %v653
  %vm662 = vweird.f32 %v655
  %vm663 = vmor %vm661, %vm662
  %v664 = vsel %vm663, %v655, %v660
  %v665 = vrsqrt.pop %v654
  %v666 = vmul.f32 %v665, %v654
  %v667 = vmul.f32 %v666, %v665
  %v668 = vmul.f32 0.5, %v667
  %v669 = vsub.f32 1.5, %v668
  %v670 = vmul.f32 %v665, %v669
  %vm671 = vweird.f32 %v654
  %vm672 = vweird.f32 %v665
  %vm673 = vmor %vm671, %vm672
  %v674 = vsel %vm673, %v665, %v670
  %v675 = vmul.f32 %v641, %v664
  %v676 = vmul.f32 %v642, %v674
  %v677 = vperm.slane %v625, 0
  %v678 = vmul.f32 %v675, %v677
  %v679 = vmul.f32 %v676, %v677
  %681 = vrot.lane.b32.xlu0 %v677, 96
  %v682 = vpop.permute.xlu0 %681
  %v684 = vadd.f32 %v678, %v682
  %v685 = vadd.f32 %v679, %v682
  %v686 = vpack.c.bf16 %v685, %v684
  %v687 = vperm.slane %v625, 2
  %v692 = vunpack.c.l.b16 %v621
  %v693 = vunpack.c.l.b16 %v622
  %v694 = vunpack.c.l.b16 %v623
  %v695 = vunpack.c.l.b16 %v624
  %v696 = vpack.c.b16 %v693, %v692
  %v697 = vpack.c.b16 %v695, %v694
  %v701 = vsel %vm97, %v686, 0
  %703 = vmatpush.bf16.msra.mxu0 0
  %704 = vmatpush.bf16.msra.mxu0 0
  %705 = vmatpush.bf16.msra.mxu0 0
  %706 = vmatpush.bf16.msra.mxu0 0
  %707 = vmatpush.bf16.msra.mxu0 0
  %708 = vmatpush.bf16.msra.mxu0 0
  %709 = vmatpush.bf16.msra.mxu0 %v697
  %710 = vmatpush.bf16.msra.mxu0 %v696
  %711 = vmatmul.bf16.gmra.mxu0 %v701
  %v712 = vpop.f32.mrf.mxu0
  %v713 = vadd.f32 %v687, %v712
  %v714 = vpop.f32.mrf.mxu0
  %v715 = vadd.f32 %v687, %v714
  %716 = vdwg.mxu0
  %v717 = vpack.c.bf16 %v150, %v149
  %v718 = vperm.slane %v625, 3
  %719 = vrot.lane.b32.xlu0 %v696, 96
  %v720 = vpop.permute.xlu0 %719
  %721 = vrot.lane.b32.xlu0 %v697, 96
  %v722 = vpop.permute.xlu0 %721
  %v726 = vsel %vm97, %v717, 0
  %728 = vmatpush.bf16.msra.mxu0 0
  %729 = vmatpush.bf16.msra.mxu0 0
  %730 = vmatpush.bf16.msra.mxu0 0
  %731 = vmatpush.bf16.msra.mxu0 0
  %732 = vmatpush.bf16.msra.mxu0 0
  %733 = vmatpush.bf16.msra.mxu0 0
  %734 = vmatpush.bf16.msra.mxu0 %v722
  %735 = vmatpush.bf16.msra.mxu0 %v720
  %736 = vmatmul.bf16.gmra.mxu0 %v726
  %v737 = vpop.f32.mrf.mxu0
  %v738 = vadd.f32 %v718, %v737
  %v739 = vpop.f32.mrf.mxu0
  %v740 = vadd.f32 %v718, %v739
  %741 = vdwg.mxu0
  %v742 = vadd.f32 %v738, %v563
  %v743 = vadd.f32 %v740, %v563
  %v744 = vmul.f32 %v713, %v568
  %v745 = vmul.f32 %v715, %v568
  %v746 = vmul.f32 %v713, %v573
  %v747 = vmul.f32 %v715, %v573
  %v748 = vpack.c.bf16 %v745, %v744
  %v749 = vpack.c.bf16 %v747, %v746
  %v750 = vpack.c.bf16 %v743, %v742
  %v755 = vrot.slane %v744, 1
  %v756 = vrot.slane %v744, 2
  %v757 = vrot.slane %v744, 3
  %v758 = vrot.slane %v744, 4
  %v759 = vrot.slane %v744, 5
  %v760 = vrot.slane %v744, 6
  %v761 = vrot.slane %v744, 7
  %v762 = vrot.slane %v745, 1
  %v763 = vrot.slane %v745, 2
  %v764 = vrot.slane %v745, 3
  %v765 = vrot.slane %v745, 4
  %v766 = vrot.slane %v745, 5
  %v767 = vrot.slane %v745, 6
  %v768 = vrot.slane %v745, 7
  %v769 = vrot.slane %v746, 1
  %v770 = vrot.slane %v746, 2
  %v771 = vrot.slane %v746, 3
  %v772 = vrot.slane %v746, 4
  %v773 = vrot.slane %v746, 5
  %v774 = vrot.slane %v746, 6
  %v775 = vrot.slane %v746, 7
  %v776 = vrot.slane %v747, 1
  %v777 = vrot.slane %v747, 2
  %v778 = vrot.slane %v747, 3
  %v779 = vrot.slane %v747, 4
  %v780 = vrot.slane %v747, 5
  %v781 = vrot.slane %v747, 6
  %v782 = vrot.slane %v747, 7
  %v783 = vperm.slane %v744, 0
  %v784 = vperm.slane %v755, 0
  %v785 = vperm.slane %v756, 0
  %v786 = vperm.slane %v757, 0
  %v787 = vperm.slane %v758, 0
  %v788 = vperm.slane %v759, 0
  %v789 = vperm.slane %v760, 0
  %v790 = vperm.slane %v761, 0
  %v791 = vperm.slane %v745, 0
  %v792 = vperm.slane %v762, 0
  %v793 = vperm.slane %v763, 0
  %v794 = vperm.slane %v764, 0
  %v795 = vperm.slane %v765, 0
  %v796 = vperm.slane %v766, 0
  %v797 = vperm.slane %v767, 0
  %v798 = vperm.slane %v768, 0
  %v799 = vperm.slane %v746, 0
  %v800 = vperm.slane %v769, 0
  %v801 = vperm.slane %v770, 0
  %v802 = vperm.slane %v771, 0
  %v803 = vperm.slane %v772, 0
  %v804 = vperm.slane %v773, 0
  %v805 = vperm.slane %v774, 0
  %v806 = vperm.slane %v775, 0
  %v807 = vperm.slane %v747, 0
  %v808 = vperm.slane %v776, 0
  %v809 = vperm.slane %v777, 0
  %v810 = vperm.slane %v778, 0
  %v811 = vperm.slane %v779, 0
  %v812 = vperm.slane %v780, 0
  %v813 = vperm.slane %v781, 0
  %v814 = vperm.slane %v782, 0
  %v847 = vmul.f32 %v523, %v783
  %v848 = vmul.f32 %v525, %v784
  %v849 = vmul.f32 %v528, %v785
  %v850 = vmul.f32 %v530, %v786
  %v851 = vmul.f32 %v533, %v787
  %v852 = vmul.f32 %v535, %v788
  %v853 = vmul.f32 %v538, %v789
  %v854 = vmul.f32 %v540, %v790
  %v855 = vmul.f32 %v543, %v791
  %v856 = vmul.f32 %v545, %v792
  %v857 = vmul.f32 %v548, %v793
  %v858 = vmul.f32 %v550, %v794
  %v859 = vmul.f32 %v553, %v795
  %v860 = vmul.f32 %v555, %v796
  %v861 = vmul.f32 %v558, %v797
  %v862 = vmul.f32 %v560, %v798
  %v863 = vmul.f32 %v523, %v799
  %v864 = vmul.f32 %v525, %v800
  %v865 = vmul.f32 %v528, %v801
  %v866 = vmul.f32 %v530, %v802
  %v867 = vmul.f32 %v533, %v803
  %v868 = vmul.f32 %v535, %v804
  %v869 = vmul.f32 %v538, %v805
  %v870 = vmul.f32 %v540, %v806
  %v871 = vmul.f32 %v543, %v807
  %v872 = vmul.f32 %v545, %v808
  %v873 = vmul.f32 %v548, %v809
  %v874 = vmul.f32 %v550, %v810
  %v875 = vmul.f32 %v553, %v811
  %v876 = vmul.f32 %v555, %v812
  %v877 = vmul.f32 %v558, %v813
  %v878 = vmul.f32 %v560, %v814
  %v879 = vsel %vm97, %v847, 0.0
  %880 = vadd.xlane.f32.xlu0 %v879
  %v881 = vpop.xlane.xlu0 %880
  %v882 = vsel %vm97, %v848, 0.0
  %883 = vadd.xlane.f32.xlu0 %v882
  %v884 = vpop.xlane.xlu0 %883
  %v885 = vsel %vm97, %v849, 0.0
  %886 = vadd.xlane.f32.xlu0 %v885
  %v887 = vpop.xlane.xlu0 %886
  %v888 = vsel %vm97, %v850, 0.0
  %889 = vadd.xlane.f32.xlu0 %v888
  %v890 = vpop.xlane.xlu0 %889
  %v891 = vsel %vm97, %v851, 0.0
  %892 = vadd.xlane.f32.xlu0 %v891
  %v893 = vpop.xlane.xlu0 %892
  %v894 = vsel %vm97, %v852, 0.0
  %895 = vadd.xlane.f32.xlu0 %v894
  %v896 = vpop.xlane.xlu0 %895
  %v897 = vsel %vm97, %v853, 0.0
  %898 = vadd.xlane.f32.xlu0 %v897
  %v899 = vpop.xlane.xlu0 %898
  %v900 = vsel %vm97, %v854, 0.0
  %901 = vadd.xlane.f32.xlu0 %v900
  %v902 = vpop.xlane.xlu0 %901
  %v903 = vsel %vm97, %v855, 0.0
  %904 = vadd.xlane.f32.xlu0 %v903
  %v905 = vpop.xlane.xlu0 %904
  %v906 = vsel %vm97, %v856, 0.0
  %907 = vadd.xlane.f32.xlu0 %v906
  %v908 = vpop.xlane.xlu0 %907
  %v909 = vsel %vm97, %v857, 0.0
  %910 = vadd.xlane.f32.xlu0 %v909
  %v911 = vpop.xlane.xlu0 %910
  %v912 = vsel %vm97, %v858, 0.0
  %913 = vadd.xlane.f32.xlu0 %v912
  %v914 = vpop.xlane.xlu0 %913
  %v915 = vsel %vm97, %v859, 0.0
  %916 = vadd.xlane.f32.xlu0 %v915
  %v917 = vpop.xlane.xlu0 %916
  %v918 = vsel %vm97, %v860, 0.0
  %919 = vadd.xlane.f32.xlu0 %v918
  %v920 = vpop.xlane.xlu0 %919
  %v921 = vsel %vm97, %v861, 0.0
  %922 = vadd.xlane.f32.xlu0 %v921
  %v923 = vpop.xlane.xlu0 %922
  %v924 = vsel %vm97, %v862, 0.0
  %925 = vadd.xlane.f32.xlu0 %v924
  %v926 = vpop.xlane.xlu0 %925
  %v927 = vsel %vm97, %v863, 0.0
  %928 = vadd.xlane.f32.xlu0 %v927
  %v929 = vpop.xlane.xlu0 %928
  %v930 = vsel %vm97, %v864, 0.0
  %931 = vadd.xlane.f32.xlu0 %v930
  %v932 = vpop.xlane.xlu0 %931
  %v933 = vsel %vm97, %v865, 0.0
  %934 = vadd.xlane.f32.xlu0 %v933
  %v935 = vpop.xlane.xlu0 %934
  %v936 = vsel %vm97, %v866, 0.0
  %937 = vadd.xlane.f32.xlu0 %v936
  %v938 = vpop.xlane.xlu0 %937
  %v939 = vsel %vm97, %v867, 0.0
  %940 = vadd.xlane.f32.xlu0 %v939
  %v941 = vpop.xlane.xlu0 %940
  %v942 = vsel %vm97, %v868, 0.0
  %943 = vadd.xlane.f32.xlu0 %v942
  %v944 = vpop.xlane.xlu0 %943
  %v945 = vsel %vm97, %v869, 0.0
  %946 = vadd.xlane.f32.xlu0 %v945
  %v947 = vpop.xlane.xlu0 %946
  %v948 = vsel %vm97, %v870, 0.0
  %949 = vadd.xlane.f32.xlu0 %v948
  %v950 = vpop.xlane.xlu0 %949
  %v951 = vsel %vm97, %v871, 0.0
  %952 = vadd.xlane.f32.xlu0 %v951
  %v953 = vpop.xlane.xlu0 %952
  %v954 = vsel %vm97, %v872, 0.0
  %955 = vadd.xlane.f32.xlu0 %v954
  %v956 = vpop.xlane.xlu0 %955
  %v957 = vsel %vm97, %v873, 0.0
  %958 = vadd.xlane.f32.xlu0 %v957
  %v959 = vpop.xlane.xlu0 %958
  %v960 = vsel %vm97, %v874, 0.0
  %961 = vadd.xlane.f32.xlu0 %v960
  %v962 = vpop.xlane.xlu0 %961
  %v963 = vsel %vm97, %v875, 0.0
  %964 = vadd.xlane.f32.xlu0 %v963
  %v965 = vpop.xlane.xlu0 %964
  %v966 = vsel %vm97, %v876, 0.0
  %967 = vadd.xlane.f32.xlu0 %v966
  %v968 = vpop.xlane.xlu0 %967
  %v969 = vsel %vm97, %v877, 0.0
  %970 = vadd.xlane.f32.xlu0 %v969
  %v971 = vpop.xlane.xlu0 %970
  %v972 = vsel %vm97, %v878, 0.0
  %973 = vadd.xlane.f32.xlu0 %v972
  %v974 = vpop.xlane.xlu0 %973
  %v1007 = vperm.slane %v881, %v45
  %v1008 = vperm.slane %v884, %v45
  %v1009 = vperm.slane %v887, %v45
  %v1010 = vperm.slane %v890, %v45
  %v1011 = vperm.slane %v893, %v45
  %v1012 = vperm.slane %v896, %v45
  %v1013 = vperm.slane %v899, %v45
  %v1014 = vperm.slane %v902, %v45
  %v1015 = vperm.slane %v905, %v45
  %v1016 = vperm.slane %v908, %v45
  %v1017 = vperm.slane %v911, %v45
  %v1018 = vperm.slane %v914, %v45
  %v1019 = vperm.slane %v917, %v45
  %v1020 = vperm.slane %v920, %v45
  %v1021 = vperm.slane %v923, %v45
  %v1022 = vperm.slane %v926, %v45
  %v1023 = vperm.slane %v929, %v45
  %v1024 = vperm.slane %v932, %v45
  %v1025 = vperm.slane %v935, %v45
  %v1026 = vperm.slane %v938, %v45
  %v1027 = vperm.slane %v941, %v45
  %v1028 = vperm.slane %v944, %v45
  %v1029 = vperm.slane %v947, %v45
  %v1030 = vperm.slane %v950, %v45
  %v1031 = vperm.slane %v953, %v45
  %v1032 = vperm.slane %v956, %v45
  %v1033 = vperm.slane %v959, %v45
  %v1034 = vperm.slane %v962, %v45
  %v1035 = vperm.slane %v965, %v45
  %v1036 = vperm.slane %v968, %v45
  %v1037 = vperm.slane %v971, %v45
  %v1038 = vperm.slane %v974, %v45
  %vm1039 = vcmask 1041409
  %v1040 = vsel %vm1039, %v1008, %v1007
  %vm1041 = vcmask 1042434
  %v1042 = vsel %vm1041, %v1009, %v1040
  %vm1043 = vcmask 1043459
  %v1044 = vsel %vm1043, %v1010, %v1042
  %vm1045 = vcmask 1044484
  %v1046 = vsel %vm1045, %v1011, %v1044
  %vm1047 = vcmask 1045509
  %v1048 = vsel %vm1047, %v1012, %v1046
  %vm1049 = vcmask 1046534
  %v1050 = vsel %vm1049, %v1013, %v1048
  %vm1051 = vcmask 1047559
  %v1052 = vsel %vm1051, %v1014, %v1050
  %v1053 = vsel %vm1039, %v1016, %v1015
  %v1054 = vsel %vm1041, %v1017, %v1053
  %v1055 = vsel %vm1043, %v1018, %v1054
  %v1056 = vsel %vm1045, %v1019, %v1055
  %v1057 = vsel %vm1047, %v1020, %v1056
  %v1058 = vsel %vm1049, %v1021, %v1057
  %v1059 = vsel %vm1051, %v1022, %v1058
  %v1060 = vsel %vm1039, %v1024, %v1023
  %v1061 = vsel %vm1041, %v1025, %v1060
  %v1062 = vsel %vm1043, %v1026, %v1061
  %v1063 = vsel %vm1045, %v1027, %v1062
  %v1064 = vsel %vm1047, %v1028, %v1063
  %v1065 = vsel %vm1049, %v1029, %v1064
  %v1066 = vsel %vm1051, %v1030, %v1065
  %v1067 = vsel %vm1039, %v1032, %v1031
  %v1068 = vsel %vm1041, %v1033, %v1067
  %v1069 = vsel %vm1043, %v1034, %v1068
  %v1070 = vsel %vm1045, %v1035, %v1069
  %v1071 = vsel %vm1047, %v1036, %v1070
  %v1072 = vsel %vm1049, %v1037, %v1071
  %v1073 = vsel %vm1051, %v1038, %v1072
  %v1078 = vadd.s32 %v45, 4294967288
  %v1079 = vperm.slane %v881, %v1078
  %v1080 = vperm.slane %v884, %v1078
  %v1081 = vperm.slane %v887, %v1078
  %v1082 = vperm.slane %v890, %v1078
  %v1083 = vperm.slane %v893, %v1078
  %v1084 = vperm.slane %v896, %v1078
  %v1085 = vperm.slane %v899, %v1078
  %v1086 = vperm.slane %v902, %v1078
  %v1087 = vperm.slane %v905, %v1078
  %v1088 = vperm.slane %v908, %v1078
  %v1089 = vperm.slane %v911, %v1078
  %v1090 = vperm.slane %v914, %v1078
  %v1091 = vperm.slane %v917, %v1078
  %v1092 = vperm.slane %v920, %v1078
  %v1093 = vperm.slane %v923, %v1078
  %v1094 = vperm.slane %v926, %v1078
  %v1095 = vperm.slane %v929, %v1078
  %v1096 = vperm.slane %v932, %v1078
  %v1097 = vperm.slane %v935, %v1078
  %v1098 = vperm.slane %v938, %v1078
  %v1099 = vperm.slane %v941, %v1078
  %v1100 = vperm.slane %v944, %v1078
  %v1101 = vperm.slane %v947, %v1078
  %v1102 = vperm.slane %v950, %v1078
  %v1103 = vperm.slane %v953, %v1078
  %v1104 = vperm.slane %v956, %v1078
  %v1105 = vperm.slane %v959, %v1078
  %v1106 = vperm.slane %v962, %v1078
  %v1107 = vperm.slane %v965, %v1078
  %v1108 = vperm.slane %v968, %v1078
  %v1109 = vperm.slane %v971, %v1078
  %v1110 = vperm.slane %v974, %v1078
  %v1111 = vsel %vm1039, %v1080, %v1079
  %v1112 = vsel %vm1041, %v1081, %v1111
  %v1113 = vsel %vm1043, %v1082, %v1112
  %v1114 = vsel %vm1045, %v1083, %v1113
  %v1115 = vsel %vm1047, %v1084, %v1114
  %v1116 = vsel %vm1049, %v1085, %v1115
  %v1117 = vsel %vm1051, %v1086, %v1116
  %v1118 = vsel %vm1039, %v1088, %v1087
  %v1119 = vsel %vm1041, %v1089, %v1118
  %v1120 = vsel %vm1043, %v1090, %v1119
  %v1121 = vsel %vm1045, %v1091, %v1120
  %v1122 = vsel %vm1047, %v1092, %v1121
  %v1123 = vsel %vm1049, %v1093, %v1122
  %v1124 = vsel %vm1051, %v1094, %v1123
  %v1125 = vsel %vm1039, %v1096, %v1095
  %v1126 = vsel %vm1041, %v1097, %v1125
  %v1127 = vsel %vm1043, %v1098, %v1126
  %v1128 = vsel %vm1045, %v1099, %v1127
  %v1129 = vsel %vm1047, %v1100, %v1128
  %v1130 = vsel %vm1049, %v1101, %v1129
  %v1131 = vsel %vm1051, %v1102, %v1130
  %v1132 = vsel %vm1039, %v1104, %v1103
  %v1133 = vsel %vm1041, %v1105, %v1132
  %v1134 = vsel %vm1043, %v1106, %v1133
  %v1135 = vsel %vm1045, %v1107, %v1134
  %v1136 = vsel %vm1047, %v1108, %v1135
  %v1137 = vsel %vm1049, %v1109, %v1136
  %v1138 = vsel %vm1051, %v1110, %v1137
  %vm1143 = vcmask 64512
  %v1144 = vsel %vm1143, %v1052, %v1117
  %v1145 = vsel %vm1143, %v1059, %v1124
  %v1146 = vsel %vm1143, %v1066, %v1131
  %v1147 = vsel %vm1143, %v1073, %v1138
  %v1149 = vsel %vm97, %v748, 0
  %v1152 = vsel %vm97, %v749, 0
  %v1155 = vsel %vm97, %v750, 0
  %1157 = vmatpush.bf16.xpose.msra.mxu0 0
  %1158 = vmatpush.bf16.xpose.msra.mxu0 0
  %1159 = vmatpush.bf16.xpose.msra.mxu0 0
  %1160 = vmatpush.bf16.xpose.msra.mxu0 0
  %1161 = vmatpush.bf16.xpose.msra.mxu0 0
  %1162 = vmatpush.bf16.xpose.msra.mxu0 0
  %1163 = vmatpush.bf16.xpose.msra.mxu0 0
  %1164 = vmatpush.bf16.xpose.msra.mxu0 %v1155
  %1165 = vmatmul.bf16.gmra.mxu0 %v1149
  %v1166 = vpop.f32.mrf.mxu0
  %v1167 = vadd.f32 %v1144, %v1166
  %v1168 = vpop.f32.mrf.mxu0
  %v1169 = vadd.f32 %v1145, %v1168
  %1170 = vmatmul.bf16.gmra.mxu0 %v1152
  %v1171 = vpop.f32.mrf.mxu0
  %v1172 = vadd.f32 %v1146, %v1171
  %v1173 = vpop.f32.mrf.mxu0
  %v1174 = vadd.f32 %v1147, %v1173
  %1175 = vdwg.mxu0
  %v1176 = vmul.f32 %v1167, 0.25
  %v1177 = vmul.f32 %v1169, 0.25
  %v1178 = vmul.f32 %v1172, 0.25
  %v1179 = vmul.f32 %v1174, 0.25
  %v1180 = vsel %vm617, -4.2949673e+09, %v1176
  %v1181 = vsel %vm618, -4.2949673e+09, %v1177
  %v1182 = vsel %vm619, -4.2949673e+09, %v1178
  %v1183 = vsel %vm620, -4.2949673e+09, %v1179
  %v1184 = vsel %vm403, %v1180, -inf
  %1185 = vmax.xlane.f32.xlu0 %v1184
  %v1186 = vpop.xlane.xlu0 %1185
  %v1187 = vsel %vm403, %v1181, -inf
  %1188 = vmax.xlane.f32.xlu0 %v1187
  %v1189 = vpop.xlane.xlu0 %1188
  %v1190 = vsel %vm403, %v1182, -inf
  %1191 = vmax.xlane.f32.xlu0 %v1190
  %v1192 = vpop.xlane.xlu0 %1191
  %v1193 = vsel %vm403, %v1183, -inf
  %1194 = vmax.xlane.f32.xlu0 %v1193
  %v1195 = vpop.xlane.xlu0 %1194
  %v1196 = vsub.f32 %v1180, %v1186
  %v1197 = vsub.f32 %v1181, %v1189
  %v1198 = vsub.f32 %v1182, %v1192
  %v1199 = vsub.f32 %v1183, %v1195
  %v1200 = vmul.f32 %v1196, 1.442695
  %v1201 = vpow.pop %v1200
  %v1202 = vmul.f32 %v1197, 1.442695
  %v1203 = vpow.pop %v1202
  %v1204 = vmul.f32 %v1198, 1.442695
  %v1205 = vpow.pop %v1204
  %v1206 = vmul.f32 %v1199, 1.442695
  %v1207 = vpow.pop %v1206
  %v1208 = vsel %vm403, %v1201, 0.0
  %1209 = vadd.xlane.f32.xlu0 %v1208
  %v1210 = vpop.xlane.xlu0 %1209
  %v1211 = vsel %vm403, %v1203, 0.0
  %1212 = vadd.xlane.f32.xlu0 %v1211
  %v1213 = vpop.xlane.xlu0 %1212
  %v1214 = vsel %vm403, %v1205, 0.0
  %1215 = vadd.xlane.f32.xlu0 %v1214
  %v1216 = vpop.xlane.xlu0 %1215
  %v1217 = vsel %vm403, %v1207, 0.0
  %1218 = vadd.xlane.f32.xlu0 %v1217
  %v1219 = vpop.xlane.xlu0 %1218
  %v1220 = vrcp.pop %v1210
  %v1221 = vmul.f32 %v1210, %v1220
  %v1222 = vsub.f32 1.0, %v1221
  %v1223 = vmul.f32 %v1220, %v1222
  %v1224 = vadd.f32 %v1220, %v1223
  %vm1225 = vweird.f32 %v1210
  %vm1226 = vweird.f32 %v1220
  %vm1227 = vmor %vm1225, %vm1226
  %v1228 = vsel %vm1227, %v1220, %v1224
  %v1229 = vand.u32 2147483647, %v1210
  %vm1230 = vcmp.eq.f32.partialorder %v1229, 8.507059e+37
  %v1231 = vand.u32 %v1210, 2147483648
  %v1232 = vor.u32 1.1754944e-38, %v1231
  %v1233 = vsel %vm1230, %v1232, %v1228
  %v1234 = vmul.f32 %v1201, %v1233
  %v1235 = vrcp.pop %v1213
  %v1236 = vmul.f32 %v1213, %v1235
  %v1237 = vsub.f32 1.0, %v1236
  %v1238 = vmul.f32 %v1235, %v1237
  %v1239 = vadd.f32 %v1235, %v1238
  %vm1240 = vweird.f32 %v1213
  %vm1241 = vweird.f32 %v1235
  %vm1242 = vmor %vm1240, %vm1241
  %v1243 = vsel %vm1242, %v1235, %v1239
  %v1244 = vand.u32 2147483647, %v1213
  %vm1245 = vcmp.eq.f32.partialorder %v1244, 8.507059e+37
  %v1246 = vand.u32 %v1213, 2147483648
  %v1247 = vor.u32 1.1754944e-38, %v1246
  %v1248 = vsel %vm1245, %v1247, %v1243
  %v1249 = vmul.f32 %v1203, %v1248
  %v1250 = vrcp.pop %v1216
  %v1251 = vmul.f32 %v1216, %v1250
  %v1252 = vsub.f32 1.0, %v1251
  %v1253 = vmul.f32 %v1250, %v1252
  %v1254 = vadd.f32 %v1250, %v1253
  %vm1255 = vweird.f32 %v1216
  %vm1256 = vweird.f32 %v1250
  %vm1257 = vmor %vm1255, %vm1256
  %v1258 = vsel %vm1257, %v1250, %v1254
  %v1259 = vand.u32 2147483647, %v1216
  %vm1260 = vcmp.eq.f32.partialorder %v1259, 8.507059e+37
  %v1261 = vand.u32 %v1216, 2147483648
  %v1262 = vor.u32 1.1754944e-38, %v1261
  %v1263 = vsel %vm1260, %v1262, %v1258
  %v1264 = vmul.f32 %v1205, %v1263
  %v1265 = vrcp.pop %v1219
  %v1266 = vmul.f32 %v1219, %v1265
  %v1267 = vsub.f32 1.0, %v1266
  %v1268 = vmul.f32 %v1265, %v1267
  %v1269 = vadd.f32 %v1265, %v1268
  %vm1270 = vweird.f32 %v1219
  %vm1271 = vweird.f32 %v1265
  %vm1272 = vmor %vm1270, %vm1271
  %v1273 = vsel %vm1272, %v1265, %v1269
  %v1274 = vand.u32 2147483647, %v1219
  %vm1275 = vcmp.eq.f32.partialorder %v1274, 8.507059e+37
  %v1276 = vand.u32 %v1219, 2147483648
  %v1277 = vor.u32 1.1754944e-38, %v1276
  %v1278 = vsel %vm1275, %v1277, %v1273
  %v1279 = vmul.f32 %v1207, %v1278
  %1281 = vrot.lane.b32.xlu0 %v568, 32
  %v1282 = vpop.permute.xlu0 %1281
  %v1284 = vmul.f32 %v742, %v1282
  %v1285 = vmul.f32 %v743, %v1282
  %v1286 = vpack.c.bf16 %v1249, %v1234
  %v1287 = vpack.c.bf16 %v1285, %v1284
  %1289 = vrot.lane.b32.xlu0 %v573, 32
  %v1290 = vpop.permute.xlu0 %1289
  %v1292 = vmul.f32 %v742, %v1290
  %v1293 = vmul.f32 %v743, %v1290
  %v1294 = vpack.c.bf16 %v1279, %v1264
  %v1295 = vpack.c.bf16 %v1293, %v1292
  %1297 = vrot.lane.b32.xlu0 %v1295, 96
  %v1298 = vpop.permute.xlu0 %1297
  %v1301 = vsel %vm403, %v1294, 0
  %1303 = vmatpush.bf16.msra.mxu0 0
  %1304 = vmatpush.bf16.msra.mxu0 0
  %1305 = vmatpush.bf16.msra.mxu0 0
  %1306 = vmatpush.bf16.msra.mxu0 0
  %1307 = vmatpush.bf16.msra.mxu0 0
  %1308 = vmatpush.bf16.msra.mxu0 0
  %1309 = vmatpush.bf16.msra.mxu0 0
  %1310 = vmatpush.bf16.msra.mxu0 %v1298
  %1311 = vmatmul.bf16.gmra.mxu0 %v1301
  %v1312 = vpop.f32.mrf.mxu0
  %v1313 = vadd.f32 0.0, %v1312
  %v1314 = vpop.f32.mrf.mxu0
  %v1315 = vadd.f32 0.0, %v1314
  %1316 = vdwg.mxu0
  %1318 = vrot.lane.b32.xlu0 %v1287, 96
  %v1319 = vpop.permute.xlu0 %1318
  %v1322 = vsel %vm403, %v1286, 0
  %1324 = vmatpush.bf16.msra.mxu0 0
  %1325 = vmatpush.bf16.msra.mxu0 0
  %1326 = vmatpush.bf16.msra.mxu0 0
  %1327 = vmatpush.bf16.msra.mxu0 0
  %1328 = vmatpush.bf16.msra.mxu0 0
  %1329 = vmatpush.bf16.msra.mxu0 0
  %1330 = vmatpush.bf16.msra.mxu0 0
  %1331 = vmatpush.bf16.msra.mxu0 %v1319
  %1332 = vmatmul.bf16.gmra.mxu0 %v1322
  %v1333 = vpop.f32.mrf.mxu0
  %v1334 = vadd.f32 %v1313, %v1333
  %v1335 = vpop.f32.mrf.mxu0
  %v1336 = vadd.f32 %v1315, %v1335
  %1337 = vdwg.mxu0
  %v1338 = vperm.slane %v1234, 0
  %v1339 = vlaneseq
  %v1340 = vshrl.u32 %v1339, 7
  %1342 = vset.pattern.permute.xlu0 %v1340
  %1343 = vperm.xlu0 %1342, %v1338
  %v1344 = vpop.permute.xlu0 %1343
  %v1345 = vlaneseq
  %v1346 = vshrl.u32 %v1345, 7
  %v1347 = vadd.s32 %v1346, 8
  %1348 = vset.pattern.permute.xlu0 %v1347
  %1349 = vperm.xlu0 %1348, %v1338
  %v1350 = vpop.permute.xlu0 %1349
  %v1351 = vperm.slane %v1234, 1
  %v1352 = vlaneseq
  %v1353 = vshrl.u32 %v1352, 7
  %1355 = vset.pattern.permute.xlu0 %v1353
  %1356 = vperm.xlu0 %1355, %v1351
  %v1357 = vpop.permute.xlu0 %1356
  %v1358 = vlaneseq
  %v1359 = vshrl.u32 %v1358, 7
  %v1360 = vadd.s32 %v1359, 8
  %1361 = vset.pattern.permute.xlu0 %v1360
  %1362 = vperm.xlu0 %1361, %v1351
  %v1363 = vpop.permute.xlu0 %1362
  %v1364 = vperm.slane %v1234, 2
  %v1365 = vlaneseq
  %v1366 = vshrl.u32 %v1365, 7
  %1368 = vset.pattern.permute.xlu0 %v1366
  %1369 = vperm.xlu0 %1368, %v1364
  %v1370 = vpop.permute.xlu0 %1369
  %v1371 = vlaneseq
  %v1372 = vshrl.u32 %v1371, 7
  %v1373 = vadd.s32 %v1372, 8
  %1374 = vset.pattern.permute.xlu0 %v1373
  %1375 = vperm.xlu0 %1374, %v1364
  %v1376 = vpop.permute.xlu0 %1375
  %v1377 = vperm.slane %v1234, 3
  %v1378 = vlaneseq
  %v1379 = vshrl.u32 %v1378, 7
  %1381 = vset.pattern.permute.xlu0 %v1379
  %1382 = vperm.xlu0 %1381, %v1377
  %v1383 = vpop.permute.xlu0 %1382
  %v1384 = vlaneseq
  %v1385 = vshrl.u32 %v1384, 7
  %v1386 = vadd.s32 %v1385, 8
  %1387 = vset.pattern.permute.xlu0 %v1386
  %1388 = vperm.xlu0 %1387, %v1377
  %v1389 = vpop.permute.xlu0 %1388
  %v1390 = vperm.slane %v1234, 4
  %v1391 = vlaneseq
  %v1392 = vshrl.u32 %v1391, 7
  %1394 = vset.pattern.permute.xlu0 %v1392
  %1395 = vperm.xlu0 %1394, %v1390
  %v1396 = vpop.permute.xlu0 %1395
  %v1397 = vlaneseq
  %v1398 = vshrl.u32 %v1397, 7
  %v1399 = vadd.s32 %v1398, 8
  %1400 = vset.pattern.permute.xlu0 %v1399
  %1401 = vperm.xlu0 %1400, %v1390
  %v1402 = vpop.permute.xlu0 %1401
  %v1403 = vperm.slane %v1234, 5
  %v1404 = vlaneseq
  %v1405 = vshrl.u32 %v1404, 7
  %1407 = vset.pattern.permute.xlu0 %v1405
  %1408 = vperm.xlu0 %1407, %v1403
  %v1409 = vpop.permute.xlu0 %1408
  %v1410 = vlaneseq
  %v1411 = vshrl.u32 %v1410, 7
  %v1412 = vadd.s32 %v1411, 8
  %1413 = vset.pattern.permute.xlu0 %v1412
  %1414 = vperm.xlu0 %1413, %v1403
  %v1415 = vpop.permute.xlu0 %1414
  %v1416 = vperm.slane %v1234, 6
  %v1417 = vlaneseq
  %v1418 = vshrl.u32 %v1417, 7
  %1420 = vset.pattern.permute.xlu0 %v1418
  %1421 = vperm.xlu0 %1420, %v1416
  %v1422 = vpop.permute.xlu0 %1421
  %v1423 = vlaneseq
  %v1424 = vshrl.u32 %v1423, 7
  %v1425 = vadd.s32 %v1424, 8
  %1426 = vset.pattern.permute.xlu0 %v1425
  %1427 = vperm.xlu0 %1426, %v1416
  %v1428 = vpop.permute.xlu0 %1427
  %v1429 = vperm.slane %v1234, 7
  %v1430 = vlaneseq
  %v1431 = vshrl.u32 %v1430, 7
  %1433 = vset.pattern.permute.xlu0 %v1431
  %1434 = vperm.xlu0 %1433, %v1429
  %v1435 = vpop.permute.xlu0 %1434
  %v1436 = vlaneseq
  %v1437 = vshrl.u32 %v1436, 7
  %v1438 = vadd.s32 %v1437, 8
  %1439 = vset.pattern.permute.xlu0 %v1438
  %1440 = vperm.xlu0 %1439, %v1429
  %v1441 = vpop.permute.xlu0 %1440
  %v1442 = vperm.slane %v1249, 0
  %v1443 = vlaneseq
  %v1444 = vshrl.u32 %v1443, 7
  %1446 = vset.pattern.permute.xlu0 %v1444
  %1447 = vperm.xlu0 %1446, %v1442
  %v1448 = vpop.permute.xlu0 %1447
  %v1449 = vlaneseq
  %v1450 = vshrl.u32 %v1449, 7
  %v1451 = vadd.s32 %v1450, 8
  %1452 = vset.pattern.permute.xlu0 %v1451
  %1453 = vperm.xlu0 %1452, %v1442
  %v1454 = vpop.permute.xlu0 %1453
  %v1455 = vperm.slane %v1249, 1
  %v1456 = vlaneseq
  %v1457 = vshrl.u32 %v1456, 7
  %1459 = vset.pattern.permute.xlu0 %v1457
  %1460 = vperm.xlu0 %1459, %v1455
  %v1461 = vpop.permute.xlu0 %1460
  %v1462 = vlaneseq
  %v1463 = vshrl.u32 %v1462, 7
  %v1464 = vadd.s32 %v1463, 8
  %1465 = vset.pattern.permute.xlu0 %v1464
  %1466 = vperm.xlu0 %1465, %v1455
  %v1467 = vpop.permute.xlu0 %1466
  %v1468 = vperm.slane %v1249, 2
  %v1469 = vlaneseq
  %v1470 = vshrl.u32 %v1469, 7
  %1472 = vset.pattern.permute.xlu0 %v1470
  %1473 = vperm.xlu0 %1472, %v1468
  %v1474 = vpop.permute.xlu0 %1473
  %v1475 = vlaneseq
  %v1476 = vshrl.u32 %v1475, 7
  %v1477 = vadd.s32 %v1476, 8
  %1478 = vset.pattern.permute.xlu0 %v1477
  %1479 = vperm.xlu0 %1478, %v1468
  %v1480 = vpop.permute.xlu0 %1479
  %v1481 = vperm.slane %v1249, 3
  %v1482 = vlaneseq
  %v1483 = vshrl.u32 %v1482, 7
  %1485 = vset.pattern.permute.xlu0 %v1483
  %1486 = vperm.xlu0 %1485, %v1481
  %v1487 = vpop.permute.xlu0 %1486
  %v1488 = vlaneseq
  %v1489 = vshrl.u32 %v1488, 7
  %v1490 = vadd.s32 %v1489, 8
  %1491 = vset.pattern.permute.xlu0 %v1490
  %1492 = vperm.xlu0 %1491, %v1481
  %v1493 = vpop.permute.xlu0 %1492
  %v1494 = vperm.slane %v1249, 4
  %v1495 = vlaneseq
  %v1496 = vshrl.u32 %v1495, 7
  %1498 = vset.pattern.permute.xlu0 %v1496
  %1499 = vperm.xlu0 %1498, %v1494
  %v1500 = vpop.permute.xlu0 %1499
  %v1501 = vlaneseq
  %v1502 = vshrl.u32 %v1501, 7
  %v1503 = vadd.s32 %v1502, 8
  %1504 = vset.pattern.permute.xlu0 %v1503
  %1505 = vperm.xlu0 %1504, %v1494
  %v1506 = vpop.permute.xlu0 %1505
  %v1507 = vperm.slane %v1249, 5
  %v1508 = vlaneseq
  %v1509 = vshrl.u32 %v1508, 7
  %1511 = vset.pattern.permute.xlu0 %v1509
  %1512 = vperm.xlu0 %1511, %v1507
  %v1513 = vpop.permute.xlu0 %1512
  %v1514 = vlaneseq
  %v1515 = vshrl.u32 %v1514, 7
  %v1516 = vadd.s32 %v1515, 8
  %1517 = vset.pattern.permute.xlu0 %v1516
  %1518 = vperm.xlu0 %1517, %v1507
  %v1519 = vpop.permute.xlu0 %1518
  %v1520 = vperm.slane %v1249, 6
  %v1521 = vlaneseq
  %v1522 = vshrl.u32 %v1521, 7
  %1524 = vset.pattern.permute.xlu0 %v1522
  %1525 = vperm.xlu0 %1524, %v1520
  %v1526 = vpop.permute.xlu0 %1525
  %v1527 = vlaneseq
  %v1528 = vshrl.u32 %v1527, 7
  %v1529 = vadd.s32 %v1528, 8
  %1530 = vset.pattern.permute.xlu0 %v1529
  %1531 = vperm.xlu0 %1530, %v1520
  %v1532 = vpop.permute.xlu0 %1531
  %v1533 = vperm.slane %v1249, 7
  %v1534 = vlaneseq
  %v1535 = vshrl.u32 %v1534, 7
  %1537 = vset.pattern.permute.xlu0 %v1535
  %1538 = vperm.xlu0 %1537, %v1533
  %v1539 = vpop.permute.xlu0 %1538
  %v1540 = vlaneseq
  %v1541 = vshrl.u32 %v1540, 7
  %v1542 = vadd.s32 %v1541, 8
  %1543 = vset.pattern.permute.xlu0 %v1542
  %1544 = vperm.xlu0 %1543, %v1533
  %v1545 = vpop.permute.xlu0 %1544
  %v1546 = vmul.f32 %v1344, %v568
  %v1547 = vmul.f32 %v1350, %v568
  %v1548 = vmul.f32 %v1357, %v568
  %v1549 = vmul.f32 %v1363, %v568
  %v1550 = vmul.f32 %v1370, %v568
  %v1551 = vmul.f32 %v1376, %v568
  %v1552 = vmul.f32 %v1383, %v568
  %v1553 = vmul.f32 %v1389, %v568
  %v1554 = vmul.f32 %v1396, %v568
  %v1555 = vmul.f32 %v1402, %v568
  %v1556 = vmul.f32 %v1409, %v568
  %v1557 = vmul.f32 %v1415, %v568
  %v1558 = vmul.f32 %v1422, %v568
  %v1559 = vmul.f32 %v1428, %v568
  %v1560 = vmul.f32 %v1435, %v568
  %v1561 = vmul.f32 %v1441, %v568
  %v1562 = vmul.f32 %v1448, %v568
  %v1563 = vmul.f32 %v1454, %v568
  %v1564 = vmul.f32 %v1461, %v568
  %v1565 = vmul.f32 %v1467, %v568
  %v1566 = vmul.f32 %v1474, %v568
  %v1567 = vmul.f32 %v1480, %v568
  %v1568 = vmul.f32 %v1487, %v568
  %v1569 = vmul.f32 %v1493, %v568
  %v1570 = vmul.f32 %v1500, %v568
  %v1571 = vmul.f32 %v1506, %v568
  %v1572 = vmul.f32 %v1513, %v568
  %v1573 = vmul.f32 %v1519, %v568
  %v1574 = vmul.f32 %v1526, %v568
  %v1575 = vmul.f32 %v1532, %v568
  %v1576 = vmul.f32 %v1539, %v568
  %v1577 = vmul.f32 %v1545, %v568
  %v1578 = vperm.slane %v1264, 0
  %v1579 = vlaneseq
  %v1580 = vshrl.u32 %v1579, 7
  %1582 = vset.pattern.permute.xlu0 %v1580
  %1583 = vperm.xlu0 %1582, %v1578
  %v1584 = vpop.permute.xlu0 %1583
  %v1585 = vlaneseq
  %v1586 = vshrl.u32 %v1585, 7
  %v1587 = vadd.s32 %v1586, 8
  %1588 = vset.pattern.permute.xlu0 %v1587
  %1589 = vperm.xlu0 %1588, %v1578
  %v1590 = vpop.permute.xlu0 %1589
  %v1591 = vperm.slane %v1264, 1
  %v1592 = vlaneseq
  %v1593 = vshrl.u32 %v1592, 7
  %1595 = vset.pattern.permute.xlu0 %v1593
  %1596 = vperm.xlu0 %1595, %v1591
  %v1597 = vpop.permute.xlu0 %1596
  %v1598 = vlaneseq
  %v1599 = vshrl.u32 %v1598, 7
  %v1600 = vadd.s32 %v1599, 8
  %1601 = vset.pattern.permute.xlu0 %v1600
  %1602 = vperm.xlu0 %1601, %v1591
  %v1603 = vpop.permute.xlu0 %1602
  %v1604 = vperm.slane %v1264, 2
  %v1605 = vlaneseq
  %v1606 = vshrl.u32 %v1605, 7
  %1608 = vset.pattern.permute.xlu0 %v1606
  %1609 = vperm.xlu0 %1608, %v1604
  %v1610 = vpop.permute.xlu0 %1609
  %v1611 = vlaneseq
  %v1612 = vshrl.u32 %v1611, 7
  %v1613 = vadd.s32 %v1612, 8
  %1614 = vset.pattern.permute.xlu0 %v1613
  %1615 = vperm.xlu0 %1614, %v1604
  %v1616 = vpop.permute.xlu0 %1615
  %v1617 = vperm.slane %v1264, 3
  %v1618 = vlaneseq
  %v1619 = vshrl.u32 %v1618, 7
  %1621 = vset.pattern.permute.xlu0 %v1619
  %1622 = vperm.xlu0 %1621, %v1617
  %v1623 = vpop.permute.xlu0 %1622
  %v1624 = vlaneseq
  %v1625 = vshrl.u32 %v1624, 7
  %v1626 = vadd.s32 %v1625, 8
  %1627 = vset.pattern.permute.xlu0 %v1626
  %1628 = vperm.xlu0 %1627, %v1617
  %v1629 = vpop.permute.xlu0 %1628
  %v1630 = vperm.slane %v1264, 4
  %v1631 = vlaneseq
  %v1632 = vshrl.u32 %v1631, 7
  %1634 = vset.pattern.permute.xlu0 %v1632
  %1635 = vperm.xlu0 %1634, %v1630
  %v1636 = vpop.permute.xlu0 %1635
  %v1637 = vlaneseq
  %v1638 = vshrl.u32 %v1637, 7
  %v1639 = vadd.s32 %v1638, 8
  %1640 = vset.pattern.permute.xlu0 %v1639
  %1641 = vperm.xlu0 %1640, %v1630
  %v1642 = vpop.permute.xlu0 %1641
  %v1643 = vperm.slane %v1264, 5
  %v1644 = vlaneseq
  %v1645 = vshrl.u32 %v1644, 7
  %1647 = vset.pattern.permute.xlu0 %v1645
  %1648 = vperm.xlu0 %1647, %v1643
  %v1649 = vpop.permute.xlu0 %1648
  %v1650 = vlaneseq
  %v1651 = vshrl.u32 %v1650, 7
  %v1652 = vadd.s32 %v1651, 8
  %1653 = vset.pattern.permute.xlu0 %v1652
  %1654 = vperm.xlu0 %1653, %v1643
  %v1655 = vpop.permute.xlu0 %1654
  %v1656 = vperm.slane %v1264, 6
  %v1657 = vlaneseq
  %v1658 = vshrl.u32 %v1657, 7
  %1660 = vset.pattern.permute.xlu0 %v1658
  %1661 = vperm.xlu0 %1660, %v1656
  %v1662 = vpop.permute.xlu0 %1661
  %v1663 = vlaneseq
  %v1664 = vshrl.u32 %v1663, 7
  %v1665 = vadd.s32 %v1664, 8
  %1666 = vset.pattern.permute.xlu0 %v1665
  %1667 = vperm.xlu0 %1666, %v1656
  %v1668 = vpop.permute.xlu0 %1667
  %v1669 = vperm.slane %v1264, 7
  %v1670 = vlaneseq
  %v1671 = vshrl.u32 %v1670, 7
  %1673 = vset.pattern.permute.xlu0 %v1671
  %1674 = vperm.xlu0 %1673, %v1669
  %v1675 = vpop.permute.xlu0 %1674
  %v1676 = vlaneseq
  %v1677 = vshrl.u32 %v1676, 7
  %v1678 = vadd.s32 %v1677, 8
  %1679 = vset.pattern.permute.xlu0 %v1678
  %1680 = vperm.xlu0 %1679, %v1669
  %v1681 = vpop.permute.xlu0 %1680
  %v1682 = vperm.slane %v1279, 0
  %v1683 = vlaneseq
  %v1684 = vshrl.u32 %v1683, 7
  %1686 = vset.pattern.permute.xlu0 %v1684
  %1687 = vperm.xlu0 %1686, %v1682
  %v1688 = vpop.permute.xlu0 %1687
  %v1689 = vlaneseq
  %v1690 = vshrl.u32 %v1689, 7
  %v1691 = vadd.s32 %v1690, 8
  %1692 = vset.pattern.permute.xlu0 %v1691
  %1693 = vperm.xlu0 %1692, %v1682
  %v1694 = vpop.permute.xlu0 %1693
  %v1695 = vperm.slane %v1279, 1
  %v1696 = vlaneseq
  %v1697 = vshrl.u32 %v1696, 7
  %1699 = vset.pattern.permute.xlu0 %v1697
  %1700 = vperm.xlu0 %1699, %v1695
  %v1701 = vpop.permute.xlu0 %1700
  %v1702 = vlaneseq
  %v1703 = vshrl.u32 %v1702, 7
  %v1704 = vadd.s32 %v1703, 8
  %1705 = vset.pattern.permute.xlu0 %v1704
  %1706 = vperm.xlu0 %1705, %v1695
  %v1707 = vpop.permute.xlu0 %1706
  %v1708 = vperm.slane %v1279, 2
  %v1709 = vlaneseq
  %v1710 = vshrl.u32 %v1709, 7
  %1712 = vset.pattern.permute.xlu0 %v1710
  %1713 = vperm.xlu0 %1712, %v1708
  %v1714 = vpop.permute.xlu0 %1713
  %v1715 = vlaneseq
  %v1716 = vshrl.u32 %v1715, 7
  %v1717 = vadd.s32 %v1716, 8
  %1718 = vset.pattern.permute.xlu0 %v1717
  %1719 = vperm.xlu0 %1718, %v1708
  %v1720 = vpop.permute.xlu0 %1719
  %v1721 = vperm.slane %v1279, 3
  %v1722 = vlaneseq
  %v1723 = vshrl.u32 %v1722, 7
  %1725 = vset.pattern.permute.xlu0 %v1723
  %1726 = vperm.xlu0 %1725, %v1721
  %v1727 = vpop.permute.xlu0 %1726
  %v1728 = vlaneseq
  %v1729 = vshrl.u32 %v1728, 7
  %v1730 = vadd.s32 %v1729, 8
  %1731 = vset.pattern.permute.xlu0 %v1730
  %1732 = vperm.xlu0 %1731, %v1721
  %v1733 = vpop.permute.xlu0 %1732
  %v1734 = vperm.slane %v1279, 4
  %v1735 = vlaneseq
  %v1736 = vshrl.u32 %v1735, 7
  %1738 = vset.pattern.permute.xlu0 %v1736
  %1739 = vperm.xlu0 %1738, %v1734
  %v1740 = vpop.permute.xlu0 %1739
  %v1741 = vlaneseq
  %v1742 = vshrl.u32 %v1741, 7
  %v1743 = vadd.s32 %v1742, 8
  %1744 = vset.pattern.permute.xlu0 %v1743
  %1745 = vperm.xlu0 %1744, %v1734
  %v1746 = vpop.permute.xlu0 %1745
  %v1747 = vperm.slane %v1279, 5
  %v1748 = vlaneseq
  %v1749 = vshrl.u32 %v1748, 7
  %1751 = vset.pattern.permute.xlu0 %v1749
  %1752 = vperm.xlu0 %1751, %v1747
  %v1753 = vpop.permute.xlu0 %1752
  %v1754 = vlaneseq
  %v1755 = vshrl.u32 %v1754, 7
  %v1756 = vadd.s32 %v1755, 8
  %1757 = vset.pattern.permute.xlu0 %v1756
  %1758 = vperm.xlu0 %1757, %v1747
  %v1759 = vpop.permute.xlu0 %1758
  %v1760 = vperm.slane %v1279, 6
  %v1761 = vlaneseq
  %v1762 = vshrl.u32 %v1761, 7
  %1764 = vset.pattern.permute.xlu0 %v1762
  %1765 = vperm.xlu0 %1764, %v1760
  %v1766 = vpop.permute.xlu0 %1765
  %v1767 = vlaneseq
  %v1768 = vshrl.u32 %v1767, 7
  %v1769 = vadd.s32 %v1768, 8
  %1770 = vset.pattern.permute.xlu0 %v1769
  %1771 = vperm.xlu0 %1770, %v1760
  %v1772 = vpop.permute.xlu0 %1771
  %v1773 = vperm.slane %v1279, 7
  %v1774 = vlaneseq
  %v1775 = vshrl.u32 %v1774, 7
  %1777 = vset.pattern.permute.xlu0 %v1775
  %1778 = vperm.xlu0 %1777, %v1773
  %v1779 = vpop.permute.xlu0 %1778
  %v1780 = vlaneseq
  %v1781 = vshrl.u32 %v1780, 7
  %v1782 = vadd.s32 %v1781, 8
  %1783 = vset.pattern.permute.xlu0 %v1782
  %1784 = vperm.xlu0 %1783, %v1773
  %v1785 = vpop.permute.xlu0 %1784
  %v1786 = vmul.f32 %v1584, %v573
  %v1787 = vmul.f32 %v1590, %v573
  %v1788 = vmul.f32 %v1597, %v573
  %v1789 = vmul.f32 %v1603, %v573
  %v1790 = vmul.f32 %v1610, %v573
  %v1791 = vmul.f32 %v1616, %v573
  %v1792 = vmul.f32 %v1623, %v573
  %v1793 = vmul.f32 %v1629, %v573
  %v1794 = vmul.f32 %v1636, %v573
  %v1795 = vmul.f32 %v1642, %v573
  %v1796 = vmul.f32 %v1649, %v573
  %v1797 = vmul.f32 %v1655, %v573
  %v1798 = vmul.f32 %v1662, %v573
  %v1799 = vmul.f32 %v1668, %v573
  %v1800 = vmul.f32 %v1675, %v573
  %v1801 = vmul.f32 %v1681, %v573
  %v1802 = vmul.f32 %v1688, %v573
  %v1803 = vmul.f32 %v1694, %v573
  %v1804 = vmul.f32 %v1701, %v573
  %v1805 = vmul.f32 %v1707, %v573
  %v1806 = vmul.f32 %v1714, %v573
  %v1807 = vmul.f32 %v1720, %v573
  %v1808 = vmul.f32 %v1727, %v573
  %v1809 = vmul.f32 %v1733, %v573
  %v1810 = vmul.f32 %v1740, %v573
  %v1811 = vmul.f32 %v1746, %v573
  %v1812 = vmul.f32 %v1753, %v573
  %v1813 = vmul.f32 %v1759, %v573
  %v1814 = vmul.f32 %v1766, %v573
  %v1815 = vmul.f32 %v1772, %v573
  %v1816 = vmul.f32 %v1779, %v573
  %v1817 = vmul.f32 %v1785, %v573
  %v1818 = vadd.f32 %v1546, %v1786
  %v1819 = vadd.f32 %v1547, %v1787
  %v1820 = vadd.f32 %v1548, %v1788
  %v1821 = vadd.f32 %v1549, %v1789
  %v1822 = vadd.f32 %v1550, %v1790
  %v1823 = vadd.f32 %v1551, %v1791
  %v1824 = vadd.f32 %v1552, %v1792
  %v1825 = vadd.f32 %v1553, %v1793
  %v1826 = vadd.f32 %v1554, %v1794
  %v1827 = vadd.f32 %v1555, %v1795
  %v1828 = vadd.f32 %v1556, %v1796
  %v1829 = vadd.f32 %v1557, %v1797
  %v1830 = vadd.f32 %v1558, %v1798
  %v1831 = vadd.f32 %v1559, %v1799
  %v1832 = vadd.f32 %v1560, %v1800
  %v1833 = vadd.f32 %v1561, %v1801
  %v1834 = vadd.f32 %v1562, %v1802
  %v1835 = vadd.f32 %v1563, %v1803
  %v1836 = vadd.f32 %v1564, %v1804
  %v1837 = vadd.f32 %v1565, %v1805
  %v1838 = vadd.f32 %v1566, %v1806
  %v1839 = vadd.f32 %v1567, %v1807
  %v1840 = vadd.f32 %v1568, %v1808
  %v1841 = vadd.f32 %v1569, %v1809
  %v1842 = vadd.f32 %v1570, %v1810
  %v1843 = vadd.f32 %v1571, %v1811
  %v1844 = vadd.f32 %v1572, %v1812
  %v1845 = vadd.f32 %v1573, %v1813
  %v1846 = vadd.f32 %v1574, %v1814
  %v1847 = vadd.f32 %v1575, %v1815
  %v1848 = vadd.f32 %v1576, %v1816
  %v1849 = vadd.f32 %v1577, %v1817
  %1866 = vrot.lane.b32.xlu0 %v523, 96
  %v1867 = vpop.permute.xlu0 %1866
  %1868 = vrot.lane.b32.xlu0 %v525, 96
  %v1869 = vpop.permute.xlu0 %1868
  %1870 = vrot.lane.b32.xlu0 %v528, 96
  %v1871 = vpop.permute.xlu0 %1870
  %1872 = vrot.lane.b32.xlu0 %v530, 96
  %v1873 = vpop.permute.xlu0 %1872
  %1874 = vrot.lane.b32.xlu0 %v533, 96
  %v1875 = vpop.permute.xlu0 %1874
  %1876 = vrot.lane.b32.xlu0 %v535, 96
  %v1877 = vpop.permute.xlu0 %1876
  %1878 = vrot.lane.b32.xlu0 %v538, 96
  %v1879 = vpop.permute.xlu0 %1878
  %1880 = vrot.lane.b32.xlu0 %v540, 96
  %v1881 = vpop.permute.xlu0 %1880
  %1882 = vrot.lane.b32.xlu0 %v543, 96
  %v1883 = vpop.permute.xlu0 %1882
  %1884 = vrot.lane.b32.xlu0 %v545, 96
  %v1885 = vpop.permute.xlu0 %1884
  %1886 = vrot.lane.b32.xlu0 %v548, 96
  %v1887 = vpop.permute.xlu0 %1886
  %1888 = vrot.lane.b32.xlu0 %v550, 96
  %v1889 = vpop.permute.xlu0 %1888
  %1890 = vrot.lane.b32.xlu0 %v553, 96
  %v1891 = vpop.permute.xlu0 %1890
  %1892 = vrot.lane.b32.xlu0 %v555, 96
  %v1893 = vpop.permute.xlu0 %1892
  %1894 = vrot.lane.b32.xlu0 %v558, 96
  %v1895 = vpop.permute.xlu0 %1894
  %1896 = vrot.lane.b32.xlu0 %v560, 96
  %v1897 = vpop.permute.xlu0 %1896
  %v1914 = vmul.f32 %v1818, %v1867
  %v1915 = vmul.f32 %v1819, %v1867
  %v1916 = vmul.f32 %v1820, %v1869
  %v1917 = vmul.f32 %v1821, %v1869
  %v1918 = vmul.f32 %v1822, %v1871
  %v1919 = vmul.f32 %v1823, %v1871
  %v1920 = vmul.f32 %v1824, %v1873
  %v1921 = vmul.f32 %v1825, %v1873
  %v1922 = vmul.f32 %v1826, %v1875
  %v1923 = vmul.f32 %v1827, %v1875
  %v1924 = vmul.f32 %v1828, %v1877
  %v1925 = vmul.f32 %v1829, %v1877
  %v1926 = vmul.f32 %v1830, %v1879
  %v1927 = vmul.f32 %v1831, %v1879
  %v1928 = vmul.f32 %v1832, %v1881
  %v1929 = vmul.f32 %v1833, %v1881
  %v1930 = vmul.f32 %v1834, %v1883
  %v1931 = vmul.f32 %v1835, %v1883
  %v1932 = vmul.f32 %v1836, %v1885
  %v1933 = vmul.f32 %v1837, %v1885
  %v1934 = vmul.f32 %v1838, %v1887
  %v1935 = vmul.f32 %v1839, %v1887
  %v1936 = vmul.f32 %v1840, %v1889
  %v1937 = vmul.f32 %v1841, %v1889
  %v1938 = vmul.f32 %v1842, %v1891
  %v1939 = vmul.f32 %v1843, %v1891
  %v1940 = vmul.f32 %v1844, %v1893
  %v1941 = vmul.f32 %v1845, %v1893
  %v1942 = vmul.f32 %v1846, %v1895
  %v1943 = vmul.f32 %v1847, %v1895
  %v1944 = vmul.f32 %v1848, %v1897
  %v1945 = vmul.f32 %v1849, %v1897
  %v1946 = vsel %vm97, %v1914, 0.0
  %v1947 = vsel %vm97, %v1915, 0.0
  %v1948 = vadd.f32 %v1946, %v1947
  %v1949 = vrot.slane %v1948, 4
  %v1950 = vadd.f32 %v1948, %v1949
  %v1951 = vrot.slane %v1950, 2
  %v1952 = vadd.f32 %v1950, %v1951
  %v1953 = vrot.slane %v1952, 1
  %v1954 = vadd.f32 %v1952, %v1953
  %v1955 = vsel %vm97, %v1916, 0.0
  %v1956 = vsel %vm97, %v1917, 0.0
  %v1957 = vadd.f32 %v1955, %v1956
  %v1958 = vrot.slane %v1957, 4
  %v1959 = vadd.f32 %v1957, %v1958
  %v1960 = vrot.slane %v1959, 2
  %v1961 = vadd.f32 %v1959, %v1960
  %v1962 = vrot.slane %v1961, 1
  %v1963 = vadd.f32 %v1961, %v1962
  %v1964 = vsel %vm97, %v1918, 0.0
  %v1965 = vsel %vm97, %v1919, 0.0
  %v1966 = vadd.f32 %v1964, %v1965
  %v1967 = vrot.slane %v1966, 4
  %v1968 = vadd.f32 %v1966, %v1967
  %v1969 = vrot.slane %v1968, 2
  %v1970 = vadd.f32 %v1968, %v1969
  %v1971 = vrot.slane %v1970, 1
  %v1972 = vadd.f32 %v1970, %v1971
  %v1973 = vsel %vm97, %v1920, 0.0
  %v1974 = vsel %vm97, %v1921, 0.0
  %v1975 = vadd.f32 %v1973, %v1974
  %v1976 = vrot.slane %v1975, 4
  %v1977 = vadd.f32 %v1975, %v1976
  %v1978 = vrot.slane %v1977, 2
  %v1979 = vadd.f32 %v1977, %v1978
  %v1980 = vrot.slane %v1979, 1
  %v1981 = vadd.f32 %v1979, %v1980
  %v1982 = vsel %vm97, %v1922, 0.0
  %v1983 = vsel %vm97, %v1923, 0.0
  %v1984 = vadd.f32 %v1982, %v1983
  %v1985 = vrot.slane %v1984, 4
  %v1986 = vadd.f32 %v1984, %v1985
  %v1987 = vrot.slane %v1986, 2
  %v1988 = vadd.f32 %v1986, %v1987
  %v1989 = vrot.slane %v1988, 1
  %v1990 = vadd.f32 %v1988, %v1989
  %v1991 = vsel %vm97, %v1924, 0.0
  %v1992 = vsel %vm97, %v1925, 0.0
  %v1993 = vadd.f32 %v1991, %v1992
  %v1994 = vrot.slane %v1993, 4
  %v1995 = vadd.f32 %v1993, %v1994
  %v1996 = vrot.slane %v1995, 2
  %v1997 = vadd.f32 %v1995, %v1996
  %v1998 = vrot.slane %v1997, 1
  %v1999 = vadd.f32 %v1997, %v1998
  %v2000 = vsel %vm97, %v1926, 0.0
  %v2001 = vsel %vm97, %v1927, 0.0
  %v2002 = vadd.f32 %v2000, %v2001
  %v2003 = vrot.slane %v2002, 4
  %v2004 = vadd.f32 %v2002, %v2003
  %v2005 = vrot.slane %v2004, 2
  %v2006 = vadd.f32 %v2004, %v2005
  %v2007 = vrot.slane %v2006, 1
  %v2008 = vadd.f32 %v2006, %v2007
  %v2009 = vsel %vm97, %v1928, 0.0
  %v2010 = vsel %vm97, %v1929, 0.0
  %v2011 = vadd.f32 %v2009, %v2010
  %v2012 = vrot.slane %v2011, 4
  %v2013 = vadd.f32 %v2011, %v2012
  %v2014 = vrot.slane %v2013, 2
  %v2015 = vadd.f32 %v2013, %v2014
  %v2016 = vrot.slane %v2015, 1
  %v2017 = vadd.f32 %v2015, %v2016
  %v2018 = vsel %vm97, %v1930, 0.0
  %v2019 = vsel %vm97, %v1931, 0.0
  %v2020 = vadd.f32 %v2018, %v2019
  %v2021 = vrot.slane %v2020, 4
  %v2022 = vadd.f32 %v2020, %v2021
  %v2023 = vrot.slane %v2022, 2
  %v2024 = vadd.f32 %v2022, %v2023
  %v2025 = vrot.slane %v2024, 1
  %v2026 = vadd.f32 %v2024, %v2025
  %v2027 = vsel %vm97, %v1932, 0.0
  %v2028 = vsel %vm97, %v1933, 0.0
  %v2029 = vadd.f32 %v2027, %v2028
  %v2030 = vrot.slane %v2029, 4
  %v2031 = vadd.f32 %v2029, %v2030
  %v2032 = vrot.slane %v2031, 2
  %v2033 = vadd.f32 %v2031, %v2032
  %v2034 = vrot.slane %v2033, 1
  %v2035 = vadd.f32 %v2033, %v2034
  %v2036 = vsel %vm97, %v1934, 0.0
  %v2037 = vsel %vm97, %v1935, 0.0
  %v2038 = vadd.f32 %v2036, %v2037
  %v2039 = vrot.slane %v2038, 4
  %v2040 = vadd.f32 %v2038, %v2039
  %v2041 = vrot.slane %v2040, 2
  %v2042 = vadd.f32 %v2040, %v2041
  %v2043 = vrot.slane %v2042, 1
  %v2044 = vadd.f32 %v2042, %v2043
  %v2045 = vsel %vm97, %v1936, 0.0
  %v2046 = vsel %vm97, %v1937, 0.0
  %v2047 = vadd.f32 %v2045, %v2046
  %v2048 = vrot.slane %v2047, 4
  %v2049 = vadd.f32 %v2047, %v2048
  %v2050 = vrot.slane %v2049, 2
  %v2051 = vadd.f32 %v2049, %v2050
  %v2052 = vrot.slane %v2051, 1
  %v2053 = vadd.f32 %v2051, %v2052
  %v2054 = vsel %vm97, %v1938, 0.0
  %v2055 = vsel %vm97, %v1939, 0.0
  %v2056 = vadd.f32 %v2054, %v2055
  %v2057 = vrot.slane %v2056, 4
  %v2058 = vadd.f32 %v2056, %v2057
  %v2059 = vrot.slane %v2058, 2
  %v2060 = vadd.f32 %v2058, %v2059
  %v2061 = vrot.slane %v2060, 1
  %v2062 = vadd.f32 %v2060, %v2061
  %v2063 = vsel %vm97, %v1940, 0.0
  %v2064 = vsel %vm97, %v1941, 0.0
  %v2065 = vadd.f32 %v2063, %v2064
  %v2066 = vrot.slane %v2065, 4
  %v2067 = vadd.f32 %v2065, %v2066
  %v2068 = vrot.slane %v2067, 2
  %v2069 = vadd.f32 %v2067, %v2068
  %v2070 = vrot.slane %v2069, 1
  %v2071 = vadd.f32 %v2069, %v2070
  %v2072 = vsel %vm97, %v1942, 0.0
  %v2073 = vsel %vm97, %v1943, 0.0
  %v2074 = vadd.f32 %v2072, %v2073
  %v2075 = vrot.slane %v2074, 4
  %v2076 = vadd.f32 %v2074, %v2075
  %v2077 = vrot.slane %v2076, 2
  %v2078 = vadd.f32 %v2076, %v2077
  %v2079 = vrot.slane %v2078, 1
  %v2080 = vadd.f32 %v2078, %v2079
  %v2081 = vsel %vm97, %v1944, 0.0
  %v2082 = vsel %vm97, %v1945, 0.0
  %v2083 = vadd.f32 %v2081, %v2082
  %v2084 = vrot.slane %v2083, 4
  %v2085 = vadd.f32 %v2083, %v2084
  %v2086 = vrot.slane %v2085, 2
  %v2087 = vadd.f32 %v2085, %v2086
  %v2088 = vrot.slane %v2087, 1
  %v2089 = vadd.f32 %v2087, %v2088
  %v2106 = vsel %vm1039, %v1963, %v1954
  %v2107 = vsel %vm1041, %v1972, %v2106
  %v2108 = vsel %vm1043, %v1981, %v2107
  %v2109 = vsel %vm1045, %v1990, %v2108
  %v2110 = vsel %vm1047, %v1999, %v2109
  %v2111 = vsel %vm1049, %v2008, %v2110
  %v2112 = vsel %vm1051, %v2017, %v2111
  %v2113 = vsel %vm1039, %v2035, %v2026
  %v2114 = vsel %vm1041, %v2044, %v2113
  %v2115 = vsel %vm1043, %v2053, %v2114
  %v2116 = vsel %vm1045, %v2062, %v2115
  %v2117 = vsel %vm1047, %v2071, %v2116
  %v2118 = vsel %vm1049, %v2080, %v2117
  %v2119 = vsel %vm1051, %v2089, %v2118
  %v2122 = vadd.f32 %v1334, %v2112
  %v2123 = vadd.f32 %v1336, %v2119
  %v2124 = vadd.f32 %v684, %v2122
  %v2125 = vadd.f32 %v685, %v2123
  %v2126 = vsel %vm97, %v2124, 0.0
  %2127 = vadd.xlane.f32.xlu0 %v2126
  %v2128 = vpop.xlane.xlu0 %2127
  %v2129 = vsel %vm97, %v2125, 0.0
  %2130 = vadd.xlane.f32.xlu0 %v2129
  %v2131 = vpop.xlane.xlu0 %2130
  %v2132 = vmul.f32 %v2128, %v638
  %v2133 = vmul.f32 %v2131, %v638
  %v2134 = vsub.f32 %v2124, %v2132
  %v2135 = vsub.f32 %v2125, %v2133
  %v2136 = vmul.f32 %v2134, %v2134
  %v2137 = vmul.f32 %v2135, %v2135
  %v2138 = vsel %vm97, %v2136, 0.0
  %2139 = vadd.xlane.f32.xlu0 %v2138
  %v2140 = vpop.xlane.xlu0 %2139
  %v2141 = vsel %vm97, %v2137, 0.0
  %2142 = vadd.xlane.f32.xlu0 %v2141
  %v2143 = vpop.xlane.xlu0 %2142
  %v2144 = vmul.f32 %v2140, %v638
  %v2145 = vmul.f32 %v2143, %v638
  %v2146 = vadd.f32 %v2144, 1e-08
  %v2147 = vadd.f32 %v2145, 1e-08
  %v2148 = vrsqrt.pop %v2146
  %v2149 = vmul.f32 %v2148, %v2146
  %v2150 = vmul.f32 %v2149, %v2148
  %v2151 = vmul.f32 0.5, %v2150
  %v2152 = vsub.f32 1.5, %v2151
  %v2153 = vmul.f32 %v2148, %v2152
  %vm2154 = vweird.f32 %v2146
  %vm2155 = vweird.f32 %v2148
  %vm2156 = vmor %vm2154, %vm2155
  %v2157 = vsel %vm2156, %v2148, %v2153
  %v2158 = vrsqrt.pop %v2147
  %v2159 = vmul.f32 %v2158, %v2147
  %v2160 = vmul.f32 %v2159, %v2158
  %v2161 = vmul.f32 0.5, %v2160
  %v2162 = vsub.f32 1.5, %v2161
  %v2163 = vmul.f32 %v2158, %v2162
  %vm2164 = vweird.f32 %v2147
  %vm2165 = vweird.f32 %v2158
  %vm2166 = vmor %vm2164, %vm2165
  %v2167 = vsel %vm2166, %v2158, %v2163
  %v2168 = vmul.f32 %v2134, %v2157
  %v2169 = vmul.f32 %v2135, %v2167
  %v2170 = vperm.slane %v625, 1
  %v2171 = vmul.f32 %v2168, %v2170
  %v2172 = vmul.f32 %v2169, %v2170
  %2174 = vrot.lane.b32.xlu0 %v2170, 96
  %v2175 = vpop.permute.xlu0 %2174
  %v2177 = vadd.f32 %v2171, %v2175
  %v2178 = vadd.f32 %v2172, %v2175
  %v2179 = vpack.c.bf16 %v2178, %v2177
  %v2180 = vperm.slane %v625, 4
  %2181 = vrot.lane.b32.xlu0 %v696, 32
  %v2182 = vpop.permute.xlu0 %2181
  %2183 = vrot.lane.b32.xlu0 %v697, 32
  %v2184 = vpop.permute.xlu0 %2183
  %v2188 = vsel %vm97, %v2179, 0
  %2190 = vmatpush.bf16.msra.mxu0 0
  %2191 = vmatpush.bf16.msra.mxu0 0
  %2192 = vmatpush.bf16.msra.mxu0 0
  %2193 = vmatpush.bf16.msra.mxu0 0
  %2194 = vmatpush.bf16.msra.mxu0 0
  %2195 = vmatpush.bf16.msra.mxu0 0
  %2196 = vmatpush.bf16.msra.mxu0 %v2184
  %2197 = vmatpush.bf16.msra.mxu0 %v2182
  %2198 = vmatmul.bf16.gmra.mxu0 %v2188
  %v2199 = vpop.f32.mrf.mxu0
  %v2200 = vadd.f32 %v2180, %v2199
  %v2201 = vpop.f32.mrf.mxu0
  %v2202 = vadd.f32 %v2180, %v2201
  %2203 = vdwg.mxu0
  %v2204 = vmax.f32 %v2200, 0.0
  %v2205 = vmax.f32 %v2202, 0.0
  %v2206 = vpack.c.bf16 %v2205, %v2204
  %v2207 = vperm.slane %v625, 5
  %v2208 = vunpack.c.h.b16 %v621
  %v2209 = vunpack.c.h.b16 %v622
  %v2210 = vunpack.c.h.b16 %v623
  %v2211 = vunpack.c.h.b16 %v624
  %v2212 = vpack.c.b16 %v2209, %v2208
  %v2213 = vpack.c.b16 %v2211, %v2210
  %v2217 = vsel %vm97, %v2206, 0
  %2219 = vmatpush.bf16.msra.mxu0 0
  %2220 = vmatpush.bf16.msra.mxu0 0
  %2221 = vmatpush.bf16.msra.mxu0 0
  %2222 = vmatpush.bf16.msra.mxu0 0
  %2223 = vmatpush.bf16.msra.mxu0 0
  %2224 = vmatpush.bf16.msra.mxu0 0
  %2225 = vmatpush.bf16.msra.mxu0 %v2213
  %2226 = vmatpush.bf16.msra.mxu0 %v2212
  %2227 = vmatmul.bf16.gmra.mxu0 %v2217
  %v2228 = vpop.f32.mrf.mxu0
  %v2229 = vadd.f32 %v2207, %v2228
  %v2230 = vpop.f32.mrf.mxu0
  %v2231 = vadd.f32 %v2207, %v2230
  %2232 = vdwg.mxu0
  %v2233 = vadd.f32 %v2229, %v2177
  %v2234 = vadd.f32 %v2231, %v2178
  %v2235 = vmul.f32 %v2233, %v142
  %v2236 = vmul.f32 %v2234, %v147
  %s2237 = scalar_lea.vmem %s2, 32
  %v2238 = vld [vmem:[%s2237] sm:$0xff]
  %v2239 = vld [vmem:[%s2237 + $0x8] sm:$0xff]
  %v2240 = vld [vmem:[%s2237 + $0x10] sm:$0xff]
  %v2241 = vld [vmem:[%s2237 + $0x18] sm:$0xff]
  %s2242 = scalar_lea.vmem %s3, 8
  %v2243 = vld [vmem:[%s2242] sm:$0xff]
  %v2244 = vsel %vm97, %v2235, 0.0
  %2245 = vadd.xlane.f32.xlu0 %v2244
  %v2246 = vpop.xlane.xlu0 %2245
  %v2247 = vsel %vm97, %v2236, 0.0
  %2248 = vadd.xlane.f32.xlu0 %v2247
  %v2249 = vpop.xlane.xlu0 %2248
  %v2250 = vmul.f32 %v2246, %v638
  %v2251 = vmul.f32 %v2249, %v638
  %v2252 = vsub.f32 %v2235, %v2250
  %v2253 = vsub.f32 %v2236, %v2251
  %v2254 = vmul.f32 %v2252, %v2252
  %v2255 = vmul.f32 %v2253, %v2253
  %v2256 = vsel %vm97, %v2254, 0.0
  %2257 = vadd.xlane.f32.xlu0 %v2256
  %v2258 = vpop.xlane.xlu0 %2257
  %v2259 = vsel %vm97, %v2255, 0.0
  %2260 = vadd.xlane.f32.xlu0 %v2259
  %v2261 = vpop.xlane.xlu0 %2260
  %v2262 = vmul.f32 %v2258, %v638
  %v2263 = vmul.f32 %v2261, %v638
  %v2264 = vadd.f32 %v2262, 1e-08
  %v2265 = vadd.f32 %v2263, 1e-08
  %v2266 = vrsqrt.pop %v2264
  %v2267 = vmul.f32 %v2266, %v2264
  %v2268 = vmul.f32 %v2267, %v2266
  %v2269 = vmul.f32 0.5, %v2268
  %v2270 = vsub.f32 1.5, %v2269
  %v2271 = vmul.f32 %v2266, %v2270
  %vm2272 = vweird.f32 %v2264
  %vm2273 = vweird.f32 %v2266
  %vm2274 = vmor %vm2272, %vm2273
  %v2275 = vsel %vm2274, %v2266, %v2271
  %v2276 = vrsqrt.pop %v2265
  %v2277 = vmul.f32 %v2276, %v2265
  %v2278 = vmul.f32 %v2277, %v2276
  %v2279 = vmul.f32 0.5, %v2278
  %v2280 = vsub.f32 1.5, %v2279
  %v2281 = vmul.f32 %v2276, %v2280
  %vm2282 = vweird.f32 %v2265
  %vm2283 = vweird.f32 %v2276
  %vm2284 = vmor %vm2282, %vm2283
  %v2285 = vsel %vm2284, %v2276, %v2281
  %v2286 = vmul.f32 %v2252, %v2275
  %v2287 = vmul.f32 %v2253, %v2285
  %v2288 = vperm.slane %v2243, 0
  %v2289 = vmul.f32 %v2286, %v2288
  %v2290 = vmul.f32 %v2287, %v2288
  %2292 = vrot.lane.b32.xlu0 %v2288, 96
  %v2293 = vpop.permute.xlu0 %2292
  %v2295 = vadd.f32 %v2289, %v2293
  %v2296 = vadd.f32 %v2290, %v2293
  %v2297 = vpack.c.bf16 %v2296, %v2295
  %v2298 = vperm.slane %v2243, 2
  %v2303 = vunpack.c.l.b16 %v2238
  %v2304 = vunpack.c.l.b16 %v2239
  %v2305 = vunpack.c.l.b16 %v2240
  %v2306 = vunpack.c.l.b16 %v2241
  %v2307 = vpack.c.b16 %v2304, %v2303
  %v2308 = vpack.c.b16 %v2306, %v2305
  %v2312 = vsel %vm97, %v2297, 0
  %2314 = vmatpush.bf16.msra.mxu0 0
  %2315 = vmatpush.bf16.msra.mxu0 0
  %2316 = vmatpush.bf16.msra.mxu0 0
  %2317 = vmatpush.bf16.msra.mxu0 0
  %2318 = vmatpush.bf16.msra.mxu0 0
  %2319 = vmatpush.bf16.msra.mxu0 0
  %2320 = vmatpush.bf16.msra.mxu0 %v2308
  %2321 = vmatpush.bf16.msra.mxu0 %v2307
  %2322 = vmatmul.bf16.gmra.mxu0 %v2312
  %v2323 = vpop.f32.mrf.mxu0
  %v2324 = vadd.f32 %v2298, %v2323
  %v2325 = vpop.f32.mrf.mxu0
  %v2326 = vadd.f32 %v2298, %v2325
  %2327 = vdwg.mxu0
  %v2328 = vpack.c.bf16 %v2236, %v2235
  %v2329 = vperm.slane %v2243, 3
  %2330 = vrot.lane.b32.xlu0 %v2307, 96
  %v2331 = vpop.permute.xlu0 %2330
  %2332 = vrot.lane.b32.xlu0 %v2308, 96
  %v2333 = vpop.permute.xlu0 %2332
  %v2337 = vsel %vm97, %v2328, 0
  %2339 = vmatpush.bf16.msra.mxu0 0
  %2340 = vmatpush.bf16.msra.mxu0 0
  %2341 = vmatpush.bf16.msra.mxu0 0
  %2342 = vmatpush.bf16.msra.mxu0 0
  %2343 = vmatpush.bf16.msra.mxu0 0
  %2344 = vmatpush.bf16.msra.mxu0 0
  %2345 = vmatpush.bf16.msra.mxu0 %v2333
  %2346 = vmatpush.bf16.msra.mxu0 %v2331
  %2347 = vmatmul.bf16.gmra.mxu0 %v2337
  %v2348 = vpop.f32.mrf.mxu0
  %v2349 = vadd.f32 %v2329, %v2348
  %v2350 = vpop.f32.mrf.mxu0
  %v2351 = vadd.f32 %v2329, %v2350
  %2352 = vdwg.mxu0
  %v2353 = vadd.f32 %v2349, %v563
  %v2354 = vadd.f32 %v2351, %v563
  %v2355 = vmul.f32 %v2324, %v568
  %v2356 = vmul.f32 %v2326, %v568
  %v2357 = vmul.f32 %v2324, %v573
  %v2358 = vmul.f32 %v2326, %v573
  %v2359 = vpack.c.bf16 %v2356, %v2355
  %v2360 = vpack.c.bf16 %v2358, %v2357
  %v2361 = vpack.c.bf16 %v2354, %v2353
  %v2366 = vrot.slane %v2355, 1
  %v2367 = vrot.slane %v2355, 2
  %v2368 = vrot.slane %v2355, 3
  %v2369 = vrot.slane %v2355, 4
  %v2370 = vrot.slane %v2355, 5
  %v2371 = vrot.slane %v2355, 6
  %v2372 = vrot.slane %v2355, 7
  %v2373 = vrot.slane %v2356, 1
  %v2374 = vrot.slane %v2356, 2
  %v2375 = vrot.slane %v2356, 3
  %v2376 = vrot.slane %v2356, 4
  %v2377 = vrot.slane %v2356, 5
  %v2378 = vrot.slane %v2356, 6
  %v2379 = vrot.slane %v2356, 7
  %v2380 = vrot.slane %v2357, 1
  %v2381 = vrot.slane %v2357, 2
  %v2382 = vrot.slane %v2357, 3
  %v2383 = vrot.slane %v2357, 4
  %v2384 = vrot.slane %v2357, 5
  %v2385 = vrot.slane %v2357, 6
  %v2386 = vrot.slane %v2357, 7
  %v2387 = vrot.slane %v2358, 1
  %v2388 = vrot.slane %v2358, 2
  %v2389 = vrot.slane %v2358, 3
  %v2390 = vrot.slane %v2358, 4
  %v2391 = vrot.slane %v2358, 5
  %v2392 = vrot.slane %v2358, 6
  %v2393 = vrot.slane %v2358, 7
  %v2394 = vperm.slane %v2355, 0
  %v2395 = vperm.slane %v2366, 0
  %v2396 = vperm.slane %v2367, 0
  %v2397 = vperm.slane %v2368, 0
  %v2398 = vperm.slane %v2369, 0
  %v2399 = vperm.slane %v2370, 0
  %v2400 = vperm.slane %v2371, 0
  %v2401 = vperm.slane %v2372, 0
  %v2402 = vperm.slane %v2356, 0
  %v2403 = vperm.slane %v2373, 0
  %v2404 = vperm.slane %v2374, 0
  %v2405 = vperm.slane %v2375, 0
  %v2406 = vperm.slane %v2376, 0
  %v2407 = vperm.slane %v2377, 0
  %v2408 = vperm.slane %v2378, 0
  %v2409 = vperm.slane %v2379, 0
  %v2410 = vperm.slane %v2357, 0
  %v2411 = vperm.slane %v2380, 0
  %v2412 = vperm.slane %v2381, 0
  %v2413 = vperm.slane %v2382, 0
  %v2414 = vperm.slane %v2383, 0
  %v2415 = vperm.slane %v2384, 0
  %v2416 = vperm.slane %v2385, 0
  %v2417 = vperm.slane %v2386, 0
  %v2418 = vperm.slane %v2358, 0
  %v2419 = vperm.slane %v2387, 0
  %v2420 = vperm.slane %v2388, 0
  %v2421 = vperm.slane %v2389, 0
  %v2422 = vperm.slane %v2390, 0
  %v2423 = vperm.slane %v2391, 0
  %v2424 = vperm.slane %v2392, 0
  %v2425 = vperm.slane %v2393, 0
  %v2458 = vmul.f32 %v523, %v2394
  %v2459 = vmul.f32 %v525, %v2395
  %v2460 = vmul.f32 %v528, %v2396
  %v2461 = vmul.f32 %v530, %v2397
  %v2462 = vmul.f32 %v533, %v2398
  %v2463 = vmul.f32 %v535, %v2399
  %v2464 = vmul.f32 %v538, %v2400
  %v2465 = vmul.f32 %v540, %v2401
  %v2466 = vmul.f32 %v543, %v2402
  %v2467 = vmul.f32 %v545, %v2403
  %v2468 = vmul.f32 %v548, %v2404
  %v2469 = vmul.f32 %v550, %v2405
  %v2470 = vmul.f32 %v553, %v2406
  %v2471 = vmul.f32 %v555, %v2407
  %v2472 = vmul.f32 %v558, %v2408
  %v2473 = vmul.f32 %v560, %v2409
  %v2474 = vmul.f32 %v523, %v2410
  %v2475 = vmul.f32 %v525, %v2411
  %v2476 = vmul.f32 %v528, %v2412
  %v2477 = vmul.f32 %v530, %v2413
  %v2478 = vmul.f32 %v533, %v2414
  %v2479 = vmul.f32 %v535, %v2415
  %v2480 = vmul.f32 %v538, %v2416
  %v2481 = vmul.f32 %v540, %v2417
  %v2482 = vmul.f32 %v543, %v2418
  %v2483 = vmul.f32 %v545, %v2419
  %v2484 = vmul.f32 %v548, %v2420
  %v2485 = vmul.f32 %v550, %v2421
  %v2486 = vmul.f32 %v553, %v2422
  %v2487 = vmul.f32 %v555, %v2423
  %v2488 = vmul.f32 %v558, %v2424
  %v2489 = vmul.f32 %v560, %v2425
  %v2490 = vsel %vm97, %v2458, 0.0
  %2491 = vadd.xlane.f32.xlu0 %v2490
  %v2492 = vpop.xlane.xlu0 %2491
  %v2493 = vsel %vm97, %v2459, 0.0
  %2494 = vadd.xlane.f32.xlu0 %v2493
  %v2495 = vpop.xlane.xlu0 %2494
  %v2496 = vsel %vm97, %v2460, 0.0
  %2497 = vadd.xlane.f32.xlu0 %v2496
  %v2498 = vpop.xlane.xlu0 %2497
  %v2499 = vsel %vm97, %v2461, 0.0
  %2500 = vadd.xlane.f32.xlu0 %v2499
  %v2501 = vpop.xlane.xlu0 %2500
  %v2502 = vsel %vm97, %v2462, 0.0
  %2503 = vadd.xlane.f32.xlu0 %v2502
  %v2504 = vpop.xlane.xlu0 %2503
  %v2505 = vsel %vm97, %v2463, 0.0
  %2506 = vadd.xlane.f32.xlu0 %v2505
  %v2507 = vpop.xlane.xlu0 %2506
  %v2508 = vsel %vm97, %v2464, 0.0
  %2509 = vadd.xlane.f32.xlu0 %v2508
  %v2510 = vpop.xlane.xlu0 %2509
  %v2511 = vsel %vm97, %v2465, 0.0
  %2512 = vadd.xlane.f32.xlu0 %v2511
  %v2513 = vpop.xlane.xlu0 %2512
  %v2514 = vsel %vm97, %v2466, 0.0
  %2515 = vadd.xlane.f32.xlu0 %v2514
  %v2516 = vpop.xlane.xlu0 %2515
  %v2517 = vsel %vm97, %v2467, 0.0
  %2518 = vadd.xlane.f32.xlu0 %v2517
  %v2519 = vpop.xlane.xlu0 %2518
  %v2520 = vsel %vm97, %v2468, 0.0
  %2521 = vadd.xlane.f32.xlu0 %v2520
  %v2522 = vpop.xlane.xlu0 %2521
  %v2523 = vsel %vm97, %v2469, 0.0
  %2524 = vadd.xlane.f32.xlu0 %v2523
  %v2525 = vpop.xlane.xlu0 %2524
  %v2526 = vsel %vm97, %v2470, 0.0
  %2527 = vadd.xlane.f32.xlu0 %v2526
  %v2528 = vpop.xlane.xlu0 %2527
  %v2529 = vsel %vm97, %v2471, 0.0
  %2530 = vadd.xlane.f32.xlu0 %v2529
  %v2531 = vpop.xlane.xlu0 %2530
  %v2532 = vsel %vm97, %v2472, 0.0
  %2533 = vadd.xlane.f32.xlu0 %v2532
  %v2534 = vpop.xlane.xlu0 %2533
  %v2535 = vsel %vm97, %v2473, 0.0
  %2536 = vadd.xlane.f32.xlu0 %v2535
  %v2537 = vpop.xlane.xlu0 %2536
  %v2538 = vsel %vm97, %v2474, 0.0
  %2539 = vadd.xlane.f32.xlu0 %v2538
  %v2540 = vpop.xlane.xlu0 %2539
  %v2541 = vsel %vm97, %v2475, 0.0
  %2542 = vadd.xlane.f32.xlu0 %v2541
  %v2543 = vpop.xlane.xlu0 %2542
  %v2544 = vsel %vm97, %v2476, 0.0
  %2545 = vadd.xlane.f32.xlu0 %v2544
  %v2546 = vpop.xlane.xlu0 %2545
  %v2547 = vsel %vm97, %v2477, 0.0
  %2548 = vadd.xlane.f32.xlu0 %v2547
  %v2549 = vpop.xlane.xlu0 %2548
  %v2550 = vsel %vm97, %v2478, 0.0
  %2551 = vadd.xlane.f32.xlu0 %v2550
  %v2552 = vpop.xlane.xlu0 %2551
  %v2553 = vsel %vm97, %v2479, 0.0
  %2554 = vadd.xlane.f32.xlu0 %v2553
  %v2555 = vpop.xlane.xlu0 %2554
  %v2556 = vsel %vm97, %v2480, 0.0
  %2557 = vadd.xlane.f32.xlu0 %v2556
  %v2558 = vpop.xlane.xlu0 %2557
  %v2559 = vsel %vm97, %v2481, 0.0
  %2560 = vadd.xlane.f32.xlu0 %v2559
  %v2561 = vpop.xlane.xlu0 %2560
  %v2562 = vsel %vm97, %v2482, 0.0
  %2563 = vadd.xlane.f32.xlu0 %v2562
  %v2564 = vpop.xlane.xlu0 %2563
  %v2565 = vsel %vm97, %v2483, 0.0
  %2566 = vadd.xlane.f32.xlu0 %v2565
  %v2567 = vpop.xlane.xlu0 %2566
  %v2568 = vsel %vm97, %v2484, 0.0
  %2569 = vadd.xlane.f32.xlu0 %v2568
  %v2570 = vpop.xlane.xlu0 %2569
  %v2571 = vsel %vm97, %v2485, 0.0
  %2572 = vadd.xlane.f32.xlu0 %v2571
  %v2573 = vpop.xlane.xlu0 %2572
  %v2574 = vsel %vm97, %v2486, 0.0
  %2575 = vadd.xlane.f32.xlu0 %v2574
  %v2576 = vpop.xlane.xlu0 %2575
  %v2577 = vsel %vm97, %v2487, 0.0
  %2578 = vadd.xlane.f32.xlu0 %v2577
  %v2579 = vpop.xlane.xlu0 %2578
  %v2580 = vsel %vm97, %v2488, 0.0
  %2581 = vadd.xlane.f32.xlu0 %v2580
  %v2582 = vpop.xlane.xlu0 %2581
  %v2583 = vsel %vm97, %v2489, 0.0
  %2584 = vadd.xlane.f32.xlu0 %v2583
  %v2585 = vpop.xlane.xlu0 %2584
  %v2618 = vperm.slane %v2492, %v45
  %v2619 = vperm.slane %v2495, %v45
  %v2620 = vperm.slane %v2498, %v45
  %v2621 = vperm.slane %v2501, %v45
  %v2622 = vperm.slane %v2504, %v45
  %v2623 = vperm.slane %v2507, %v45
  %v2624 = vperm.slane %v2510, %v45
  %v2625 = vperm.slane %v2513, %v45
  %v2626 = vperm.slane %v2516, %v45
  %v2627 = vperm.slane %v2519, %v45
  %v2628 = vperm.slane %v2522, %v45
  %v2629 = vperm.slane %v2525, %v45
  %v2630 = vperm.slane %v2528, %v45
  %v2631 = vperm.slane %v2531, %v45
  %v2632 = vperm.slane %v2534, %v45
  %v2633 = vperm.slane %v2537, %v45
  %v2634 = vperm.slane %v2540, %v45
  %v2635 = vperm.slane %v2543, %v45
  %v2636 = vperm.slane %v2546, %v45
  %v2637 = vperm.slane %v2549, %v45
  %v2638 = vperm.slane %v2552, %v45
  %v2639 = vperm.slane %v2555, %v45
  %v2640 = vperm.slane %v2558, %v45
  %v2641 = vperm.slane %v2561, %v45
  %v2642 = vperm.slane %v2564, %v45
  %v2643 = vperm.slane %v2567, %v45
  %v2644 = vperm.slane %v2570, %v45
  %v2645 = vperm.slane %v2573, %v45
  %v2646 = vperm.slane %v2576, %v45
  %v2647 = vperm.slane %v2579, %v45
  %v2648 = vperm.slane %v2582, %v45
  %v2649 = vperm.slane %v2585, %v45
  %v2650 = vsel %vm1039, %v2619, %v2618
  %v2651 = vsel %vm1041, %v2620, %v2650
  %v2652 = vsel %vm1043, %v2621, %v2651
  %v2653 = vsel %vm1045, %v2622, %v2652
  %v2654 = vsel %vm1047, %v2623, %v2653
  %v2655 = vsel %vm1049, %v2624, %v2654
  %v2656 = vsel %vm1051, %v2625, %v2655
  %v2657 = vsel %vm1039, %v2627, %v2626
  %v2658 = vsel %vm1041, %v2628, %v2657
  %v2659 = vsel %vm1043, %v2629, %v2658
  %v2660 = vsel %vm1045, %v2630, %v2659
  %v2661 = vsel %vm1047, %v2631, %v2660
  %v2662 = vsel %vm1049, %v2632, %v2661
  %v2663 = vsel %vm1051, %v2633, %v2662
  %v2664 = vsel %vm1039, %v2635, %v2634
  %v2665 = vsel %vm1041, %v2636, %v2664
  %v2666 = vsel %vm1043, %v2637, %v2665
  %v2667 = vsel %vm1045, %v2638, %v2666
  %v2668 = vsel %vm1047, %v2639, %v2667
  %v2669 = vsel %vm1049, %v2640, %v2668
  %v2670 = vsel %vm1051, %v2641, %v2669
  %v2671 = vsel %vm1039, %v2643, %v2642
  %v2672 = vsel %vm1041, %v2644, %v2671
  %v2673 = vsel %vm1043, %v2645, %v2672
  %v2674 = vsel %vm1045, %v2646, %v2673
  %v2675 = vsel %vm1047, %v2647, %v2674
  %v2676 = vsel %vm1049, %v2648, %v2675
  %v2677 = vsel %vm1051, %v2649, %v2676
  %v2682 = vperm.slane %v2492, %v1078
  %v2683 = vperm.slane %v2495, %v1078
  %v2684 = vperm.slane %v2498, %v1078
  %v2685 = vperm.slane %v2501, %v1078
  %v2686 = vperm.slane %v2504, %v1078
  %v2687 = vperm.slane %v2507, %v1078
  %v2688 = vperm.slane %v2510, %v1078
  %v2689 = vperm.slane %v2513, %v1078
  %v2690 = vperm.slane %v2516, %v1078
  %v2691 = vperm.slane %v2519, %v1078
  %v2692 = vperm.slane %v2522, %v1078
  %v2693 = vperm.slane %v2525, %v1078
  %v2694 = vperm.slane %v2528, %v1078
  %v2695 = vperm.slane %v2531, %v1078
  %v2696 = vperm.slane %v2534, %v1078
  %v2697 = vperm.slane %v2537, %v1078
  %v2698 = vperm.slane %v2540, %v1078
  %v2699 = vperm.slane %v2543, %v1078
  %v2700 = vperm.slane %v2546, %v1078
  %v2701 = vperm.slane %v2549, %v1078
  %v2702 = vperm.slane %v2552, %v1078
  %v2703 = vperm.slane %v2555, %v1078
  %v2704 = vperm.slane %v2558, %v1078
  %v2705 = vperm.slane %v2561, %v1078
  %v2706 = vperm.slane %v2564, %v1078
  %v2707 = vperm.slane %v2567, %v1078
  %v2708 = vperm.slane %v2570, %v1078
  %v2709 = vperm.slane %v2573, %v1078
  %v2710 = vperm.slane %v2576, %v1078
  %v2711 = vperm.slane %v2579, %v1078
  %v2712 = vperm.slane %v2582, %v1078
  %v2713 = vperm.slane %v2585, %v1078
  %v2714 = vsel %vm1039, %v2683, %v2682
  %v2715 = vsel %vm1041, %v2684, %v2714
  %v2716 = vsel %vm1043, %v2685, %v2715
  %v2717 = vsel %vm1045, %v2686, %v2716
  %v2718 = vsel %vm1047, %v2687, %v2717
  %v2719 = vsel %vm1049, %v2688, %v2718
  %v2720 = vsel %vm1051, %v2689, %v2719
  %v2721 = vsel %vm1039, %v2691, %v2690
  %v2722 = vsel %vm1041, %v2692, %v2721
  %v2723 = vsel %vm1043, %v2693, %v2722
  %v2724 = vsel %vm1045, %v2694, %v2723
  %v2725 = vsel %vm1047, %v2695, %v2724
  %v2726 = vsel %vm1049, %v2696, %v2725
  %v2727 = vsel %vm1051, %v2697, %v2726
  %v2728 = vsel %vm1039, %v2699, %v2698
  %v2729 = vsel %vm1041, %v2700, %v2728
  %v2730 = vsel %vm1043, %v2701, %v2729
  %v2731 = vsel %vm1045, %v2702, %v2730
  %v2732 = vsel %vm1047, %v2703, %v2731
  %v2733 = vsel %vm1049, %v2704, %v2732
  %v2734 = vsel %vm1051, %v2705, %v2733
  %v2735 = vsel %vm1039, %v2707, %v2706
  %v2736 = vsel %vm1041, %v2708, %v2735
  %v2737 = vsel %vm1043, %v2709, %v2736
  %v2738 = vsel %vm1045, %v2710, %v2737
  %v2739 = vsel %vm1047, %v2711, %v2738
  %v2740 = vsel %vm1049, %v2712, %v2739
  %v2741 = vsel %vm1051, %v2713, %v2740
  %v2746 = vsel %vm1143, %v2656, %v2720
  %v2747 = vsel %vm1143, %v2663, %v2727
  %v2748 = vsel %vm1143, %v2670, %v2734
  %v2749 = vsel %vm1143, %v2677, %v2741
  %v2751 = vsel %vm97, %v2359, 0
  %v2754 = vsel %vm97, %v2360, 0
  %v2757 = vsel %vm97, %v2361, 0
  %2759 = vmatpush.bf16.xpose.msra.mxu0 0
  %2760 = vmatpush.bf16.xpose.msra.mxu0 0
  %2761 = vmatpush.bf16.xpose.msra.mxu0 0
  %2762 = vmatpush.bf16.xpose.msra.mxu0 0
  %2763 = vmatpush.bf16.xpose.msra.mxu0 0
  %2764 = vmatpush.bf16.xpose.msra.mxu0 0
  %2765 = vmatpush.bf16.xpose.msra.mxu0 0
  %2766 = vmatpush.bf16.xpose.msra.mxu0 %v2757
  %2767 = vmatmul.bf16.gmra.mxu0 %v2751
  %v2768 = vpop.f32.mrf.mxu0
  %v2769 = vadd.f32 %v2746, %v2768
  %v2770 = vpop.f32.mrf.mxu0
  %v2771 = vadd.f32 %v2747, %v2770
  %2772 = vmatmul.bf16.gmra.mxu0 %v2754
  %v2773 = vpop.f32.mrf.mxu0
  %v2774 = vadd.f32 %v2748, %v2773
  %v2775 = vpop.f32.mrf.mxu0
  %v2776 = vadd.f32 %v2749, %v2775
  %2777 = vdwg.mxu0
  %v2778 = vmul.f32 %v2769, 0.25
  %v2779 = vmul.f32 %v2771, 0.25
  %v2780 = vmul.f32 %v2774, 0.25
  %v2781 = vmul.f32 %v2776, 0.25
  %v2782 = vsel %vm617, -4.2949673e+09, %v2778
  %v2783 = vsel %vm618, -4.2949673e+09, %v2779
  %v2784 = vsel %vm619, -4.2949673e+09, %v2780
  %v2785 = vsel %vm620, -4.2949673e+09, %v2781
  %v2786 = vsel %vm403, %v2782, -inf
  %2787 = vmax.xlane.f32.xlu0 %v2786
  %v2788 = vpop.xlane.xlu0 %2787
  %v2789 = vsel %vm403, %v2783, -inf
  %2790 = vmax.xlane.f32.xlu0 %v2789
  %v2791 = vpop.xlane.xlu0 %2790
  %v2792 = vsel %vm403, %v2784, -inf
  %2793 = vmax.xlane.f32.xlu0 %v2792
  %v2794 = vpop.xlane.xlu0 %2793
  %v2795 = vsel %vm403, %v2785, -inf
  %2796 = vmax.xlane.f32.xlu0 %v2795
  %v2797 = vpop.xlane.xlu0 %2796
  %v2798 = vsub.f32 %v2782, %v2788
  %v2799 = vsub.f32 %v2783, %v2791
  %v2800 = vsub.f32 %v2784, %v2794
  %v2801 = vsub.f32 %v2785, %v2797
  %v2802 = vmul.f32 %v2798, 1.442695
  %v2803 = vpow.pop %v2802
  %v2804 = vmul.f32 %v2799, 1.442695
  %v2805 = vpow.pop %v2804
  %v2806 = vmul.f32 %v2800, 1.442695
  %v2807 = vpow.pop %v2806
  %v2808 = vmul.f32 %v2801, 1.442695
  %v2809 = vpow.pop %v2808
  %v2810 = vsel %vm403, %v2803, 0.0
  %2811 = vadd.xlane.f32.xlu0 %v2810
  %v2812 = vpop.xlane.xlu0 %2811
  %v2813 = vsel %vm403, %v2805, 0.0
  %2814 = vadd.xlane.f32.xlu0 %v2813
  %v2815 = vpop.xlane.xlu0 %2814
  %v2816 = vsel %vm403, %v2807, 0.0
  %2817 = vadd.xlane.f32.xlu0 %v2816
  %v2818 = vpop.xlane.xlu0 %2817
  %v2819 = vsel %vm403, %v2809, 0.0
  %2820 = vadd.xlane.f32.xlu0 %v2819
  %v2821 = vpop.xlane.xlu0 %2820
  %v2822 = vrcp.pop %v2812
  %v2823 = vmul.f32 %v2812, %v2822
  %v2824 = vsub.f32 1.0, %v2823
  %v2825 = vmul.f32 %v2822, %v2824
  %v2826 = vadd.f32 %v2822, %v2825
  %vm2827 = vweird.f32 %v2812
  %vm2828 = vweird.f32 %v2822
  %vm2829 = vmor %vm2827, %vm2828
  %v2830 = vsel %vm2829, %v2822, %v2826
  %v2831 = vand.u32 2147483647, %v2812
  %vm2832 = vcmp.eq.f32.partialorder %v2831, 8.507059e+37
  %v2833 = vand.u32 %v2812, 2147483648
  %v2834 = vor.u32 1.1754944e-38, %v2833
  %v2835 = vsel %vm2832, %v2834, %v2830
  %v2836 = vmul.f32 %v2803, %v2835
  %v2837 = vrcp.pop %v2815
  %v2838 = vmul.f32 %v2815, %v2837
  %v2839 = vsub.f32 1.0, %v2838
  %v2840 = vmul.f32 %v2837, %v2839
  %v2841 = vadd.f32 %v2837, %v2840
  %vm2842 = vweird.f32 %v2815
  %vm2843 = vweird.f32 %v2837
  %vm2844 = vmor %vm2842, %vm2843
  %v2845 = vsel %vm2844, %v2837, %v2841
  %v2846 = vand.u32 2147483647, %v2815
  %vm2847 = vcmp.eq.f32.partialorder %v2846, 8.507059e+37
  %v2848 = vand.u32 %v2815, 2147483648
  %v2849 = vor.u32 1.1754944e-38, %v2848
  %v2850 = vsel %vm2847, %v2849, %v2845
  %v2851 = vmul.f32 %v2805, %v2850
  %v2852 = vrcp.pop %v2818
  %v2853 = vmul.f32 %v2818, %v2852
  %v2854 = vsub.f32 1.0, %v2853
  %v2855 = vmul.f32 %v2852, %v2854
  %v2856 = vadd.f32 %v2852, %v2855
  %vm2857 = vweird.f32 %v2818
  %vm2858 = vweird.f32 %v2852
  %vm2859 = vmor %vm2857, %vm2858
  %v2860 = vsel %vm2859, %v2852, %v2856
  %v2861 = vand.u32 2147483647, %v2818
  %vm2862 = vcmp.eq.f32.partialorder %v2861, 8.507059e+37
  %v2863 = vand.u32 %v2818, 2147483648
  %v2864 = vor.u32 1.1754944e-38, %v2863
  %v2865 = vsel %vm2862, %v2864, %v2860
  %v2866 = vmul.f32 %v2807, %v2865
  %v2867 = vrcp.pop %v2821
  %v2868 = vmul.f32 %v2821, %v2867
  %v2869 = vsub.f32 1.0, %v2868
  %v2870 = vmul.f32 %v2867, %v2869
  %v2871 = vadd.f32 %v2867, %v2870
  %vm2872 = vweird.f32 %v2821
  %vm2873 = vweird.f32 %v2867
  %vm2874 = vmor %vm2872, %vm2873
  %v2875 = vsel %vm2874, %v2867, %v2871
  %v2876 = vand.u32 2147483647, %v2821
  %vm2877 = vcmp.eq.f32.partialorder %v2876, 8.507059e+37
  %v2878 = vand.u32 %v2821, 2147483648
  %v2879 = vor.u32 1.1754944e-38, %v2878
  %v2880 = vsel %vm2877, %v2879, %v2875
  %v2881 = vmul.f32 %v2809, %v2880
  %v2882 = vmul.f32 %v2353, %v1282
  %v2883 = vmul.f32 %v2354, %v1282
  %v2884 = vpack.c.bf16 %v2851, %v2836
  %v2885 = vpack.c.bf16 %v2883, %v2882
  %v2886 = vmul.f32 %v2353, %v1290
  %v2887 = vmul.f32 %v2354, %v1290
  %v2888 = vpack.c.bf16 %v2881, %v2866
  %v2889 = vpack.c.bf16 %v2887, %v2886
  %2891 = vrot.lane.b32.xlu0 %v2889, 96
  %v2892 = vpop.permute.xlu0 %2891
  %v2895 = vsel %vm403, %v2888, 0
  %2897 = vmatpush.bf16.msra.mxu0 0
  %2898 = vmatpush.bf16.msra.mxu0 0
  %2899 = vmatpush.bf16.msra.mxu0 0
  %2900 = vmatpush.bf16.msra.mxu0 0
  %2901 = vmatpush.bf16.msra.mxu0 0
  %2902 = vmatpush.bf16.msra.mxu0 0
  %2903 = vmatpush.bf16.msra.mxu0 0
  %2904 = vmatpush.bf16.msra.mxu0 %v2892
  %2905 = vmatmul.bf16.gmra.mxu0 %v2895
  %v2906 = vpop.f32.mrf.mxu0
  %v2907 = vadd.f32 0.0, %v2906
  %v2908 = vpop.f32.mrf.mxu0
  %v2909 = vadd.f32 0.0, %v2908
  %2910 = vdwg.mxu0
  %2912 = vrot.lane.b32.xlu0 %v2885, 96
  %v2913 = vpop.permute.xlu0 %2912
  %v2916 = vsel %vm403, %v2884, 0
  %2918 = vmatpush.bf16.msra.mxu0 0
  %2919 = vmatpush.bf16.msra.mxu0 0
  %2920 = vmatpush.bf16.msra.mxu0 0
  %2921 = vmatpush.bf16.msra.mxu0 0
  %2922 = vmatpush.bf16.msra.mxu0 0
  %2923 = vmatpush.bf16.msra.mxu0 0
  %2924 = vmatpush.bf16.msra.mxu0 0
  %2925 = vmatpush.bf16.msra.mxu0 %v2913
  %2926 = vmatmul.bf16.gmra.mxu0 %v2916
  %v2927 = vpop.f32.mrf.mxu0
  %v2928 = vadd.f32 %v2907, %v2927
  %v2929 = vpop.f32.mrf.mxu0
  %v2930 = vadd.f32 %v2909, %v2929
  %2931 = vdwg.mxu0
  %v2932 = vperm.slane %v2836, 0
  %v2933 = vlaneseq
  %v2934 = vshrl.u32 %v2933, 7
  %2936 = vset.pattern.permute.xlu0 %v2934
  %2937 = vperm.xlu0 %2936, %v2932
  %v2938 = vpop.permute.xlu0 %2937
  %v2939 = vlaneseq
  %v2940 = vshrl.u32 %v2939, 7
  %v2941 = vadd.s32 %v2940, 8
  %2942 = vset.pattern.permute.xlu0 %v2941
  %2943 = vperm.xlu0 %2942, %v2932
  %v2944 = vpop.permute.xlu0 %2943
  %v2945 = vperm.slane %v2836, 1
  %v2946 = vlaneseq
  %v2947 = vshrl.u32 %v2946, 7
  %2949 = vset.pattern.permute.xlu0 %v2947
  %2950 = vperm.xlu0 %2949, %v2945
  %v2951 = vpop.permute.xlu0 %2950
  %v2952 = vlaneseq
  %v2953 = vshrl.u32 %v2952, 7
  %v2954 = vadd.s32 %v2953, 8
  %2955 = vset.pattern.permute.xlu0 %v2954
  %2956 = vperm.xlu0 %2955, %v2945
  %v2957 = vpop.permute.xlu0 %2956
  %v2958 = vperm.slane %v2836, 2
  %v2959 = vlaneseq
  %v2960 = vshrl.u32 %v2959, 7
  %2962 = vset.pattern.permute.xlu0 %v2960
  %2963 = vperm.xlu0 %2962, %v2958
  %v2964 = vpop.permute.xlu0 %2963
  %v2965 = vlaneseq
  %v2966 = vshrl.u32 %v2965, 7
  %v2967 = vadd.s32 %v2966, 8
  %2968 = vset.pattern.permute.xlu0 %v2967
  %2969 = vperm.xlu0 %2968, %v2958
  %v2970 = vpop.permute.xlu0 %2969
  %v2971 = vperm.slane %v2836, 3
  %v2972 = vlaneseq
  %v2973 = vshrl.u32 %v2972, 7
  %2975 = vset.pattern.permute.xlu0 %v2973
  %2976 = vperm.xlu0 %2975, %v2971
  %v2977 = vpop.permute.xlu0 %2976
  %v2978 = vlaneseq
  %v2979 = vshrl.u32 %v2978, 7
  %v2980 = vadd.s32 %v2979, 8
  %2981 = vset.pattern.permute.xlu0 %v2980
  %2982 = vperm.xlu0 %2981, %v2971
  %v2983 = vpop.permute.xlu0 %2982
  %v2984 = vperm.slane %v2836, 4
  %v2985 = vlaneseq
  %v2986 = vshrl.u32 %v2985, 7
  %2988 = vset.pattern.permute.xlu0 %v2986
  %2989 = vperm.xlu0 %2988, %v2984
  %v2990 = vpop.permute.xlu0 %2989
  %v2991 = vlaneseq
  %v2992 = vshrl.u32 %v2991, 7
  %v2993 = vadd.s32 %v2992, 8
  %2994 = vset.pattern.permute.xlu0 %v2993
  %2995 = vperm.xlu0 %2994, %v2984
  %v2996 = vpop.permute.xlu0 %2995
  %v2997 = vperm.slane %v2836, 5
  %v2998 = vlaneseq
  %v2999 = vshrl.u32 %v2998, 7
  %3001 = vset.pattern.permute.xlu0 %v2999
  %3002 = vperm.xlu0 %3001, %v2997
  %v3003 = vpop.permute.xlu0 %3002
  %v3004 = vlaneseq
  %v3005 = vshrl.u32 %v3004, 7
  %v3006 = vadd.s32 %v3005, 8
  %3007 = vset.pattern.permute.xlu0 %v3006
  %3008 = vperm.xlu0 %3007, %v2997
  %v3009 = vpop.permute.xlu0 %3008
  %v3010 = vperm.slane %v2836, 6
  %v3011 = vlaneseq
  %v3012 = vshrl.u32 %v3011, 7
  %3014 = vset.pattern.permute.xlu0 %v3012
  %3015 = vperm.xlu0 %3014, %v3010
  %v3016 = vpop.permute.xlu0 %3015
  %v3017 = vlaneseq
  %v3018 = vshrl.u32 %v3017, 7
  %v3019 = vadd.s32 %v3018, 8
  %3020 = vset.pattern.permute.xlu0 %v3019
  %3021 = vperm.xlu0 %3020, %v3010
  %v3022 = vpop.permute.xlu0 %3021
  %v3023 = vperm.slane %v2836, 7
  %v3024 = vlaneseq
  %v3025 = vshrl.u32 %v3024, 7
  %3027 = vset.pattern.permute.xlu0 %v3025
  %3028 = vperm.xlu0 %3027, %v3023
  %v3029 = vpop.permute.xlu0 %3028
  %v3030 = vlaneseq
  %v3031 = vshrl.u32 %v3030, 7
  %v3032 = vadd.s32 %v3031, 8
  %3033 = vset.pattern.permute.xlu0 %v3032
  %3034 = vperm.xlu0 %3033, %v3023
  %v3035 = vpop.permute.xlu0 %3034
  %v3036 = vperm.slane %v2851, 0
  %v3037 = vlaneseq
  %v3038 = vshrl.u32 %v3037, 7
  %3040 = vset.pattern.permute.xlu0 %v3038
  %3041 = vperm.xlu0 %3040, %v3036
  %v3042 = vpop.permute.xlu0 %3041
  %v3043 = vlaneseq
  %v3044 = vshrl.u32 %v3043, 7
  %v3045 = vadd.s32 %v3044, 8
  %3046 = vset.pattern.permute.xlu0 %v3045
  %3047 = vperm.xlu0 %3046, %v3036
  %v3048 = vpop.permute.xlu0 %3047
  %v3049 = vperm.slane %v2851, 1
  %v3050 = vlaneseq
  %v3051 = vshrl.u32 %v3050, 7
  %3053 = vset.pattern.permute.xlu0 %v3051
  %3054 = vperm.xlu0 %3053, %v3049
  %v3055 = vpop.permute.xlu0 %3054
  %v3056 = vlaneseq
  %v3057 = vshrl.u32 %v3056, 7
  %v3058 = vadd.s32 %v3057, 8
  %3059 = vset.pattern.permute.xlu0 %v3058
  %3060 = vperm.xlu0 %3059, %v3049
  %v3061 = vpop.permute.xlu0 %3060
  %v3062 = vperm.slane %v2851, 2
  %v3063 = vlaneseq
  %v3064 = vshrl.u32 %v3063, 7
  %3066 = vset.pattern.permute.xlu0 %v3064
  %3067 = vperm.xlu0 %3066, %v3062
  %v3068 = vpop.permute.xlu0 %3067
  %v3069 = vlaneseq
  %v3070 = vshrl.u32 %v3069, 7
  %v3071 = vadd.s32 %v3070, 8
  %3072 = vset.pattern.permute.xlu0 %v3071
  %3073 = vperm.xlu0 %3072, %v3062
  %v3074 = vpop.permute.xlu0 %3073
  %v3075 = vperm.slane %v2851, 3
  %v3076 = vlaneseq
  %v3077 = vshrl.u32 %v3076, 7
  %3079 = vset.pattern.permute.xlu0 %v3077
  %3080 = vperm.xlu0 %3079, %v3075
  %v3081 = vpop.permute.xlu0 %3080
  %v3082 = vlaneseq
  %v3083 = vshrl.u32 %v3082, 7
  %v3084 = vadd.s32 %v3083, 8
  %3085 = vset.pattern.permute.xlu0 %v3084
  %3086 = vperm.xlu0 %3085, %v3075
  %v3087 = vpop.permute.xlu0 %3086
  %v3088 = vperm.slane %v2851, 4
  %v3089 = vlaneseq
  %v3090 = vshrl.u32 %v3089, 7
  %3092 = vset.pattern.permute.xlu0 %v3090
  %3093 = vperm.xlu0 %3092, %v3088
  %v3094 = vpop.permute.xlu0 %3093
  %v3095 = vlaneseq
  %v3096 = vshrl.u32 %v3095, 7
  %v3097 = vadd.s32 %v3096, 8
  %3098 = vset.pattern.permute.xlu0 %v3097
  %3099 = vperm.xlu0 %3098, %v3088
  %v3100 = vpop.permute.xlu0 %3099
  %v3101 = vperm.slane %v2851, 5
  %v3102 = vlaneseq
  %v3103 = vshrl.u32 %v3102, 7
  %3105 = vset.pattern.permute.xlu0 %v3103
  %3106 = vperm.xlu0 %3105, %v3101
  %v3107 = vpop.permute.xlu0 %3106
  %v3108 = vlaneseq
  %v3109 = vshrl.u32 %v3108, 7
  %v3110 = vadd.s32 %v3109, 8
  %3111 = vset.pattern.permute.xlu0 %v3110
  %3112 = vperm.xlu0 %3111, %v3101
  %v3113 = vpop.permute.xlu0 %3112
  %v3114 = vperm.slane %v2851, 6
  %v3115 = vlaneseq
  %v3116 = vshrl.u32 %v3115, 7
  %3118 = vset.pattern.permute.xlu0 %v3116
  %3119 = vperm.xlu0 %3118, %v3114
  %v3120 = vpop.permute.xlu0 %3119
  %v3121 = vlaneseq
  %v3122 = vshrl.u32 %v3121, 7
  %v3123 = vadd.s32 %v3122, 8
  %3124 = vset.pattern.permute.xlu0 %v3123
  %3125 = vperm.xlu0 %3124, %v3114
  %v3126 = vpop.permute.xlu0 %3125
  %v3127 = vperm.slane %v2851, 7
  %v3128 = vlaneseq
  %v3129 = vshrl.u32 %v3128, 7
  %3131 = vset.pattern.permute.xlu0 %v3129
  %3132 = vperm.xlu0 %3131, %v3127
  %v3133 = vpop.permute.xlu0 %3132
  %v3134 = vlaneseq
  %v3135 = vshrl.u32 %v3134, 7
  %v3136 = vadd.s32 %v3135, 8
  %3137 = vset.pattern.permute.xlu0 %v3136
  %3138 = vperm.xlu0 %3137, %v3127
  %v3139 = vpop.permute.xlu0 %3138
  %v3140 = vmul.f32 %v2938, %v568
  %v3141 = vmul.f32 %v2944, %v568
  %v3142 = vmul.f32 %v2951, %v568
  %v3143 = vmul.f32 %v2957, %v568
  %v3144 = vmul.f32 %v2964, %v568
  %v3145 = vmul.f32 %v2970, %v568
  %v3146 = vmul.f32 %v2977, %v568
  %v3147 = vmul.f32 %v2983, %v568
  %v3148 = vmul.f32 %v2990, %v568
  %v3149 = vmul.f32 %v2996, %v568
  %v3150 = vmul.f32 %v3003, %v568
  %v3151 = vmul.f32 %v3009, %v568
  %v3152 = vmul.f32 %v3016, %v568
  %v3153 = vmul.f32 %v3022, %v568
  %v3154 = vmul.f32 %v3029, %v568
  %v3155 = vmul.f32 %v3035, %v568
  %v3156 = vmul.f32 %v3042, %v568
  %v3157 = vmul.f32 %v3048, %v568
  %v3158 = vmul.f32 %v3055, %v568
  %v3159 = vmul.f32 %v3061, %v568
  %v3160 = vmul.f32 %v3068, %v568
  %v3161 = vmul.f32 %v3074, %v568
  %v3162 = vmul.f32 %v3081, %v568
  %v3163 = vmul.f32 %v3087, %v568
  %v3164 = vmul.f32 %v3094, %v568
  %v3165 = vmul.f32 %v3100, %v568
  %v3166 = vmul.f32 %v3107, %v568
  %v3167 = vmul.f32 %v3113, %v568
  %v3168 = vmul.f32 %v3120, %v568
  %v3169 = vmul.f32 %v3126, %v568
  %v3170 = vmul.f32 %v3133, %v568
  %v3171 = vmul.f32 %v3139, %v568
  %v3172 = vperm.slane %v2866, 0
  %v3173 = vlaneseq
  %v3174 = vshrl.u32 %v3173, 7
  %3176 = vset.pattern.permute.xlu0 %v3174
  %3177 = vperm.xlu0 %3176, %v3172
  %v3178 = vpop.permute.xlu0 %3177
  %v3179 = vlaneseq
  %v3180 = vshrl.u32 %v3179, 7
  %v3181 = vadd.s32 %v3180, 8
  %3182 = vset.pattern.permute.xlu0 %v3181
  %3183 = vperm.xlu0 %3182, %v3172
  %v3184 = vpop.permute.xlu0 %3183
  %v3185 = vperm.slane %v2866, 1
  %v3186 = vlaneseq
  %v3187 = vshrl.u32 %v3186, 7
  %3189 = vset.pattern.permute.xlu0 %v3187
  %3190 = vperm.xlu0 %3189, %v3185
  %v3191 = vpop.permute.xlu0 %3190
  %v3192 = vlaneseq
  %v3193 = vshrl.u32 %v3192, 7
  %v3194 = vadd.s32 %v3193, 8
  %3195 = vset.pattern.permute.xlu0 %v3194
  %3196 = vperm.xlu0 %3195, %v3185
  %v3197 = vpop.permute.xlu0 %3196
  %v3198 = vperm.slane %v2866, 2
  %v3199 = vlaneseq
  %v3200 = vshrl.u32 %v3199, 7
  %3202 = vset.pattern.permute.xlu0 %v3200
  %3203 = vperm.xlu0 %3202, %v3198
  %v3204 = vpop.permute.xlu0 %3203
  %v3205 = vlaneseq
  %v3206 = vshrl.u32 %v3205, 7
  %v3207 = vadd.s32 %v3206, 8
  %3208 = vset.pattern.permute.xlu0 %v3207
  %3209 = vperm.xlu0 %3208, %v3198
  %v3210 = vpop.permute.xlu0 %3209
  %v3211 = vperm.slane %v2866, 3
  %v3212 = vlaneseq
  %v3213 = vshrl.u32 %v3212, 7
  %3215 = vset.pattern.permute.xlu0 %v3213
  %3216 = vperm.xlu0 %3215, %v3211
  %v3217 = vpop.permute.xlu0 %3216
  %v3218 = vlaneseq
  %v3219 = vshrl.u32 %v3218, 7
  %v3220 = vadd.s32 %v3219, 8
  %3221 = vset.pattern.permute.xlu0 %v3220
  %3222 = vperm.xlu0 %3221, %v3211
  %v3223 = vpop.permute.xlu0 %3222
  %v3224 = vperm.slane %v2866, 4
  %v3225 = vlaneseq
  %v3226 = vshrl.u32 %v3225, 7
  %3228 = vset.pattern.permute.xlu0 %v3226
  %3229 = vperm.xlu0 %3228, %v3224
  %v3230 = vpop.permute.xlu0 %3229
  %v3231 = vlaneseq
  %v3232 = vshrl.u32 %v3231, 7
  %v3233 = vadd.s32 %v3232, 8
  %3234 = vset.pattern.permute.xlu0 %v3233
  %3235 = vperm.xlu0 %3234, %v3224
  %v3236 = vpop.permute.xlu0 %3235
  %v3237 = vperm.slane %v2866, 5
  %v3238 = vlaneseq
  %v3239 = vshrl.u32 %v3238, 7
  %3241 = vset.pattern.permute.xlu0 %v3239
  %3242 = vperm.xlu0 %3241, %v3237
  %v3243 = vpop.permute.xlu0 %3242
  %v3244 = vlaneseq
  %v3245 = vshrl.u32 %v3244, 7
  %v3246 = vadd.s32 %v3245, 8
  %3247 = vset.pattern.permute.xlu0 %v3246
  %3248 = vperm.xlu0 %3247, %v3237
  %v3249 = vpop.permute.xlu0 %3248
  %v3250 = vperm.slane %v2866, 6
  %v3251 = vlaneseq
  %v3252 = vshrl.u32 %v3251, 7
  %3254 = vset.pattern.permute.xlu0 %v3252
  %3255 = vperm.xlu0 %3254, %v3250
  %v3256 = vpop.permute.xlu0 %3255
  %v3257 = vlaneseq
  %v3258 = vshrl.u32 %v3257, 7
  %v3259 = vadd.s32 %v3258, 8
  %3260 = vset.pattern.permute.xlu0 %v3259
  %3261 = vperm.xlu0 %3260, %v3250
  %v3262 = vpop.permute.xlu0 %3261
  %v3263 = vperm.slane %v2866, 7
  %v3264 = vlaneseq
  %v3265 = vshrl.u32 %v3264, 7
  %3267 = vset.pattern.permute.xlu0 %v3265
  %3268 = vperm.xlu0 %3267, %v3263
  %v3269 = vpop.permute.xlu0 %3268
  %v3270 = vlaneseq
  %v3271 = vshrl.u32 %v3270, 7
  %v3272 = vadd.s32 %v3271, 8
  %3273 = vset.pattern.permute.xlu0 %v3272
  %3274 = vperm.xlu0 %3273, %v3263
  %v3275 = vpop.permute.xlu0 %3274
  %v3276 = vperm.slane %v2881, 0
  %v3277 = vlaneseq
  %v3278 = vshrl.u32 %v3277, 7
  %3280 = vset.pattern.permute.xlu0 %v3278
  %3281 = vperm.xlu0 %3280, %v3276
  %v3282 = vpop.permute.xlu0 %3281
  %v3283 = vlaneseq
  %v3284 = vshrl.u32 %v3283, 7
  %v3285 = vadd.s32 %v3284, 8
  %3286 = vset.pattern.permute.xlu0 %v3285
  %3287 = vperm.xlu0 %3286, %v3276
  %v3288 = vpop.permute.xlu0 %3287
  %v3289 = vperm.slane %v2881, 1
  %v3290 = vlaneseq
  %v3291 = vshrl.u32 %v3290, 7
  %3293 = vset.pattern.permute.xlu0 %v3291
  %3294 = vperm.xlu0 %3293, %v3289
  %v3295 = vpop.permute.xlu0 %3294
  %v3296 = vlaneseq
  %v3297 = vshrl.u32 %v3296, 7
  %v3298 = vadd.s32 %v3297, 8
  %3299 = vset.pattern.permute.xlu0 %v3298
  %3300 = vperm.xlu0 %3299, %v3289
  %v3301 = vpop.permute.xlu0 %3300
  %v3302 = vperm.slane %v2881, 2
  %v3303 = vlaneseq
  %v3304 = vshrl.u32 %v3303, 7
  %3306 = vset.pattern.permute.xlu0 %v3304
  %3307 = vperm.xlu0 %3306, %v3302
  %v3308 = vpop.permute.xlu0 %3307
  %v3309 = vlaneseq
  %v3310 = vshrl.u32 %v3309, 7
  %v3311 = vadd.s32 %v3310, 8
  %3312 = vset.pattern.permute.xlu0 %v3311
  %3313 = vperm.xlu0 %3312, %v3302
  %v3314 = vpop.permute.xlu0 %3313
  %v3315 = vperm.slane %v2881, 3
  %v3316 = vlaneseq
  %v3317 = vshrl.u32 %v3316, 7
  %3319 = vset.pattern.permute.xlu0 %v3317
  %3320 = vperm.xlu0 %3319, %v3315
  %v3321 = vpop.permute.xlu0 %3320
  %v3322 = vlaneseq
  %v3323 = vshrl.u32 %v3322, 7
  %v3324 = vadd.s32 %v3323, 8
  %3325 = vset.pattern.permute.xlu0 %v3324
  %3326 = vperm.xlu0 %3325, %v3315
  %v3327 = vpop.permute.xlu0 %3326
  %v3328 = vperm.slane %v2881, 4
  %v3329 = vlaneseq
  %v3330 = vshrl.u32 %v3329, 7
  %3332 = vset.pattern.permute.xlu0 %v3330
  %3333 = vperm.xlu0 %3332, %v3328
  %v3334 = vpop.permute.xlu0 %3333
  %v3335 = vlaneseq
  %v3336 = vshrl.u32 %v3335, 7
  %v3337 = vadd.s32 %v3336, 8
  %3338 = vset.pattern.permute.xlu0 %v3337
  %3339 = vperm.xlu0 %3338, %v3328
  %v3340 = vpop.permute.xlu0 %3339
  %v3341 = vperm.slane %v2881, 5
  %v3342 = vlaneseq
  %v3343 = vshrl.u32 %v3342, 7
  %3345 = vset.pattern.permute.xlu0 %v3343
  %3346 = vperm.xlu0 %3345, %v3341
  %v3347 = vpop.permute.xlu0 %3346
  %v3348 = vlaneseq
  %v3349 = vshrl.u32 %v3348, 7
  %v3350 = vadd.s32 %v3349, 8
  %3351 = vset.pattern.permute.xlu0 %v3350
  %3352 = vperm.xlu0 %3351, %v3341
  %v3353 = vpop.permute.xlu0 %3352
  %v3354 = vperm.slane %v2881, 6
  %v3355 = vlaneseq
  %v3356 = vshrl.u32 %v3355, 7
  %3358 = vset.pattern.permute.xlu0 %v3356
  %3359 = vperm.xlu0 %3358, %v3354
  %v3360 = vpop.permute.xlu0 %3359
  %v3361 = vlaneseq
  %v3362 = vshrl.u32 %v3361, 7
  %v3363 = vadd.s32 %v3362, 8
  %3364 = vset.pattern.permute.xlu0 %v3363
  %3365 = vperm.xlu0 %3364, %v3354
  %v3366 = vpop.permute.xlu0 %3365
  %v3367 = vperm.slane %v2881, 7
  %v3368 = vlaneseq
  %v3369 = vshrl.u32 %v3368, 7
  %3371 = vset.pattern.permute.xlu0 %v3369
  %3372 = vperm.xlu0 %3371, %v3367
  %v3373 = vpop.permute.xlu0 %3372
  %v3374 = vlaneseq
  %v3375 = vshrl.u32 %v3374, 7
  %v3376 = vadd.s32 %v3375, 8
  %3377 = vset.pattern.permute.xlu0 %v3376
  %3378 = vperm.xlu0 %3377, %v3367
  %v3379 = vpop.permute.xlu0 %3378
  %v3380 = vmul.f32 %v3178, %v573
  %v3381 = vmul.f32 %v3184, %v573
  %v3382 = vmul.f32 %v3191, %v573
  %v3383 = vmul.f32 %v3197, %v573
  %v3384 = vmul.f32 %v3204, %v573
  %v3385 = vmul.f32 %v3210, %v573
  %v3386 = vmul.f32 %v3217, %v573
  %v3387 = vmul.f32 %v3223, %v573
  %v3388 = vmul.f32 %v3230, %v573
  %v3389 = vmul.f32 %v3236, %v573
  %v3390 = vmul.f32 %v3243, %v573
  %v3391 = vmul.f32 %v3249, %v573
  %v3392 = vmul.f32 %v3256, %v573
  %v3393 = vmul.f32 %v3262, %v573
  %v3394 = vmul.f32 %v3269, %v573
  %v3395 = vmul.f32 %v3275, %v573
  %v3396 = vmul.f32 %v3282, %v573
  %v3397 = vmul.f32 %v3288, %v573
  %v3398 = vmul.f32 %v3295, %v573
  %v3399 = vmul.f32 %v3301, %v573
  %v3400 = vmul.f32 %v3308, %v573
  %v3401 = vmul.f32 %v3314, %v573
  %v3402 = vmul.f32 %v3321, %v573
  %v3403 = vmul.f32 %v3327, %v573
  %v3404 = vmul.f32 %v3334, %v573
  %v3405 = vmul.f32 %v3340, %v573
  %v3406 = vmul.f32 %v3347, %v573
  %v3407 = vmul.f32 %v3353, %v573
  %v3408 = vmul.f32 %v3360, %v573
  %v3409 = vmul.f32 %v3366, %v573
  %v3410 = vmul.f32 %v3373, %v573
  %v3411 = vmul.f32 %v3379, %v573
  %v3412 = vadd.f32 %v3140, %v3380
  %v3413 = vadd.f32 %v3141, %v3381
  %v3414 = vadd.f32 %v3142, %v3382
  %v3415 = vadd.f32 %v3143, %v3383
  %v3416 = vadd.f32 %v3144, %v3384
  %v3417 = vadd.f32 %v3145, %v3385
  %v3418 = vadd.f32 %v3146, %v3386
  %v3419 = vadd.f32 %v3147, %v3387
  %v3420 = vadd.f32 %v3148, %v3388
  %v3421 = vadd.f32 %v3149, %v3389
  %v3422 = vadd.f32 %v3150, %v3390
  %v3423 = vadd.f32 %v3151, %v3391
  %v3424 = vadd.f32 %v3152, %v3392
  %v3425 = vadd.f32 %v3153, %v3393
  %v3426 = vadd.f32 %v3154, %v3394
  %v3427 = vadd.f32 %v3155, %v3395
  %v3428 = vadd.f32 %v3156, %v3396
  %v3429 = vadd.f32 %v3157, %v3397
  %v3430 = vadd.f32 %v3158, %v3398
  %v3431 = vadd.f32 %v3159, %v3399
  %v3432 = vadd.f32 %v3160, %v3400
  %v3433 = vadd.f32 %v3161, %v3401
  %v3434 = vadd.f32 %v3162, %v3402
  %v3435 = vadd.f32 %v3163, %v3403
  %v3436 = vadd.f32 %v3164, %v3404
  %v3437 = vadd.f32 %v3165, %v3405
  %v3438 = vadd.f32 %v3166, %v3406
  %v3439 = vadd.f32 %v3167, %v3407
  %v3440 = vadd.f32 %v3168, %v3408
  %v3441 = vadd.f32 %v3169, %v3409
  %v3442 = vadd.f32 %v3170, %v3410
  %v3443 = vadd.f32 %v3171, %v3411
  %v3444 = vmul.f32 %v3412, %v1867
  %v3445 = vmul.f32 %v3413, %v1867
  %v3446 = vmul.f32 %v3414, %v1869
  %v3447 = vmul.f32 %v3415, %v1869
  %v3448 = vmul.f32 %v3416, %v1871
  %v3449 = vmul.f32 %v3417, %v1871
  %v3450 = vmul.f32 %v3418, %v1873
  %v3451 = vmul.f32 %v3419, %v1873
  %v3452 = vmul.f32 %v3420, %v1875
  %v3453 = vmul.f32 %v3421, %v1875
  %v3454 = vmul.f32 %v3422, %v1877
  %v3455 = vmul.f32 %v3423, %v1877
  %v3456 = vmul.f32 %v3424, %v1879
  %v3457 = vmul.f32 %v3425, %v1879
  %v3458 = vmul.f32 %v3426, %v1881
  %v3459 = vmul.f32 %v3427, %v1881
  %v3460 = vmul.f32 %v3428, %v1883
  %v3461 = vmul.f32 %v3429, %v1883
  %v3462 = vmul.f32 %v3430, %v1885
  %v3463 = vmul.f32 %v3431, %v1885
  %v3464 = vmul.f32 %v3432, %v1887
  %v3465 = vmul.f32 %v3433, %v1887
  %v3466 = vmul.f32 %v3434, %v1889
  %v3467 = vmul.f32 %v3435, %v1889
  %v3468 = vmul.f32 %v3436, %v1891
  %v3469 = vmul.f32 %v3437, %v1891
  %v3470 = vmul.f32 %v3438, %v1893
  %v3471 = vmul.f32 %v3439, %v1893
  %v3472 = vmul.f32 %v3440, %v1895
  %v3473 = vmul.f32 %v3441, %v1895
  %v3474 = vmul.f32 %v3442, %v1897
  %v3475 = vmul.f32 %v3443, %v1897
  %v3476 = vsel %vm97, %v3444, 0.0
  %v3477 = vsel %vm97, %v3445, 0.0
  %v3478 = vadd.f32 %v3476, %v3477
  %v3479 = vrot.slane %v3478, 4
  %v3480 = vadd.f32 %v3478, %v3479
  %v3481 = vrot.slane %v3480, 2
  %v3482 = vadd.f32 %v3480, %v3481
  %v3483 = vrot.slane %v3482, 1
  %v3484 = vadd.f32 %v3482, %v3483
  %v3485 = vsel %vm97, %v3446, 0.0
  %v3486 = vsel %vm97, %v3447, 0.0
  %v3487 = vadd.f32 %v3485, %v3486
  %v3488 = vrot.slane %v3487, 4
  %v3489 = vadd.f32 %v3487, %v3488
  %v3490 = vrot.slane %v3489, 2
  %v3491 = vadd.f32 %v3489, %v3490
  %v3492 = vrot.slane %v3491, 1
  %v3493 = vadd.f32 %v3491, %v3492
  %v3494 = vsel %vm97, %v3448, 0.0
  %v3495 = vsel %vm97, %v3449, 0.0
  %v3496 = vadd.f32 %v3494, %v3495
  %v3497 = vrot.slane %v3496, 4
  %v3498 = vadd.f32 %v3496, %v3497
  %v3499 = vrot.slane %v3498, 2
  %v3500 = vadd.f32 %v3498, %v3499
  %v3501 = vrot.slane %v3500, 1
  %v3502 = vadd.f32 %v3500, %v3501
  %v3503 = vsel %vm97, %v3450, 0.0
  %v3504 = vsel %vm97, %v3451, 0.0
  %v3505 = vadd.f32 %v3503, %v3504
  %v3506 = vrot.slane %v3505, 4
  %v3507 = vadd.f32 %v3505, %v3506
  %v3508 = vrot.slane %v3507, 2
  %v3509 = vadd.f32 %v3507, %v3508
  %v3510 = vrot.slane %v3509, 1
  %v3511 = vadd.f32 %v3509, %v3510
  %v3512 = vsel %vm97, %v3452, 0.0
  %v3513 = vsel %vm97, %v3453, 0.0
  %v3514 = vadd.f32 %v3512, %v3513
  %v3515 = vrot.slane %v3514, 4
  %v3516 = vadd.f32 %v3514, %v3515
  %v3517 = vrot.slane %v3516, 2
  %v3518 = vadd.f32 %v3516, %v3517
  %v3519 = vrot.slane %v3518, 1
  %v3520 = vadd.f32 %v3518, %v3519
  %v3521 = vsel %vm97, %v3454, 0.0
  %v3522 = vsel %vm97, %v3455, 0.0
  %v3523 = vadd.f32 %v3521, %v3522
  %v3524 = vrot.slane %v3523, 4
  %v3525 = vadd.f32 %v3523, %v3524
  %v3526 = vrot.slane %v3525, 2
  %v3527 = vadd.f32 %v3525, %v3526
  %v3528 = vrot.slane %v3527, 1
  %v3529 = vadd.f32 %v3527, %v3528
  %v3530 = vsel %vm97, %v3456, 0.0
  %v3531 = vsel %vm97, %v3457, 0.0
  %v3532 = vadd.f32 %v3530, %v3531
  %v3533 = vrot.slane %v3532, 4
  %v3534 = vadd.f32 %v3532, %v3533
  %v3535 = vrot.slane %v3534, 2
  %v3536 = vadd.f32 %v3534, %v3535
  %v3537 = vrot.slane %v3536, 1
  %v3538 = vadd.f32 %v3536, %v3537
  %v3539 = vsel %vm97, %v3458, 0.0
  %v3540 = vsel %vm97, %v3459, 0.0
  %v3541 = vadd.f32 %v3539, %v3540
  %v3542 = vrot.slane %v3541, 4
  %v3543 = vadd.f32 %v3541, %v3542
  %v3544 = vrot.slane %v3543, 2
  %v3545 = vadd.f32 %v3543, %v3544
  %v3546 = vrot.slane %v3545, 1
  %v3547 = vadd.f32 %v3545, %v3546
  %v3548 = vsel %vm97, %v3460, 0.0
  %v3549 = vsel %vm97, %v3461, 0.0
  %v3550 = vadd.f32 %v3548, %v3549
  %v3551 = vrot.slane %v3550, 4
  %v3552 = vadd.f32 %v3550, %v3551
  %v3553 = vrot.slane %v3552, 2
  %v3554 = vadd.f32 %v3552, %v3553
  %v3555 = vrot.slane %v3554, 1
  %v3556 = vadd.f32 %v3554, %v3555
  %v3557 = vsel %vm97, %v3462, 0.0
  %v3558 = vsel %vm97, %v3463, 0.0
  %v3559 = vadd.f32 %v3557, %v3558
  %v3560 = vrot.slane %v3559, 4
  %v3561 = vadd.f32 %v3559, %v3560
  %v3562 = vrot.slane %v3561, 2
  %v3563 = vadd.f32 %v3561, %v3562
  %v3564 = vrot.slane %v3563, 1
  %v3565 = vadd.f32 %v3563, %v3564
  %v3566 = vsel %vm97, %v3464, 0.0
  %v3567 = vsel %vm97, %v3465, 0.0
  %v3568 = vadd.f32 %v3566, %v3567
  %v3569 = vrot.slane %v3568, 4
  %v3570 = vadd.f32 %v3568, %v3569
  %v3571 = vrot.slane %v3570, 2
  %v3572 = vadd.f32 %v3570, %v3571
  %v3573 = vrot.slane %v3572, 1
  %v3574 = vadd.f32 %v3572, %v3573
  %v3575 = vsel %vm97, %v3466, 0.0
  %v3576 = vsel %vm97, %v3467, 0.0
  %v3577 = vadd.f32 %v3575, %v3576
  %v3578 = vrot.slane %v3577, 4
  %v3579 = vadd.f32 %v3577, %v3578
  %v3580 = vrot.slane %v3579, 2
  %v3581 = vadd.f32 %v3579, %v3580
  %v3582 = vrot.slane %v3581, 1
  %v3583 = vadd.f32 %v3581, %v3582
  %v3584 = vsel %vm97, %v3468, 0.0
  %v3585 = vsel %vm97, %v3469, 0.0
  %v3586 = vadd.f32 %v3584, %v3585
  %v3587 = vrot.slane %v3586, 4
  %v3588 = vadd.f32 %v3586, %v3587
  %v3589 = vrot.slane %v3588, 2
  %v3590 = vadd.f32 %v3588, %v3589
  %v3591 = vrot.slane %v3590, 1
  %v3592 = vadd.f32 %v3590, %v3591
  %v3593 = vsel %vm97, %v3470, 0.0
  %v3594 = vsel %vm97, %v3471, 0.0
  %v3595 = vadd.f32 %v3593, %v3594
  %v3596 = vrot.slane %v3595, 4
  %v3597 = vadd.f32 %v3595, %v3596
  %v3598 = vrot.slane %v3597, 2
  %v3599 = vadd.f32 %v3597, %v3598
  %v3600 = vrot.slane %v3599, 1
  %v3601 = vadd.f32 %v3599, %v3600
  %v3602 = vsel %vm97, %v3472, 0.0
  %v3603 = vsel %vm97, %v3473, 0.0
  %v3604 = vadd.f32 %v3602, %v3603
  %v3605 = vrot.slane %v3604, 4
  %v3606 = vadd.f32 %v3604, %v3605
  %v3607 = vrot.slane %v3606, 2
  %v3608 = vadd.f32 %v3606, %v3607
  %v3609 = vrot.slane %v3608, 1
  %v3610 = vadd.f32 %v3608, %v3609
  %v3611 = vsel %vm97, %v3474, 0.0
  %v3612 = vsel %vm97, %v3475, 0.0
  %v3613 = vadd.f32 %v3611, %v3612
  %v3614 = vrot.slane %v3613, 4
  %v3615 = vadd.f32 %v3613, %v3614
  %v3616 = vrot.slane %v3615, 2
  %v3617 = vadd.f32 %v3615, %v3616
  %v3618 = vrot.slane %v3617, 1
  %v3619 = vadd.f32 %v3617, %v3618
  %v3636 = vsel %vm1039, %v3493, %v3484
  %v3637 = vsel %vm1041, %v3502, %v3636
  %v3638 = vsel %vm1043, %v3511, %v3637
  %v3639 = vsel %vm1045, %v3520, %v3638
  %v3640 = vsel %vm1047, %v3529, %v3639
  %v3641 = vsel %vm1049, %v3538, %v3640
  %v3642 = vsel %vm1051, %v3547, %v3641
  %v3643 = vsel %vm1039, %v3565, %v3556
  %v3644 = vsel %vm1041, %v3574, %v3643
  %v3645 = vsel %vm1043, %v3583, %v3644
  %v3646 = vsel %vm1045, %v3592, %v3645
  %v3647 = vsel %vm1047, %v3601, %v3646
  %v3648 = vsel %vm1049, %v3610, %v3647
  %v3649 = vsel %vm1051, %v3619, %v3648
  %v3652 = vadd.f32 %v2928, %v3642
  %v3653 = vadd.f32 %v2930, %v3649
  %v3654 = vadd.f32 %v2295, %v3652
  %v3655 = vadd.f32 %v2296, %v3653
  %v3656 = vsel %vm97, %v3654, 0.0
  %3657 = vadd.xlane.f32.xlu0 %v3656
  %v3658 = vpop.xlane.xlu0 %3657
  %v3659 = vsel %vm97, %v3655, 0.0
  %3660 = vadd.xlane.f32.xlu0 %v3659
  %v3661 = vpop.xlane.xlu0 %3660
  %v3662 = vmul.f32 %v3658, %v638
  %v3663 = vmul.f32 %v3661, %v638
  %v3664 = vsub.f32 %v3654, %v3662
  %v3665 = vsub.f32 %v3655, %v3663
  %v3666 = vmul.f32 %v3664, %v3664
  %v3667 = vmul.f32 %v3665, %v3665
  %v3668 = vsel %vm97, %v3666, 0.0
  %3669 = vadd.xlane.f32.xlu0 %v3668
  %v3670 = vpop.xlane.xlu0 %3669
  %v3671 = vsel %vm97, %v3667, 0.0
  %3672 = vadd.xlane.f32.xlu0 %v3671
  %v3673 = vpop.xlane.xlu0 %3672
  %v3674 = vmul.f32 %v3670, %v638
  %v3675 = vmul.f32 %v3673, %v638
  %v3676 = vadd.f32 %v3674, 1e-08
  %v3677 = vadd.f32 %v3675, 1e-08
  %v3678 = vrsqrt.pop %v3676
  %v3679 = vmul.f32 %v3678, %v3676
  %v3680 = vmul.f32 %v3679, %v3678
  %v3681 = vmul.f32 0.5, %v3680
  %v3682 = vsub.f32 1.5, %v3681
  %v3683 = vmul.f32 %v3678, %v3682
  %vm3684 = vweird.f32 %v3676
  %vm3685 = vweird.f32 %v3678
  %vm3686 = vmor %vm3684, %vm3685
  %v3687 = vsel %vm3686, %v3678, %v3683
  %v3688 = vrsqrt.pop %v3677
  %v3689 = vmul.f32 %v3688, %v3677
  %v3690 = vmul.f32 %v3689, %v3688
  %v3691 = vmul.f32 0.5, %v3690
  %v3692 = vsub.f32 1.5, %v3691
  %v3693 = vmul.f32 %v3688, %v3692
  %vm3694 = vweird.f32 %v3677
  %vm3695 = vweird.f32 %v3688
  %vm3696 = vmor %vm3694, %vm3695
  %v3697 = vsel %vm3696, %v3688, %v3693
  %v3698 = vmul.f32 %v3664, %v3687
  %v3699 = vmul.f32 %v3665, %v3697
  %v3700 = vperm.slane %v2243, 1
  %v3701 = vmul.f32 %v3698, %v3700
  %v3702 = vmul.f32 %v3699, %v3700
  %3704 = vrot.lane.b32.xlu0 %v3700, 96
  %v3705 = vpop.permute.xlu0 %3704
  %v3707 = vadd.f32 %v3701, %v3705
  %v3708 = vadd.f32 %v3702, %v3705
  %v3709 = vpack.c.bf16 %v3708, %v3707
  %v3710 = vperm.slane %v2243, 4
  %3711 = vrot.lane.b32.xlu0 %v2307, 32
  %v3712 = vpop.permute.xlu0 %3711
  %3713 = vrot.lane.b32.xlu0 %v2308, 32
  %v3714 = vpop.permute.xlu0 %3713
  %v3718 = vsel %vm97, %v3709, 0
  %3720 = vmatpush.bf16.msra.mxu0 0
  %3721 = vmatpush.bf16.msra.mxu0 0
  %3722 = vmatpush.bf16.msra.mxu0 0
  %3723 = vmatpush.bf16.msra.mxu0 0
  %3724 = vmatpush.bf16.msra.mxu0 0
  %3725 = vmatpush.bf16.msra.mxu0 0
  %3726 = vmatpush.bf16.msra.mxu0 %v3714
  %3727 = vmatpush.bf16.msra.mxu0 %v3712
  %3728 = vmatmul.bf16.gmra.mxu0 %v3718
  %v3729 = vpop.f32.mrf.mxu0
  %v3730 = vadd.f32 %v3710, %v3729
  %v3731 = vpop.f32.mrf.mxu0
  %v3732 = vadd.f32 %v3710, %v3731
  %3733 = vdwg.mxu0
  %v3734 = vmax.f32 %v3730, 0.0
  %v3735 = vmax.f32 %v3732, 0.0
  %v3736 = vpack.c.bf16 %v3735, %v3734
  %v3737 = vperm.slane %v2243, 5
  %v3738 = vunpack.c.h.b16 %v2238
  %v3739 = vunpack.c.h.b16 %v2239
  %v3740 = vunpack.c.h.b16 %v2240
  %v3741 = vunpack.c.h.b16 %v2241
  %v3742 = vpack.c.b16 %v3739, %v3738
  %v3743 = vpack.c.b16 %v3741, %v3740
  %v3747 = vsel %vm97, %v3736, 0
  %3749 = vmatpush.bf16.msra.mxu0 0
  %3750 = vmatpush.bf16.msra.mxu0 0
  %3751 = vmatpush.bf16.msra.mxu0 0
  %3752 = vmatpush.bf16.msra.mxu0 0
  %3753 = vmatpush.bf16.msra.mxu0 0
  %3754 = vmatpush.bf16.msra.mxu0 0
  %3755 = vmatpush.bf16.msra.mxu0 %v3743
  %3756 = vmatpush.bf16.msra.mxu0 %v3742
  %3757 = vmatmul.bf16.gmra.mxu0 %v3747
  %v3758 = vpop.f32.mrf.mxu0
  %v3759 = vadd.f32 %v3737, %v3758
  %v3760 = vpop.f32.mrf.mxu0
  %v3761 = vadd.f32 %v3737, %v3760
  %3762 = vdwg.mxu0
  %v3763 = vadd.f32 %v3759, %v3707
  %v3764 = vadd.f32 %v3761, %v3708
  %v3765 = vmul.f32 %v3763, %v142
  %v3766 = vmul.f32 %v3764, %v147
  %s3767 = scalar_lea.vmem %s3, 16
  %v3768 = vld [vmem:[%s3767] sm:$0xff]
  %v3769 = vsel %vm97, %v3765, 0.0
  %3770 = vadd.xlane.f32.xlu0 %v3769
  %v3771 = vpop.xlane.xlu0 %3770
  %v3772 = vsel %vm97, %v3766, 0.0
  %3773 = vadd.xlane.f32.xlu0 %v3772
  %v3774 = vpop.xlane.xlu0 %3773
  %v3775 = vmul.f32 %v3771, %v638
  %v3776 = vmul.f32 %v3774, %v638
  %v3777 = vsub.f32 %v3765, %v3775
  %v3778 = vsub.f32 %v3766, %v3776
  %v3779 = vmul.f32 %v3777, %v3777
  %v3780 = vmul.f32 %v3778, %v3778
  %v3781 = vsel %vm97, %v3779, 0.0
  %3782 = vadd.xlane.f32.xlu0 %v3781
  %v3783 = vpop.xlane.xlu0 %3782
  %v3784 = vsel %vm97, %v3780, 0.0
  %3785 = vadd.xlane.f32.xlu0 %v3784
  %v3786 = vpop.xlane.xlu0 %3785
  %v3787 = vmul.f32 %v3783, %v638
  %v3788 = vmul.f32 %v3786, %v638
  %v3789 = vadd.f32 %v3787, 1e-08
  %v3790 = vadd.f32 %v3788, 1e-08
  %v3791 = vrsqrt.pop %v3789
  %v3792 = vmul.f32 %v3791, %v3789
  %v3793 = vmul.f32 %v3792, %v3791
  %v3794 = vmul.f32 0.5, %v3793
  %v3795 = vsub.f32 1.5, %v3794
  %v3796 = vmul.f32 %v3791, %v3795
  %vm3797 = vweird.f32 %v3789
  %vm3798 = vweird.f32 %v3791
  %vm3799 = vmor %vm3797, %vm3798
  %v3800 = vsel %vm3799, %v3791, %v3796
  %v3801 = vrsqrt.pop %v3790
  %v3802 = vmul.f32 %v3801, %v3790
  %v3803 = vmul.f32 %v3802, %v3801
  %v3804 = vmul.f32 0.5, %v3803
  %v3805 = vsub.f32 1.5, %v3804
  %v3806 = vmul.f32 %v3801, %v3805
  %vm3807 = vweird.f32 %v3790
  %vm3808 = vweird.f32 %v3801
  %vm3809 = vmor %vm3807, %vm3808
  %v3810 = vsel %vm3809, %v3801, %v3806
  %v3811 = vmul.f32 %v3777, %v3800
  %v3812 = vmul.f32 %v3778, %v3810
  %v3813 = vperm.slane %v3768, 0
  %v3814 = vmul.f32 %v3811, %v3813
  %v3815 = vmul.f32 %v3812, %v3813
  %3817 = vrot.lane.b32.xlu0 %v3813, 96
  %v3818 = vpop.permute.xlu0 %3817
  %v3820 = vadd.f32 %v3814, %v3818
  %v3821 = vadd.f32 %v3815, %v3818
  %v3822 = vmul.f32 %v3820, %v122
  %v3823 = vmul.f32 %v3821, %v124
  %v3824 = vsel %vm97, %v3822, 0.0
  %3825 = vadd.xlane.f32.xlu0 %v3824
  %v3826 = vpop.xlane.xlu0 %3825
  %v3827 = vsel %vm97, %v3823, 0.0
  %3828 = vadd.xlane.f32.xlu0 %v3827
  %v3829 = vpop.xlane.xlu0 %3828
  %v3832 = vperm.slane %v3826, %v45
  %v3833 = vperm.slane %v3829, %v45
  %v3834 = vsel %vm1039, %v3833, %v3832
  %vm3836 = vcmask 58368
  %3837 = vst.msk [vmem:[%s4] sm:$0x3] %vm3836, %v3834
  %v3838 = vmul.f32 %v3820, %v127
  %v3839 = vmul.f32 %v3821, %v129
  %v3840 = vsel %vm97, %v3838, 0.0
  %3841 = vadd.xlane.f32.xlu0 %v3840
  %v3842 = vpop.xlane.xlu0 %3841
  %v3843 = vsel %vm97, %v3839, 0.0
  %3844 = vadd.xlane.f32.xlu0 %v3843
  %v3845 = vpop.xlane.xlu0 %3844
  %v3848 = vperm.slane %v3842, %v45
  %v3849 = vperm.slane %v3845, %v45
  %v3850 = vsel %vm1039, %v3849, %v3848
  %s3852 = scalar_lea.vmem %s4, 2
  %3853 = vst.msk [vmem:[%s3852] sm:$0x3] %vm3836, %v3850
  // Predicated region
  $region18: #{tisasrec_forward.1} parent=0 // pred_check
    _
  $region19: #{tisasrec_forward.1} parent=0 // pred_check_branch
    %3855 = sbr.rel (0) target = $region21
  $region20: #{tisasrec_forward.1} parent=0 // pred_region
    _
  $region21: #{tisasrec_forward.1} parent=0 // pred_fallthru
    _
  // Predicated region
  $region22: #{tisasrec_forward.1} parent=0 // pred_check
    _
  $region23: #{tisasrec_forward.1} parent=0 // pred_check_branch
    %3857 = sbr.rel (0) target = $region25
  $region24: #{tisasrec_forward.1} parent=0 // pred_region
    _
  $region25: #{tisasrec_forward.1} parent=0 // pred_fallthru
    _

</llo_original>
